<compile_context>
chip_gen: v6e
topology: v6e:2x2x1
jax: 0.10.0
libtpu: 0.0.40
codegen_flags: <defaults>
</compile_context>

<pallas_src>
import jax
import jax.numpy as jnp
from jax import lax
from jax.experimental import pallas as pl
from jax.experimental.pallas import tpu as pltpu

# --- Config (mirrors the NERConfig fields the module uses) -------------------
VOCAB_SIZE = 100
VOCAB_PAD = 128        # pad vocab to the 128-lane tile for the one-hot gather matmul
EMBED_SIZE = 32        # NERConfig.gru_embedding_size
HIDDEN_SIZE = 32       # NERConfig.hidden_size
NUM_LABELS = 8         # NERConfig.num_labels
LABELS_PAD = 128       # pad classifier lanes so the single output store is lane-dense
NUM_LAYERS = 2
BATCH = 2
B_PAD = 8              # pad batch rows to the 8-sublane f32 tile
SEQ = 8


# --- Fused kernel -------------------------------------------------------------
def _bigru_fused_kernel(ids_ref, emb_ref,
                        wx0_ref, whf0_ref, whb0_ref, bin0_ref, bhnf0_ref, bhnb0_ref,
                        wx1_ref, whf1_ref, whb1_ref, bin1_ref, bhnf1_ref, bhnb1_ref,
                        cls_w_ref, cls_b_ref,
                        out_ref,
                        y_scr):
    H = HIDDEN_SIZE
    T = SEQ
    BP = B_PAD
    R = T * BP

    # ---- Embedding gather as ONE MXU op: one-hot(ids) @ table ------------------
    ids = ids_ref[...]                                                   # (R, 1) int32
    lane = lax.broadcasted_iota(jnp.int32, (R, VOCAB_PAD), 1)
    onehot = (lane == ids).astype(jnp.float32)                           # (R, VOCAB_PAD)
    x0 = jnp.dot(onehot, emb_ref[...],
                 preferred_element_type=jnp.float32)                     # (R, E) f32, exact-ish

    def run_layer(x_flat, wx_ref, whf_ref, whb_ref, bin_ref, bhnf_ref, bhnb_ref):
        # Hoisted input-side gates for BOTH directions in one bf16 matmul.
        #   gx[:, 0:3H]  = x @ Wx_fwd + b   (gate order r|z|n, r/z hidden biases pre-summed)
        #   gx[:, 3H:6H] = x @ Wx_bwd + b
        gx = jnp.dot(x_flat.astype(jnp.bfloat16), wx_ref[...],
                     preferred_element_type=jnp.float32) + bin_ref[...]  # (R, 6H) f32
        whf = whf_ref[...]          # (H, 3H) bf16
        whb = whb_ref[...]          # (H, 3H) bf16
        bhnf = bhnf_ref[...]        # (1, 3H) f32 = [0 | 0 | b_hn_fwd]
        bhnb = bhnb_ref[...]        # (1, 3H) f32 = [0 | 0 | b_hn_bwd]

        h_f = jnp.zeros((BP, H), jnp.float32)
        h_b = jnp.zeros((BP, H), jnp.float32)
        for s in range(T):
            tf = s            # forward direction consumes time tf
            tb = T - 1 - s    # backward direction consumes time tb

            # One single-pass bf16 MXU op per direction per step (K=H, no zero columns).
            ghf = jnp.dot(h_f.astype(jnp.bfloat16), whf,
                          preferred_element_type=jnp.float32) + bhnf     # (BP, 3H)
            ghb = jnp.dot(h_b.astype(jnp.bfloat16), whb,
                          preferred_element_type=jnp.float32) + bhnb     # (BP, 3H)

            gxf = gx[tf * BP:(tf + 1) * BP, 0:3 * H]       # 8-sublane-aligned static slices
            gxb = gx[tb * BP:(tb + 1) * BP, 3 * H:6 * H]

            # forward direction (PyTorch gate order r, z, n)
            r_f = jax.nn.sigmoid(gxf[:, 0:H] + ghf[:, 0:H])
            z_f = jax.nn.sigmoid(gxf[:, H:2 * H] + ghf[:, H:2 * H])
            n_f = jnp.tanh(gxf[:, 2 * H:3 * H] + r_f * ghf[:, 2 * H:3 * H])
            h_f = (1.0 - z_f) * n_f + z_f * h_f

            # backward direction
            r_b = jax.nn.sigmoid(gxb[:, 0:H] + ghb[:, 0:H])
            z_b = jax.nn.sigmoid(gxb[:, H:2 * H] + ghb[:, H:2 * H])
            n_b = jnp.tanh(gxb[:, 2 * H:3 * H] + r_b * ghb[:, 2 * H:3 * H])
            h_b = (1.0 - z_b) * n_b + z_b * h_b

            # sublane-aligned stores of the combined (fwd | bwd) layer output
            y_scr[tf * BP:(tf + 1) * BP, 0:H] = h_f
            y_scr[tb * BP:(tb + 1) * BP, H:2 * H] = h_b
        return y_scr[...]                                                # (R, 2H), time-major

    y1 = run_layer(x0, wx0_ref, whf0_ref, whb0_ref, bin0_ref, bhnf0_ref, bhnb0_ref)
    y2 = run_layer(y1, wx1_ref, whf1_ref, whb1_ref, bin1_ref, bhnf1_ref, bhnb1_ref)

    # ---- Classifier fused into the epilogue: one lane-dense 2-D store ----------
    out_ref[...] = jnp.dot(y2.astype(jnp.bfloat16), cls_w_ref[...],
                           preferred_element_type=jnp.float32) + cls_b_ref[...]


# --- Parameters (raw PyTorch nn.GRU layout) -----------------------------------
def init_params(key):
    keys = jax.random.split(key, 20)
    k = 1.0 / jnp.sqrt(jnp.float32(HIDDEN_SIZE))
    ki = 0

    params = {}
    params["embedding"] = jax.random.normal(keys[ki], (VOCAB_SIZE, EMBED_SIZE), jnp.float32); ki += 1

    gru = []
    for layer in range(NUM_LAYERS):
        in_dim = EMBED_SIZE if layer == 0 else 2 * HIDDEN_SIZE
        dirs = []
        for _d in range(2):  # 0 = forward, 1 = backward
            w_ih = jax.random.uniform(keys[ki], (3 * HIDDEN_SIZE, in_dim), jnp.float32, -k, k); ki += 1
            w_hh = jax.random.uniform(keys[ki], (3 * HIDDEN_SIZE, HIDDEN_SIZE), jnp.float32, -k, k); ki += 1
            b_ih = jax.random.uniform(keys[ki], (3 * HIDDEN_SIZE,), jnp.float32, -k, k); ki += 1
            b_hh = jax.random.uniform(keys[ki], (3 * HIDDEN_SIZE,), jnp.float32, -k, k); ki += 1
            dirs.append((w_ih, w_hh, b_ih, b_hh))
        gru.append(tuple(dirs))
    params["gru"] = gru

    kc = 1.0 / jnp.sqrt(jnp.float32(2 * HIDDEN_SIZE))
    params["cls_w"] = jax.random.uniform(keys[ki], (2 * HIDDEN_SIZE, NUM_LABELS), jnp.float32, -kc, kc); ki += 1
    params["cls_b"] = jax.random.uniform(keys[ki], (1, NUM_LABELS), jnp.float32, -kc, kc); ki += 1
    return params


# --- Host-side weight packing into the fused-kernel layout ---------------------
def _pack_direction(w_ih, w_hh, b_ih, b_hh):
    """PyTorch (3H,in)/(3H,H)/(3H,) -> wx (in,3H), wh (H,3H), b_in (3H,), b_hn3 (3H,) = [0|0|b_hn]."""
    H = HIDDEN_SIZE
    wx = w_ih.T                      # columns ordered [r | z | n]
    wh = w_hh.T
    bxr, bxz, bxn = jnp.split(b_ih, 3)
    bhr, bhz, bhn = jnp.split(b_hh, 3)
    b_in = jnp.concatenate([bxr + bhr, bxz + bhz, bxn])                 # r/z hidden biases pre-summed
    b_hn3 = jnp.concatenate([jnp.zeros((2 * H,), jnp.float32), bhn])    # rides the gh add
    return wx, wh, b_in, b_hn3


def pack_params(params):
    H = HIDDEN_SIZE
    emb = jnp.zeros((VOCAB_PAD, EMBED_SIZE), jnp.float32)
    emb = emb.at[:VOCAB_SIZE].set(params["embedding"].astype(jnp.float32))
    packed = {"embedding": emb}
    for l in range(NUM_LAYERS):
        fwd, bwd = params["gru"][l]
        wx_f, wh_f, bin_f, bhn3_f = _pack_direction(*fwd)
        wx_b, wh_b, bin_b, bhn3_b = _pack_direction(*bwd)
        packed[f"wx{l}"] = jnp.concatenate([wx_f, wx_b], axis=1).astype(jnp.bfloat16)   # (in, 6H)
        packed[f"whf{l}"] = wh_f.astype(jnp.bfloat16)                                   # (H, 3H)
        packed[f"whb{l}"] = wh_b.astype(jnp.bfloat16)                                   # (H, 3H)
        packed[f"bin{l}"] = jnp.concatenate([bin_f, bin_b]).reshape(1, 6 * H)           # f32
        packed[f"bhnf{l}"] = bhn3_f.reshape(1, 3 * H)                                   # f32
        packed[f"bhnb{l}"] = bhn3_b.reshape(1, 3 * H)                                   # f32
    cls_w = jnp.zeros((2 * H, LABELS_PAD), jnp.float32).at[:, :NUM_LABELS].set(params["cls_w"])
    cls_b = jnp.zeros((1, LABELS_PAD), jnp.float32).at[:, :NUM_LABELS].set(params["cls_b"])
    packed["cls_w"] = cls_w.astype(jnp.bfloat16)
    packed["cls_b"] = cls_b
    return packed


# --- Forward (single fused pallas_call) ----------------------------------------
@jax.jit
def bigru_forward(packed, input_ids):
    B, T = input_ids.shape
    # Time-major, batch padded to 8 sublanes: row = t * B_PAD + b. Pad rows use id 0 and are sliced out.
    ids_tm = jnp.zeros((T, B_PAD), jnp.int32)
    ids_tm = ids_tm.at[:, :B].set(jnp.transpose(input_ids.astype(jnp.int32), (1, 0)))
    ids_tm = ids_tm.reshape(T * B_PAD, 1)

    vmem = pl.BlockSpec(memory_space=pltpu.MemorySpace.VMEM)
    out_tm = pl.pallas_call(
        _bigru_fused_kernel,
        out_shape=jax.ShapeDtypeStruct((T * B_PAD, LABELS_PAD), jnp.float32),
        in_specs=[vmem] * 16,
        out_specs=vmem,
        scratch_shapes=[
            pltpu.VMEM((T * B_PAD, 2 * HIDDEN_SIZE), jnp.float32),  # per-layer bidirectional output
        ],
    )(
        ids_tm, packed["embedding"],
        packed["wx0"], packed["whf0"], packed["whb0"],
        packed["bin0"], packed["bhnf0"], packed["bhnb0"],
        packed["wx1"], packed["whf1"], packed["whb1"],
        packed["bin1"], packed["bhnf1"], packed["bhnb1"],
        packed["cls_w"], packed["cls_b"],
    )
    out = out_tm.reshape(T, B_PAD, LABELS_PAD)[:, :B, :NUM_LABELS]   # drop batch/label padding
    return jnp.transpose(out, (1, 0, 2))                             # (B, T, NUM_LABELS)


# --- Pure-JAX reference (raw PyTorch-layout weights, f32) -----------------------
def _gru_dir_ref(x_tm, w_ih, w_hh, b_ih, b_hh, reverse):
    H = HIDDEN_SIZE
    B = x_tm.shape[1]
    w_ir, w_iz, w_in = jnp.split(w_ih, 3, axis=0)
    w_hr, w_hz, w_hn = jnp.split(w_hh, 3, axis=0)
    b_ir, b_iz, b_in_ = jnp.split(b_ih, 3)
    b_hr, b_hz, b_hn = jnp.split(b_hh, 3)
    xs = x_tm[::-1] if reverse else x_tm

    def step(h, x_t):
        r = jax.nn.sigmoid(x_t @ w_ir.T + b_ir + h @ w_hr.T + b_hr)
        z = jax.nn.sigmoid(x_t @ w_iz.T + b_iz + h @ w_hz.T + b_hz)
        n = jnp.tanh(x_t @ w_in.T + b_in_ + r * (h @ w_hn.T + b_hn))
        h_new = (1.0 - z) * n + z * h
        return h_new, h_new

    _, ys = lax.scan(step, jnp.zeros((B, H), jnp.float32), xs)
    return ys[::-1] if reverse else ys


def bigru_forward_ref(params, input_ids):
    emb = jnp.take(params["embedding"], input_ids, axis=0)       # (B, T, E)
    x = jnp.transpose(emb, (1, 0, 2)).astype(jnp.float32)        # (T, B, E)
    for layer in range(NUM_LAYERS):
        fwd, bwd = params["gru"][layer]
        h_f = _gru_dir_ref(x, *fwd, reverse=False)
        h_b = _gru_dir_ref(x, *bwd, reverse=True)
        x = jnp.concatenate([h_f, h_b], axis=-1)
    out = jnp.transpose(x, (1, 0, 2))                            # (B, T, 2H)
    return out @ params["cls_w"] + params["cls_b"]


if __name__ == "__main__":
    params = init_params(jax.random.PRNGKey(0))
    packed = pack_params(params)
    input_ids = jax.random.randint(
        jax.random.PRNGKey(1), (BATCH, SEQ), 0, VOCAB_SIZE, dtype=jnp.int32
    )

    logits = jax.block_until_ready(bigru_forward(packed, input_ids))
    ref = bigru_forward_ref(params, input_ids)

    assert logits.shape == (BATCH, SEQ, NUM_LABELS), logits.shape
    # bf16 MXU operands in the recurrence => small drift vs the f32 reference.
    err = float(jnp.max(jnp.abs(logits - ref)))
    assert err < 5e-2, err
    print("KERNEL_OK")
</pallas_src>

<mosaic_0001>
module attributes {stable_mosaic.version = 11 : i64} {
  func.func @_bigru_fused_kernel(%arg0: memref<64x1xi32, #tpu.memory_space<vmem>>, %arg1: memref<128x32xf32, #tpu.memory_space<vmem>>, %arg2: memref<32x192xbf16, #tpu.memory_space<vmem>>, %arg3: memref<32x96xbf16, #tpu.memory_space<vmem>>, %arg4: memref<32x96xbf16, #tpu.memory_space<vmem>>, %arg5: memref<1x192xf32, #tpu.memory_space<vmem>>, %arg6: memref<1x96xf32, #tpu.memory_space<vmem>>, %arg7: memref<1x96xf32, #tpu.memory_space<vmem>>, %arg8: memref<64x192xbf16, #tpu.memory_space<vmem>>, %arg9: memref<32x96xbf16, #tpu.memory_space<vmem>>, %arg10: memref<32x96xbf16, #tpu.memory_space<vmem>>, %arg11: memref<1x192xf32, #tpu.memory_space<vmem>>, %arg12: memref<1x96xf32, #tpu.memory_space<vmem>>, %arg13: memref<1x96xf32, #tpu.memory_space<vmem>>, %arg14: memref<64x128xbf16, #tpu.memory_space<vmem>>, %arg15: memref<1x128xf32, #tpu.memory_space<vmem>>, %arg16: memref<64x128xf32, #tpu.memory_space<vmem>>, %arg17: memref<64x64xf32, #tpu.memory_space<vmem>>) attributes {dimension_semantics = [], scalar_prefetch = 0 : i64, scratch_operands = 1 : i64, tpu.core_type = #tpu.core_type<tc>} {
    %c0 = arith.constant 0 : index
    %c0_0 = arith.constant 0 : index
    %0 = vector.load %arg0[%c0, %c0_0] : memref<64x1xi32, #tpu.memory_space<vmem>>, vector<64x1xi32>
    %1 = tpu.iota {dimensions = array<i32: 1>} : vector<64x128xi32>
    %2 = vector.broadcast %0 : vector<64x1xi32> to vector<64x128xi32>
    %3 = arith.cmpi eq, %1, %2 : vector<64x128xi32>
    %4 = arith.extui %3 : vector<64x128xi1> to vector<64x128xi32>
    %5 = arith.sitofp %4 : vector<64x128xi32> to vector<64x128xf32>
    %c0_1 = arith.constant 0 : index
    %c0_2 = arith.constant 0 : index
    %6 = vector.load %arg1[%c0_1, %c0_2] : memref<128x32xf32, #tpu.memory_space<vmem>>, vector<128x32xf32>
    %cst = arith.constant dense<0.000000e+00> : vector<64x32xf32>
    %7 = tpu.matmul %5, %6, %cst {dimension_numbers = #tpu.dot_dimension_numbers<[1], [0], [0], [1], [0, 0, 1, 1], [], []>} : vector<64x128xf32>, vector<128x32xf32>, vector<64x32xf32> -> vector<64x32xf32>
    %8 = arith.truncf %7 : vector<64x32xf32> to vector<64x32xbf16>
    %c0_3 = arith.constant 0 : index
    %c0_4 = arith.constant 0 : index
    %9 = vector.load %arg2[%c0_3, %c0_4] : memref<32x192xbf16, #tpu.memory_space<vmem>>, vector<32x192xbf16>
    %cst_5 = arith.constant dense<0.000000e+00> : vector<64x192xf32>
    %10 = tpu.matmul %8, %9, %cst_5 {dimension_numbers = #tpu.dot_dimension_numbers<[1], [0], [0], [1], [0, 0, 1, 1], [], []>} : vector<64x32xbf16>, vector<32x192xbf16>, vector<64x192xf32> -> vector<64x192xf32>
    %c0_6 = arith.constant 0 : index
    %c0_7 = arith.constant 0 : index
    %11 = vector.load %arg5[%c0_6, %c0_7] : memref<1x192xf32, #tpu.memory_space<vmem>>, vector<1x192xf32>
    %12 = vector.broadcast %11 : vector<1x192xf32> to vector<64x192xf32>
    %13 = arith.addf %10, %12 : vector<64x192xf32>
    %c0_8 = arith.constant 0 : index
    %c0_9 = arith.constant 0 : index
    %14 = vector.load %arg3[%c0_8, %c0_9] : memref<32x96xbf16, #tpu.memory_space<vmem>>, vector<32x96xbf16>
    %c0_10 = arith.constant 0 : index
    %c0_11 = arith.constant 0 : index
    %15 = vector.load %arg4[%c0_10, %c0_11] : memref<32x96xbf16, #tpu.memory_space<vmem>>, vector<32x96xbf16>
    %c0_12 = arith.constant 0 : index
    %c0_13 = arith.constant 0 : index
    %16 = vector.load %arg6[%c0_12, %c0_13] : memref<1x96xf32, #tpu.memory_space<vmem>>, vector<1x96xf32>
    %c0_14 = arith.constant 0 : index
    %c0_15 = arith.constant 0 : index
    %17 = vector.load %arg7[%c0_14, %c0_15] : memref<1x96xf32, #tpu.memory_space<vmem>>, vector<1x96xf32>
    %cst_16 = arith.constant 0.000000e+00 : f32
    %18 = vector.broadcast %cst_16 : f32 to vector<8x32xf32>
    %cst_17 = arith.constant 0.000000e+00 : f32
    %19 = vector.broadcast %cst_17 : f32 to vector<8x32xf32>
    %20 = arith.truncf %18 : vector<8x32xf32> to vector<8x32xbf16>
    %cst_18 = arith.constant dense<0.000000e+00> : vector<8x96xf32>
    %21 = tpu.matmul %20, %14, %cst_18 {dimension_numbers = #tpu.dot_dimension_numbers<[1], [0], [0], [1], [0, 0, 1, 1], [], []>} : vector<8x32xbf16>, vector<32x96xbf16>, vector<8x96xf32> -> vector<8x96xf32>
    %22 = vector.broadcast %16 : vector<1x96xf32> to vector<8x96xf32>
    %23 = arith.addf %21, %22 : vector<8x96xf32>
    %24 = arith.truncf %19 : vector<8x32xf32> to vector<8x32xbf16>
    %cst_19 = arith.constant dense<0.000000e+00> : vector<8x96xf32>
    %25 = tpu.matmul %24, %15, %cst_19 {dimension_numbers = #tpu.dot_dimension_numbers<[1], [0], [0], [1], [0, 0, 1, 1], [], []>} : vector<8x32xbf16>, vector<32x96xbf16>, vector<8x96xf32> -> vector<8x96xf32>
    %26 = vector.broadcast %17 : vector<1x96xf32> to vector<8x96xf32>
    %27 = arith.addf %25, %26 : vector<8x96xf32>
    %28 = vector.extract_strided_slice %13 {offsets = [0, 0], sizes = [8, 96], strides = [1, 1]} : vector<64x192xf32> to vector<8x96xf32>
    %29 = vector.extract_strided_slice %13 {offsets = [56, 96], sizes = [8, 96], strides = [1, 1]} : vector<64x192xf32> to vector<8x96xf32>
    %30 = vector.extract_strided_slice %28 {offsets = [0, 0], sizes = [8, 32], strides = [1, 1]} : vector<8x96xf32> to vector<8x32xf32>
    %31 = vector.extract_strided_slice %23 {offsets = [0, 0], sizes = [8, 32], strides = [1, 1]} : vector<8x96xf32> to vector<8x32xf32>
    %32 = arith.addf %30, %31 : vector<8x32xf32>
    %33 = arith.negf %32 : vector<8x32xf32>
    %34 = math.exp %33 : vector<8x32xf32>
    %cst_20 = arith.constant 1.000000e+00 : f32
    %35 = vector.broadcast %cst_20 : f32 to vector<8x32xf32>
    %36 = arith.addf %35, %34 : vector<8x32xf32>
    %37 = arith.divf %35, %36 : vector<8x32xf32>
    %38 = vector.extract_strided_slice %28 {offsets = [0, 32], sizes = [8, 32], strides = [1, 1]} : vector<8x96xf32> to vector<8x32xf32>
    %39 = vector.extract_strided_slice %23 {offsets = [0, 32], sizes = [8, 32], strides = [1, 1]} : vector<8x96xf32> to vector<8x32xf32>
    %40 = arith.addf %38, %39 : vector<8x32xf32>
    %41 = arith.negf %40 : vector<8x32xf32>
    %42 = math.exp %41 : vector<8x32xf32>
    %cst_21 = arith.constant 1.000000e+00 : f32
    %43 = vector.broadcast %cst_21 : f32 to vector<8x32xf32>
    %44 = arith.addf %43, %42 : vector<8x32xf32>
    %45 = arith.divf %43, %44 : vector<8x32xf32>
    %46 = vector.extract_strided_slice %28 {offsets = [0, 64], sizes = [8, 32], strides = [1, 1]} : vector<8x96xf32> to vector<8x32xf32>
    %47 = vector.extract_strided_slice %23 {offsets = [0, 64], sizes = [8, 32], strides = [1, 1]} : vector<8x96xf32> to vector<8x32xf32>
    %48 = arith.mulf %37, %47 : vector<8x32xf32>
    %49 = arith.addf %46, %48 : vector<8x32xf32>
    %50 = math.tanh %49 : vector<8x32xf32>
    %cst_22 = arith.constant 1.000000e+00 : f32
    %51 = vector.broadcast %cst_22 : f32 to vector<8x32xf32>
    %52 = arith.subf %51, %45 : vector<8x32xf32>
    %53 = arith.mulf %52, %50 : vector<8x32xf32>
    %54 = arith.mulf %45, %18 : vector<8x32xf32>
    %55 = arith.addf %53, %54 : vector<8x32xf32>
    %56 = vector.extract_strided_slice %29 {offsets = [0, 0], sizes = [8, 32], strides = [1, 1]} : vector<8x96xf32> to vector<8x32xf32>
    %57 = vector.extract_strided_slice %27 {offsets = [0, 0], sizes = [8, 32], strides = [1, 1]} : vector<8x96xf32> to vector<8x32xf32>
    %58 = arith.addf %56, %57 : vector<8x32xf32>
    %59 = arith.negf %58 : vector<8x32xf32>
    %60 = math.exp %59 : vector<8x32xf32>
    %cst_23 = arith.constant 1.000000e+00 : f32
    %61 = vector.broadcast %cst_23 : f32 to vector<8x32xf32>
    %62 = arith.addf %61, %60 : vector<8x32xf32>
    %63 = arith.divf %61, %62 : vector<8x32xf32>
    %64 = vector.extract_strided_slice %29 {offsets = [0, 32], sizes = [8, 32], strides = [1, 1]} : vector<8x96xf32> to vector<8x32xf32>
    %65 = vector.extract_strided_slice %27 {offsets = [0, 32], sizes = [8, 32], strides = [1, 1]} : vector<8x96xf32> to vector<8x32xf32>
    %66 = arith.addf %64, %65 : vector<8x32xf32>
    %67 = arith.negf %66 : vector<8x32xf32>
    %68 = math.exp %67 : vector<8x32xf32>
    %cst_24 = arith.constant 1.000000e+00 : f32
    %69 = vector.broadcast %cst_24 : f32 to vector<8x32xf32>
    %70 = arith.addf %69, %68 : vector<8x32xf32>
    %71 = arith.divf %69, %70 : vector<8x32xf32>
    %72 = vector.extract_strided_slice %29 {offsets = [0, 64], sizes = [8, 32], strides = [1, 1]} : vector<8x96xf32> to vector<8x32xf32>
    %73 = vector.extract_strided_slice %27 {offsets = [0, 64], sizes = [8, 32], strides = [1, 1]} : vector<8x96xf32> to vector<8x32xf32>
    %74 = arith.mulf %63, %73 : vector<8x32xf32>
    %75 = arith.addf %72, %74 : vector<8x32xf32>
    %76 = math.tanh %75 : vector<8x32xf32>
    %cst_25 = arith.constant 1.000000e+00 : f32
    %77 = vector.broadcast %cst_25 : f32 to vector<8x32xf32>
    %78 = arith.subf %77, %71 : vector<8x32xf32>
    %79 = arith.mulf %78, %76 : vector<8x32xf32>
    %80 = arith.mulf %71, %19 : vector<8x32xf32>
    %81 = arith.addf %79, %80 : vector<8x32xf32>
    %c0_26 = arith.constant 0 : index
    %c0_27 = arith.constant 0 : index
    %82 = vector.load %arg17[%c0_26, %c0_27] : memref<64x64xf32, #tpu.memory_space<vmem>>, vector<8x32xf32>
    tpu.vector_store %arg17[%c0_26, %c0_27], %55 {strides = array<i32>} : memref<64x64xf32, #tpu.memory_space<vmem>>, vector<8x32xf32>,
    %c56 = arith.constant 56 : index
    %c32 = arith.constant 32 : index
    %83 = vector.load %arg17[%c56, %c32] : memref<64x64xf32, #tpu.memory_space<vmem>>, vector<8x32xf32>
    tpu.vector_store %arg17[%c56, %c32], %81 {strides = array<i32>} : memref<64x64xf32, #tpu.memory_space<vmem>>, vector<8x32xf32>,
    %84 = arith.truncf %55 : vector<8x32xf32> to vector<8x32xbf16>
    %cst_28 = arith.constant dense<0.000000e+00> : vector<8x96xf32>
    %85 = tpu.matmul %84, %14, %cst_28 {dimension_numbers = #tpu.dot_dimension_numbers<[1], [0], [0], [1], [0, 0, 1, 1], [], []>} : vector<8x32xbf16>, vector<32x96xbf16>, vector<8x96xf32> -> vector<8x96xf32>
    %86 = vector.broadcast %16 : vector<1x96xf32> to vector<8x96xf32>
    %87 = arith.addf %85, %86 : vector<8x96xf32>
    %88 = arith.truncf %81 : vector<8x32xf32> to vector<8x32xbf16>
    %cst_29 = arith.constant dense<0.000000e+00> : vector<8x96xf32>
    %89 = tpu.matmul %88, %15, %cst_29 {dimension_numbers = #tpu.dot_dimension_numbers<[1], [0], [0], [1], [0, 0, 1, 1], [], []>} : vector<8x32xbf16>, vector<32x96xbf16>, vector<8x96xf32> -> vector<8x96xf32>
    %90 = vector.broadcast %17 : vector<1x96xf32> to vector<8x96xf32>
    %91 = arith.addf %89, %90 : vector<8x96xf32>
    %92 = vector.extract_strided_slice %13 {offsets = [8, 0], sizes = [8, 96], strides = [1, 1]} : vector<64x192xf32> to vector<8x96xf32>
    %93 = vector.extract_strided_slice %13 {offsets = [48, 96], sizes = [8, 96], strides = [1, 1]} : vector<64x192xf32> to vector<8x96xf32>
    %94 = vector.extract_strided_slice %92 {offsets = [0, 0], sizes = [8, 32], strides = [1, 1]} : vector<8x96xf32> to vector<8x32xf32>
    %95 = vector.extract_strided_slice %87 {offsets = [0, 0], sizes = [8, 32], strides = [1, 1]} : vector<8x96xf32> to vector<8x32xf32>
    %96 = arith.addf %94, %95 : vector<8x32xf32>
    %97 = arith.negf %96 : vector<8x32xf32>
    %98 = math.exp %97 : vector<8x32xf32>
    %cst_30 = arith.constant 1.000000e+00 : f32
    %99 = vector.broadcast %cst_30 : f32 to vector<8x32xf32>
    %100 = arith.addf %99, %98 : vector<8x32xf32>
    %101 = arith.divf %99, %100 : vector<8x32xf32>
    %102 = vector.extract_strided_slice %92 {offsets = [0, 32], sizes = [8, 32], strides = [1, 1]} : vector<8x96xf32> to vector<8x32xf32>
    %103 = vector.extract_strided_slice %87 {offsets = [0, 32], sizes = [8, 32], strides = [1, 1]} : vector<8x96xf32> to vector<8x32xf32>
    %104 = arith.addf %102, %103 : vector<8x32xf32>
    %105 = arith.negf %104 : vector<8x32xf32>
    %106 = math.exp %105 : vector<8x32xf32>
    %cst_31 = arith.constant 1.000000e+00 : f32
    %107 = vector.broadcast %cst_31 : f32 to vector<8x32xf32>
    %108 = arith.addf %107, %106 : vector<8x32xf32>
    %109 = arith.divf %107, %108 : vector<8x32xf32>
    %110 = vector.extract_strided_slice %92 {offsets = [0, 64], sizes = [8, 32], strides = [1, 1]} : vector<8x96xf32> to vector<8x32xf32>
    %111 = vector.extract_strided_slice %87 {offsets = [0, 64], sizes = [8, 32], strides = [1, 1]} : vector<8x96xf32> to vector<8x32xf32>
    %112 = arith.mulf %101, %111 : vector<8x32xf32>
    %113 = arith.addf %110, %112 : vector<8x32xf32>
    %114 = math.tanh %113 : vector<8x32xf32>
    %cst_32 = arith.constant 1.000000e+00 : f32
    %115 = vector.broadcast %cst_32 : f32 to vector<8x32xf32>
    %116 = arith.subf %115, %109 : vector<8x32xf32>
    %117 = arith.mulf %116, %114 : vector<8x32xf32>
    %118 = arith.mulf %109, %55 : vector<8x32xf32>
    %119 = arith.addf %117, %118 : vector<8x32xf32>
    %120 = vector.extract_strided_slice %93 {offsets = [0, 0], sizes = [8, 32], strides = [1, 1]} : vector<8x96xf32> to vector<8x32xf32>
    %121 = vector.extract_strided_slice %91 {offsets = [0, 0], sizes = [8, 32], strides = [1, 1]} : vector<8x96xf32> to vector<8x32xf32>
    %122 = arith.addf %120, %121 : vector<8x32xf32>
    %123 = arith.negf %122 : vector<8x32xf32>
    %124 = math.exp %123 : vector<8x32xf32>
    %cst_33 = arith.constant 1.000000e+00 : f32
    %125 = vector.broadcast %cst_33 : f32 to vector<8x32xf32>
    %126 = arith.addf %125, %124 : vector<8x32xf32>
    %127 = arith.divf %125, %126 : vector<8x32xf32>
    %128 = vector.extract_strided_slice %93 {offsets = [0, 32], sizes = [8, 32], strides = [1, 1]} : vector<8x96xf32> to vector<8x32xf32>
    %129 = vector.extract_strided_slice %91 {offsets = [0, 32], sizes = [8, 32], strides = [1, 1]} : vector<8x96xf32> to vector<8x32xf32>
    %130 = arith.addf %128, %129 : vector<8x32xf32>
    %131 = arith.negf %130 : vector<8x32xf32>
    %132 = math.exp %131 : vector<8x32xf32>
    %cst_34 = arith.constant 1.000000e+00 : f32
    %133 = vector.broadcast %cst_34 : f32 to vector<8x32xf32>
    %134 = arith.addf %133, %132 : vector<8x32xf32>
    %135 = arith.divf %133, %134 : vector<8x32xf32>
    %136 = vector.extract_strided_slice %93 {offsets = [0, 64], sizes = [8, 32], strides = [1, 1]} : vector<8x96xf32> to vector<8x32xf32>
    %137 = vector.extract_strided_slice %91 {offsets = [0, 64], sizes = [8, 32], strides = [1, 1]} : vector<8x96xf32> to vector<8x32xf32>
    %138 = arith.mulf %127, %137 : vector<8x32xf32>
    %139 = arith.addf %136, %138 : vector<8x32xf32>
    %140 = math.tanh %139 : vector<8x32xf32>
    %cst_35 = arith.constant 1.000000e+00 : f32
    %141 = vector.broadcast %cst_35 : f32 to vector<8x32xf32>
    %142 = arith.subf %141, %135 : vector<8x32xf32>
    %143 = arith.mulf %142, %140 : vector<8x32xf32>
    %144 = arith.mulf %135, %81 : vector<8x32xf32>
    %145 = arith.addf %143, %144 : vector<8x32xf32>
    %c8 = arith.constant 8 : index
    %c0_36 = arith.constant 0 : index
    %146 = vector.load %arg17[%c8, %c0_36] : memref<64x64xf32, #tpu.memory_space<vmem>>, vector<8x32xf32>
    tpu.vector_store %arg17[%c8, %c0_36], %119 {strides = array<i32>} : memref<64x64xf32, #tpu.memory_space<vmem>>, vector<8x32xf32>,
    %c48 = arith.constant 48 : index
    %c32_37 = arith.constant 32 : index
    %147 = vector.load %arg17[%c48, %c32_37] : memref<64x64xf32, #tpu.memory_space<vmem>>, vector<8x32xf32>
    tpu.vector_store %arg17[%c48, %c32_37], %145 {strides = array<i32>} : memref<64x64xf32, #tpu.memory_space<vmem>>, vector<8x32xf32>,
    %148 = arith.truncf %119 : vector<8x32xf32> to vector<8x32xbf16>
    %cst_38 = arith.constant dense<0.000000e+00> : vector<8x96xf32>
    %149 = tpu.matmul %148, %14, %cst_38 {dimension_numbers = #tpu.dot_dimension_numbers<[1], [0], [0], [1], [0, 0, 1, 1], [], []>} : vector<8x32xbf16>, vector<32x96xbf16>, vector<8x96xf32> -> vector<8x96xf32>
    %150 = vector.broadcast %16 : vector<1x96xf32> to vector<8x96xf32>
    %151 = arith.addf %149, %150 : vector<8x96xf32>
    %152 = arith.truncf %145 : vector<8x32xf32> to vector<8x32xbf16>
    %cst_39 = arith.constant dense<0.000000e+00> : vector<8x96xf32>
    %153 = tpu.matmul %152, %15, %cst_39 {dimension_numbers = #tpu.dot_dimension_numbers<[1], [0], [0], [1], [0, 0, 1, 1], [], []>} : vector<8x32xbf16>, vector<32x96xbf16>, vector<8x96xf32> -> vector<8x96xf32>
    %154 = vector.broadcast %17 : vector<1x96xf32> to vector<8x96xf32>
    %155 = arith.addf %153, %154 : vector<8x96xf32>
    %156 = vector.extract_strided_slice %13 {offsets = [16, 0], sizes = [8, 96], strides = [1, 1]} : vector<64x192xf32> to vector<8x96xf32>
    %157 = vector.extract_strided_slice %13 {offsets = [40, 96], sizes = [8, 96], strides = [1, 1]} : vector<64x192xf32> to vector<8x96xf32>
    %158 = vector.extract_strided_slice %156 {offsets = [0, 0], sizes = [8, 32], strides = [1, 1]} : vector<8x96xf32> to vector<8x32xf32>
    %159 = vector.extract_strided_slice %151 {offsets = [0, 0], sizes = [8, 32], strides = [1, 1]} : vector<8x96xf32> to vector<8x32xf32>
    %160 = arith.addf %158, %159 : vector<8x32xf32>
    %161 = arith.negf %160 : vector<8x32xf32>
    %162 = math.exp %161 : vector<8x32xf32>
    %cst_40 = arith.constant 1.000000e+00 : f32
    %163 = vector.broadcast %cst_40 : f32 to vector<8x32xf32>
    %164 = arith.addf %163, %162 : vector<8x32xf32>
    %165 = arith.divf %163, %164 : vector<8x32xf32>
    %166 = vector.extract_strided_slice %156 {offsets = [0, 32], sizes = [8, 32], strides = [1, 1]} : vector<8x96xf32> to vector<8x32xf32>
    %167 = vector.extract_strided_slice %151 {offsets = [0, 32], sizes = [8, 32], strides = [1, 1]} : vector<8x96xf32> to vector<8x32xf32>
    %168 = arith.addf %166, %167 : vector<8x32xf32>
    %169 = arith.negf %168 : vector<8x32xf32>
    %170 = math.exp %169 : vector<8x32xf32>
    %cst_41 = arith.constant 1.000000e+00 : f32
    %171 = vector.broadcast %cst_41 : f32 to vector<8x32xf32>
    %172 = arith.addf %171, %170 : vector<8x32xf32>
    %173 = arith.divf %171, %172 : vector<8x32xf32>
    %174 = vector.extract_strided_slice %156 {offsets = [0, 64], sizes = [8, 32], strides = [1, 1]} : vector<8x96xf32> to vector<8x32xf32>
    %175 = vector.extract_strided_slice %151 {offsets = [0, 64], sizes = [8, 32], strides = [1, 1]} : vector<8x96xf32> to vector<8x32xf32>
    %176 = arith.mulf %165, %175 : vector<8x32xf32>
    %177 = arith.addf %174, %176 : vector<8x32xf32>
    %178 = math.tanh %177 : vector<8x32xf32>
    %cst_42 = arith.constant 1.000000e+00 : f32
    %179 = vector.broadcast %cst_42 : f32 to vector<8x32xf32>
    %180 = arith.subf %179, %173 : vector<8x32xf32>
    %181 = arith.mulf %180, %178 : vector<8x32xf32>
    %182 = arith.mulf %173, %119 : vector<8x32xf32>
    %183 = arith.addf %181, %182 : vector<8x32xf32>
    %184 = vector.extract_strided_slice %157 {offsets = [0, 0], sizes = [8, 32], strides = [1, 1]} : vector<8x96xf32> to vector<8x32xf32>
    %185 = vector.extract_strided_slice %155 {offsets = [0, 0], sizes = [8, 32], strides = [1, 1]} : vector<8x96xf32> to vector<8x32xf32>
    %186 = arith.addf %184, %185 : vector<8x32xf32>
    %187 = arith.negf %186 : vector<8x32xf32>
    %188 = math.exp %187 : vector<8x32xf32>
    %cst_43 = arith.constant 1.000000e+00 : f32
    %189 = vector.broadcast %cst_43 : f32 to vector<8x32xf32>
    %190 = arith.addf %189, %188 : vector<8x32xf32>
    %191 = arith.divf %189, %190 : vector<8x32xf32>
    %192 = vector.extract_strided_slice %157 {offsets = [0, 32], sizes = [8, 32], strides = [1, 1]} : vector<8x96xf32> to vector<8x32xf32>
    %193 = vector.extract_strided_slice %155 {offsets = [0, 32], sizes = [8, 32], strides = [1, 1]} : vector<8x96xf32> to vector<8x32xf32>
    %194 = arith.addf %192, %193 : vector<8x32xf32>
    %195 = arith.negf %194 : vector<8x32xf32>
    %196 = math.exp %195 : vector<8x32xf32>
    %cst_44 = arith.constant 1.000000e+00 : f32
    %197 = vector.broadcast %cst_44 : f32 to vector<8x32xf32>
    %198 = arith.addf %197, %196 : vector<8x32xf32>
    %199 = arith.divf %197, %198 : vector<8x32xf32>
    %200 = vector.extract_strided_slice %157 {offsets = [0, 64], sizes = [8, 32], strides = [1, 1]} : vector<8x96xf32> to vector<8x32xf32>
    %201 = vector.extract_strided_slice %155 {offsets = [0, 64], sizes = [8, 32], strides = [1, 1]} : vector<8x96xf32> to vector<8x32xf32>
    %202 = arith.mulf %191, %201 : vector<8x32xf32>
    %203 = arith.addf %200, %202 : vector<8x32xf32>
    %204 = math.tanh %203 : vector<8x32xf32>
    %cst_45 = arith.constant 1.000000e+00 : f32
    %205 = vector.broadcast %cst_45 : f32 to vector<8x32xf32>
    %206 = arith.subf %205, %199 : vector<8x32xf32>
    %207 = arith.mulf %206, %204 : vector<8x32xf32>
    %208 = arith.mulf %199, %145 : vector<8x32xf32>
    %209 = arith.addf %207, %208 : vector<8x32xf32>
    %c16 = arith.constant 16 : index
    %c0_46 = arith.constant 0 : index
    %210 = vector.load %arg17[%c16, %c0_46] : memref<64x64xf32, #tpu.memory_space<vmem>>, vector<8x32xf32>
    tpu.vector_store %arg17[%c16, %c0_46], %183 {strides = array<i32>} : memref<64x64xf32, #tpu.memory_space<vmem>>, vector<8x32xf32>,
    %c40 = arith.constant 40 : index
    %c32_47 = arith.constant 32 : index
    %211 = vector.load %arg17[%c40, %c32_47] : memref<64x64xf32, #tpu.memory_space<vmem>>, vector<8x32xf32>
    tpu.vector_store %arg17[%c40, %c32_47], %209 {strides = array<i32>} : memref<64x64xf32, #tpu.memory_space<vmem>>, vector<8x32xf32>,
    %212 = arith.truncf %183 : vector<8x32xf32> to vector<8x32xbf16>
    %cst_48 = arith.constant dense<0.000000e+00> : vector<8x96xf32>
    %213 = tpu.matmul %212, %14, %cst_48 {dimension_numbers = #tpu.dot_dimension_numbers<[1], [0], [0], [1], [0, 0, 1, 1], [], []>} : vector<8x32xbf16>, vector<32x96xbf16>, vector<8x96xf32> -> vector<8x96xf32>
    %214 = vector.broadcast %16 : vector<1x96xf32> to vector<8x96xf32>
    %215 = arith.addf %213, %214 : vector<8x96xf32>
    %216 = arith.truncf %209 : vector<8x32xf32> to vector<8x32xbf16>
    %cst_49 = arith.constant dense<0.000000e+00> : vector<8x96xf32>
    %217 = tpu.matmul %216, %15, %cst_49 {dimension_numbers = #tpu.dot_dimension_numbers<[1], [0], [0], [1], [0, 0, 1, 1], [], []>} : vector<8x32xbf16>, vector<32x96xbf16>, vector<8x96xf32> -> vector<8x96xf32>
    %218 = vector.broadcast %17 : vector<1x96xf32> to vector<8x96xf32>
    %219 = arith.addf %217, %218 : vector<8x96xf32>
    %220 = vector.extract_strided_slice %13 {offsets = [24, 0], sizes = [8, 96], strides = [1, 1]} : vector<64x192xf32> to vector<8x96xf32>
    %221 = vector.extract_strided_slice %13 {offsets = [32, 96], sizes = [8, 96], strides = [1, 1]} : vector<64x192xf32> to vector<8x96xf32>
    %222 = vector.extract_strided_slice %220 {offsets = [0, 0], sizes = [8, 32], strides = [1, 1]} : vector<8x96xf32> to vector<8x32xf32>
    %223 = vector.extract_strided_slice %215 {offsets = [0, 0], sizes = [8, 32], strides = [1, 1]} : vector<8x96xf32> to vector<8x32xf32>
    %224 = arith.addf %222, %223 : vector<8x32xf32>
    %225 = arith.negf %224 : vector<8x32xf32>
    %226 = math.exp %225 : vector<8x32xf32>
    %cst_50 = arith.constant 1.000000e+00 : f32
    %227 = vector.broadcast %cst_50 : f32 to vector<8x32xf32>
    %228 = arith.addf %227, %226 : vector<8x32xf32>
    %229 = arith.divf %227, %228 : vector<8x32xf32>
    %230 = vector.extract_strided_slice %220 {offsets = [0, 32], sizes = [8, 32], strides = [1, 1]} : vector<8x96xf32> to vector<8x32xf32>
    %231 = vector.extract_strided_slice %215 {offsets = [0, 32], sizes = [8, 32], strides = [1, 1]} : vector<8x96xf32> to vector<8x32xf32>
    %232 = arith.addf %230, %231 : vector<8x32xf32>
    %233 = arith.negf %232 : vector<8x32xf32>
    %234 = math.exp %233 : vector<8x32xf32>
    %cst_51 = arith.constant 1.000000e+00 : f32
    %235 = vector.broadcast %cst_51 : f32 to vector<8x32xf32>
    %236 = arith.addf %235, %234 : vector<8x32xf32>
    %237 = arith.divf %235, %236 : vector<8x32xf32>
    %238 = vector.extract_strided_slice %220 {offsets = [0, 64], sizes = [8, 32], strides = [1, 1]} : vector<8x96xf32> to vector<8x32xf32>
    %239 = vector.extract_strided_slice %215 {offsets = [0, 64], sizes = [8, 32], strides = [1, 1]} : vector<8x96xf32> to vector<8x32xf32>
    %240 = arith.mulf %229, %239 : vector<8x32xf32>
    %241 = arith.addf %238, %240 : vector<8x32xf32>
    %242 = math.tanh %241 : vector<8x32xf32>
    %cst_52 = arith.constant 1.000000e+00 : f32
    %243 = vector.broadcast %cst_52 : f32 to vector<8x32xf32>
    %244 = arith.subf %243, %237 : vector<8x32xf32>
    %245 = arith.mulf %244, %242 : vector<8x32xf32>
    %246 = arith.mulf %237, %183 : vector<8x32xf32>
    %247 = arith.addf %245, %246 : vector<8x32xf32>
    %248 = vector.extract_strided_slice %221 {offsets = [0, 0], sizes = [8, 32], strides = [1, 1]} : vector<8x96xf32> to vector<8x32xf32>
    %249 = vector.extract_strided_slice %219 {offsets = [0, 0], sizes = [8, 32], strides = [1, 1]} : vector<8x96xf32> to vector<8x32xf32>
    %250 = arith.addf %248, %249 : vector<8x32xf32>
    %251 = arith.negf %250 : vector<8x32xf32>
    %252 = math.exp %251 : vector<8x32xf32>
    %cst_53 = arith.constant 1.000000e+00 : f32
    %253 = vector.broadcast %cst_53 : f32 to vector<8x32xf32>
    %254 = arith.addf %253, %252 : vector<8x32xf32>
    %255 = arith.divf %253, %254 : vector<8x32xf32>
    %256 = vector.extract_strided_slice %221 {offsets = [0, 32], sizes = [8, 32], strides = [1, 1]} : vector<8x96xf32> to vector<8x32xf32>
    %257 = vector.extract_strided_slice %219 {offsets = [0, 32], sizes = [8, 32], strides = [1, 1]} : vector<8x96xf32> to vector<8x32xf32>
    %258 = arith.addf %256, %257 : vector<8x32xf32>
    %259 = arith.negf %258 : vector<8x32xf32>
    %260 = math.exp %259 : vector<8x32xf32>
    %cst_54 = arith.constant 1.000000e+00 : f32
    %261 = vector.broadcast %cst_54 : f32 to vector<8x32xf32>
    %262 = arith.addf %261, %260 : vector<8x32xf32>
    %263 = arith.divf %261, %262 : vector<8x32xf32>
    %264 = vector.extract_strided_slice %221 {offsets = [0, 64], sizes = [8, 32], strides = [1, 1]} : vector<8x96xf32> to vector<8x32xf32>
    %265 = vector.extract_strided_slice %219 {offsets = [0, 64], sizes = [8, 32], strides = [1, 1]} : vector<8x96xf32> to vector<8x32xf32>
    %266 = arith.mulf %255, %265 : vector<8x32xf32>
    %267 = arith.addf %264, %266 : vector<8x32xf32>
    %268 = math.tanh %267 : vector<8x32xf32>
    %cst_55 = arith.constant 1.000000e+00 : f32
    %269 = vector.broadcast %cst_55 : f32 to vector<8x32xf32>
    %270 = arith.subf %269, %263 : vector<8x32xf32>
    %271 = arith.mulf %270, %268 : vector<8x32xf32>
    %272 = arith.mulf %263, %209 : vector<8x32xf32>
    %273 = arith.addf %271, %272 : vector<8x32xf32>
    %c24 = arith.constant 24 : index
    %c0_56 = arith.constant 0 : index
    %274 = vector.load %arg17[%c24, %c0_56] : memref<64x64xf32, #tpu.memory_space<vmem>>, vector<8x32xf32>
    tpu.vector_store %arg17[%c24, %c0_56], %247 {strides = array<i32>} : memref<64x64xf32, #tpu.memory_space<vmem>>, vector<8x32xf32>,
    %c32_57 = arith.constant 32 : index
    %c32_58 = arith.constant 32 : index
    %275 = vector.load %arg17[%c32_57, %c32_58] : memref<64x64xf32, #tpu.memory_space<vmem>>, vector<8x32xf32>
    tpu.vector_store %arg17[%c32_57, %c32_58], %273 {strides = array<i32>} : memref<64x64xf32, #tpu.memory_space<vmem>>, vector<8x32xf32>,
    %276 = arith.truncf %247 : vector<8x32xf32> to vector<8x32xbf16>
    %cst_59 = arith.constant dense<0.000000e+00> : vector<8x96xf32>
    %277 = tpu.matmul %276, %14, %cst_59 {dimension_numbers = #tpu.dot_dimension_numbers<[1], [0], [0], [1], [0, 0, 1, 1], [], []>} : vector<8x32xbf16>, vector<32x96xbf16>, vector<8x96xf32> -> vector<8x96xf32>
    %278 = vector.broadcast %16 : vector<1x96xf32> to vector<8x96xf32>
    %279 = arith.addf %277, %278 : vector<8x96xf32>
    %280 = arith.truncf %273 : vector<8x32xf32> to vector<8x32xbf16>
    %cst_60 = arith.constant dense<0.000000e+00> : vector<8x96xf32>
    %281 = tpu.matmul %280, %15, %cst_60 {dimension_numbers = #tpu.dot_dimension_numbers<[1], [0], [0], [1], [0, 0, 1, 1], [], []>} : vector<8x32xbf16>, vector<32x96xbf16>, vector<8x96xf32> -> vector<8x96xf32>
    %282 = vector.broadcast %17 : vector<1x96xf32> to vector<8x96xf32>
    %283 = arith.addf %281, %282 : vector<8x96xf32>
    %284 = vector.extract_strided_slice %13 {offsets = [32, 0], sizes = [8, 96], strides = [1, 1]} : vector<64x192xf32> to vector<8x96xf32>
    %285 = vector.extract_strided_slice %13 {offsets = [24, 96], sizes = [8, 96], strides = [1, 1]} : vector<64x192xf32> to vector<8x96xf32>
    %286 = vector.extract_strided_slice %284 {offsets = [0, 0], sizes = [8, 32], strides = [1, 1]} : vector<8x96xf32> to vector<8x32xf32>
    %287 = vector.extract_strided_slice %279 {offsets = [0, 0], sizes = [8, 32], strides = [1, 1]} : vector<8x96xf32> to vector<8x32xf32>
    %288 = arith.addf %286, %287 : vector<8x32xf32>
    %289 = arith.negf %288 : vector<8x32xf32>
    %290 = math.exp %289 : vector<8x32xf32>
    %cst_61 = arith.constant 1.000000e+00 : f32
    %291 = vector.broadcast %cst_61 : f32 to vector<8x32xf32>
    %292 = arith.addf %291, %290 : vector<8x32xf32>
    %293 = arith.divf %291, %292 : vector<8x32xf32>
    %294 = vector.extract_strided_slice %284 {offsets = [0, 32], sizes = [8, 32], strides = [1, 1]} : vector<8x96xf32> to vector<8x32xf32>
    %295 = vector.extract_strided_slice %279 {offsets = [0, 32], sizes = [8, 32], strides = [1, 1]} : vector<8x96xf32> to vector<8x32xf32>
    %296 = arith.addf %294, %295 : vector<8x32xf32>
    %297 = arith.negf %296 : vector<8x32xf32>
    %298 = math.exp %297 : vector<8x32xf32>
    %cst_62 = arith.constant 1.000000e+00 : f32
    %299 = vector.broadcast %cst_62 : f32 to vector<8x32xf32>
    %300 = arith.addf %299, %298 : vector<8x32xf32>
    %301 = arith.divf %299, %300 : vector<8x32xf32>
    %302 = vector.extract_strided_slice %284 {offsets = [0, 64], sizes = [8, 32], strides = [1, 1]} : vector<8x96xf32> to vector<8x32xf32>
    %303 = vector.extract_strided_slice %279 {offsets = [0, 64], sizes = [8, 32], strides = [1, 1]} : vector<8x96xf32> to vector<8x32xf32>
    %304 = arith.mulf %293, %303 : vector<8x32xf32>
    %305 = arith.addf %302, %304 : vector<8x32xf32>
    %306 = math.tanh %305 : vector<8x32xf32>
    %cst_63 = arith.constant 1.000000e+00 : f32
    %307 = vector.broadcast %cst_63 : f32 to vector<8x32xf32>
    %308 = arith.subf %307, %301 : vector<8x32xf32>
    %309 = arith.mulf %308, %306 : vector<8x32xf32>
    %310 = arith.mulf %301, %247 : vector<8x32xf32>
    %311 = arith.addf %309, %310 : vector<8x32xf32>
    %312 = vector.extract_strided_slice %285 {offsets = [0, 0], sizes = [8, 32], strides = [1, 1]} : vector<8x96xf32> to vector<8x32xf32>
    %313 = vector.extract_strided_slice %283 {offsets = [0, 0], sizes = [8, 32], strides = [1, 1]} : vector<8x96xf32> to vector<8x32xf32>
    %314 = arith.addf %312, %313 : vector<8x32xf32>
    %315 = arith.negf %314 : vector<8x32xf32>
    %316 = math.exp %315 : vector<8x32xf32>
    %cst_64 = arith.constant 1.000000e+00 : f32
    %317 = vector.broadcast %cst_64 : f32 to vector<8x32xf32>
    %318 = arith.addf %317, %316 : vector<8x32xf32>
    %319 = arith.divf %317, %318 : vector<8x32xf32>
    %320 = vector.extract_strided_slice %285 {offsets = [0, 32], sizes = [8, 32], strides = [1, 1]} : vector<8x96xf32> to vector<8x32xf32>
    %321 = vector.extract_strided_slice %283 {offsets = [0, 32], sizes = [8, 32], strides = [1, 1]} : vector<8x96xf32> to vector<8x32xf32>
    %322 = arith.addf %320, %321 : vector<8x32xf32>
    %323 = arith.negf %322 : vector<8x32xf32>
    %324 = math.exp %323 : vector<8x32xf32>
    %cst_65 = arith.constant 1.000000e+00 : f32
    %325 = vector.broadcast %cst_65 : f32 to vector<8x32xf32>
    %326 = arith.addf %325, %324 : vector<8x32xf32>
    %327 = arith.divf %325, %326 : vector<8x32xf32>
    %328 = vector.extract_strided_slice %285 {offsets = [0, 64], sizes = [8, 32], strides = [1, 1]} : vector<8x96xf32> to vector<8x32xf32>
    %329 = vector.extract_strided_slice %283 {offsets = [0, 64], sizes = [8, 32], strides = [1, 1]} : vector<8x96xf32> to vector<8x32xf32>
    %330 = arith.mulf %319, %329 : vector<8x32xf32>
    %331 = arith.addf %328, %330 : vector<8x32xf32>
    %332 = math.tanh %331 : vector<8x32xf32>
    %cst_66 = arith.constant 1.000000e+00 : f32
    %333 = vector.broadcast %cst_66 : f32 to vector<8x32xf32>
    %334 = arith.subf %333, %327 : vector<8x32xf32>
    %335 = arith.mulf %334, %332 : vector<8x32xf32>
    %336 = arith.mulf %327, %273 : vector<8x32xf32>
    %337 = arith.addf %335, %336 : vector<8x32xf32>
    %c32_67 = arith.constant 32 : index
    %c0_68 = arith.constant 0 : index
    %338 = vector.load %arg17[%c32_67, %c0_68] : memref<64x64xf32, #tpu.memory_space<vmem>>, vector<8x32xf32>
    tpu.vector_store %arg17[%c32_67, %c0_68], %311 {strides = array<i32>} : memref<64x64xf32, #tpu.memory_space<vmem>>, vector<8x32xf32>,
    %c24_69 = arith.constant 24 : index
    %c32_70 = arith.constant 32 : index
    %339 = vector.load %arg17[%c24_69, %c32_70] : memref<64x64xf32, #tpu.memory_space<vmem>>, vector<8x32xf32>
    tpu.vector_store %arg17[%c24_69, %c32_70], %337 {strides = array<i32>} : memref<64x64xf32, #tpu.memory_space<vmem>>, vector<8x32xf32>,
    %340 = arith.truncf %311 : vector<8x32xf32> to vector<8x32xbf16>
    %cst_71 = arith.constant dense<0.000000e+00> : vector<8x96xf32>
    %341 = tpu.matmul %340, %14, %cst_71 {dimension_numbers = #tpu.dot_dimension_numbers<[1], [0], [0], [1], [0, 0, 1, 1], [], []>} : vector<8x32xbf16>, vector<32x96xbf16>, vector<8x96xf32> -> vector<8x96xf32>
    %342 = vector.broadcast %16 : vector<1x96xf32> to vector<8x96xf32>
    %343 = arith.addf %341, %342 : vector<8x96xf32>
    %344 = arith.truncf %337 : vector<8x32xf32> to vector<8x32xbf16>
    %cst_72 = arith.constant dense<0.000000e+00> : vector<8x96xf32>
    %345 = tpu.matmul %344, %15, %cst_72 {dimension_numbers = #tpu.dot_dimension_numbers<[1], [0], [0], [1], [0, 0, 1, 1], [], []>} : vector<8x32xbf16>, vector<32x96xbf16>, vector<8x96xf32> -> vector<8x96xf32>
    %346 = vector.broadcast %17 : vector<1x96xf32> to vector<8x96xf32>
    %347 = arith.addf %345, %346 : vector<8x96xf32>
    %348 = vector.extract_strided_slice %13 {offsets = [40, 0], sizes = [8, 96], strides = [1, 1]} : vector<64x192xf32> to vector<8x96xf32>
    %349 = vector.extract_strided_slice %13 {offsets = [16, 96], sizes = [8, 96], strides = [1, 1]} : vector<64x192xf32> to vector<8x96xf32>
    %350 = vector.extract_strided_slice %348 {offsets = [0, 0], sizes = [8, 32], strides = [1, 1]} : vector<8x96xf32> to vector<8x32xf32>
    %351 = vector.extract_strided_slice %343 {offsets = [0, 0], sizes = [8, 32], strides = [1, 1]} : vector<8x96xf32> to vector<8x32xf32>
    %352 = arith.addf %350, %351 : vector<8x32xf32>
    %353 = arith.negf %352 : vector<8x32xf32>
    %354 = math.exp %353 : vector<8x32xf32>
    %cst_73 = arith.constant 1.000000e+00 : f32
    %355 = vector.broadcast %cst_73 : f32 to vector<8x32xf32>
    %356 = arith.addf %355, %354 : vector<8x32xf32>
    %357 = arith.divf %355, %356 : vector<8x32xf32>
    %358 = vector.extract_strided_slice %348 {offsets = [0, 32], sizes = [8, 32], strides = [1, 1]} : vector<8x96xf32> to vector<8x32xf32>
    %359 = vector.extract_strided_slice %343 {offsets = [0, 32], sizes = [8, 32], strides = [1, 1]} : vector<8x96xf32> to vector<8x32xf32>
    %360 = arith.addf %358, %359 : vector<8x32xf32>
    %361 = arith.negf %360 : vector<8x32xf32>
    %362 = math.exp %361 : vector<8x32xf32>
    %cst_74 = arith.constant 1.000000e+00 : f32
    %363 = vector.broadcast %cst_74 : f32 to vector<8x32xf32>
    %364 = arith.addf %363, %362 : vector<8x32xf32>
    %365 = arith.divf %363, %364 : vector<8x32xf32>
    %366 = vector.extract_strided_slice %348 {offsets = [0, 64], sizes = [8, 32], strides = [1, 1]} : vector<8x96xf32> to vector<8x32xf32>
    %367 = vector.extract_strided_slice %343 {offsets = [0, 64], sizes = [8, 32], strides = [1, 1]} : vector<8x96xf32> to vector<8x32xf32>
    %368 = arith.mulf %357, %367 : vector<8x32xf32>
    %369 = arith.addf %366, %368 : vector<8x32xf32>
    %370 = math.tanh %369 : vector<8x32xf32>
    %cst_75 = arith.constant 1.000000e+00 : f32
    %371 = vector.broadcast %cst_75 : f32 to vector<8x32xf32>
    %372 = arith.subf %371, %365 : vector<8x32xf32>
    %373 = arith.mulf %372, %370 : vector<8x32xf32>
    %374 = arith.mulf %365, %311 : vector<8x32xf32>
    %375 = arith.addf %373, %374 : vector<8x32xf32>
    %376 = vector.extract_strided_slice %349 {offsets = [0, 0], sizes = [8, 32], strides = [1, 1]} : vector<8x96xf32> to vector<8x32xf32>
    %377 = vector.extract_strided_slice %347 {offsets = [0, 0], sizes = [8, 32], strides = [1, 1]} : vector<8x96xf32> to vector<8x32xf32>
    %378 = arith.addf %376, %377 : vector<8x32xf32>
    %379 = arith.negf %378 : vector<8x32xf32>
    %380 = math.exp %379 : vector<8x32xf32>
    %cst_76 = arith.constant 1.000000e+00 : f32
    %381 = vector.broadcast %cst_76 : f32 to vector<8x32xf32>
    %382 = arith.addf %381, %380 : vector<8x32xf32>
    %383 = arith.divf %381, %382 : vector<8x32xf32>
    %384 = vector.extract_strided_slice %349 {offsets = [0, 32], sizes = [8, 32], strides = [1, 1]} : vector<8x96xf32> to vector<8x32xf32>
    %385 = vector.extract_strided_slice %347 {offsets = [0, 32], sizes = [8, 32], strides = [1, 1]} : vector<8x96xf32> to vector<8x32xf32>
    %386 = arith.addf %384, %385 : vector<8x32xf32>
    %387 = arith.negf %386 : vector<8x32xf32>
    %388 = math.exp %387 : vector<8x32xf32>
    %cst_77 = arith.constant 1.000000e+00 : f32
    %389 = vector.broadcast %cst_77 : f32 to vector<8x32xf32>
    %390 = arith.addf %389, %388 : vector<8x32xf32>
    %391 = arith.divf %389, %390 : vector<8x32xf32>
    %392 = vector.extract_strided_slice %349 {offsets = [0, 64], sizes = [8, 32], strides = [1, 1]} : vector<8x96xf32> to vector<8x32xf32>
    %393 = vector.extract_strided_slice %347 {offsets = [0, 64], sizes = [8, 32], strides = [1, 1]} : vector<8x96xf32> to vector<8x32xf32>
    %394 = arith.mulf %383, %393 : vector<8x32xf32>
    %395 = arith.addf %392, %394 : vector<8x32xf32>
    %396 = math.tanh %395 : vector<8x32xf32>
    %cst_78 = arith.constant 1.000000e+00 : f32
    %397 = vector.broadcast %cst_78 : f32 to vector<8x32xf32>
    %398 = arith.subf %397, %391 : vector<8x32xf32>
    %399 = arith.mulf %398, %396 : vector<8x32xf32>
    %400 = arith.mulf %391, %337 : vector<8x32xf32>
    %401 = arith.addf %399, %400 : vector<8x32xf32>
    %c40_79 = arith.constant 40 : index
    %c0_80 = arith.constant 0 : index
    %402 = vector.load %arg17[%c40_79, %c0_80] : memref<64x64xf32, #tpu.memory_space<vmem>>, vector<8x32xf32>
    tpu.vector_store %arg17[%c40_79, %c0_80], %375 {strides = array<i32>} : memref<64x64xf32, #tpu.memory_space<vmem>>, vector<8x32xf32>,
    %c16_81 = arith.constant 16 : index
    %c32_82 = arith.constant 32 : index
    %403 = vector.load %arg17[%c16_81, %c32_82] : memref<64x64xf32, #tpu.memory_space<vmem>>, vector<8x32xf32>
    tpu.vector_store %arg17[%c16_81, %c32_82], %401 {strides = array<i32>} : memref<64x64xf32, #tpu.memory_space<vmem>>, vector<8x32xf32>,
    %404 = arith.truncf %375 : vector<8x32xf32> to vector<8x32xbf16>
    %cst_83 = arith.constant dense<0.000000e+00> : vector<8x96xf32>
    %405 = tpu.matmul %404, %14, %cst_83 {dimension_numbers = #tpu.dot_dimension_numbers<[1], [0], [0], [1], [0, 0, 1, 1], [], []>} : vector<8x32xbf16>, vector<32x96xbf16>, vector<8x96xf32> -> vector<8x96xf32>
    %406 = vector.broadcast %16 : vector<1x96xf32> to vector<8x96xf32>
    %407 = arith.addf %405, %406 : vector<8x96xf32>
    %408 = arith.truncf %401 : vector<8x32xf32> to vector<8x32xbf16>
    %cst_84 = arith.constant dense<0.000000e+00> : vector<8x96xf32>
    %409 = tpu.matmul %408, %15, %cst_84 {dimension_numbers = #tpu.dot_dimension_numbers<[1], [0], [0], [1], [0, 0, 1, 1], [], []>} : vector<8x32xbf16>, vector<32x96xbf16>, vector<8x96xf32> -> vector<8x96xf32>
    %410 = vector.broadcast %17 : vector<1x96xf32> to vector<8x96xf32>
    %411 = arith.addf %409, %410 : vector<8x96xf32>
    %412 = vector.extract_strided_slice %13 {offsets = [48, 0], sizes = [8, 96], strides = [1, 1]} : vector<64x192xf32> to vector<8x96xf32>
    %413 = vector.extract_strided_slice %13 {offsets = [8, 96], sizes = [8, 96], strides = [1, 1]} : vector<64x192xf32> to vector<8x96xf32>
    %414 = vector.extract_strided_slice %412 {offsets = [0, 0], sizes = [8, 32], strides = [1, 1]} : vector<8x96xf32> to vector<8x32xf32>
    %415 = vector.extract_strided_slice %407 {offsets = [0, 0], sizes = [8, 32], strides = [1, 1]} : vector<8x96xf32> to vector<8x32xf32>
    %416 = arith.addf %414, %415 : vector<8x32xf32>
    %417 = arith.negf %416 : vector<8x32xf32>
    %418 = math.exp %417 : vector<8x32xf32>
    %cst_85 = arith.constant 1.000000e+00 : f32
    %419 = vector.broadcast %cst_85 : f32 to vector<8x32xf32>
    %420 = arith.addf %419, %418 : vector<8x32xf32>
    %421 = arith.divf %419, %420 : vector<8x32xf32>
    %422 = vector.extract_strided_slice %412 {offsets = [0, 32], sizes = [8, 32], strides = [1, 1]} : vector<8x96xf32> to vector<8x32xf32>
    %423 = vector.extract_strided_slice %407 {offsets = [0, 32], sizes = [8, 32], strides = [1, 1]} : vector<8x96xf32> to vector<8x32xf32>
    %424 = arith.addf %422, %423 : vector<8x32xf32>
    %425 = arith.negf %424 : vector<8x32xf32>
    %426 = math.exp %425 : vector<8x32xf32>
    %cst_86 = arith.constant 1.000000e+00 : f32
    %427 = vector.broadcast %cst_86 : f32 to vector<8x32xf32>
    %428 = arith.addf %427, %426 : vector<8x32xf32>
    %429 = arith.divf %427, %428 : vector<8x32xf32>
    %430 = vector.extract_strided_slice %412 {offsets = [0, 64], sizes = [8, 32], strides = [1, 1]} : vector<8x96xf32> to vector<8x32xf32>
    %431 = vector.extract_strided_slice %407 {offsets = [0, 64], sizes = [8, 32], strides = [1, 1]} : vector<8x96xf32> to vector<8x32xf32>
    %432 = arith.mulf %421, %431 : vector<8x32xf32>
    %433 = arith.addf %430, %432 : vector<8x32xf32>
    %434 = math.tanh %433 : vector<8x32xf32>
    %cst_87 = arith.constant 1.000000e+00 : f32
    %435 = vector.broadcast %cst_87 : f32 to vector<8x32xf32>
    %436 = arith.subf %435, %429 : vector<8x32xf32>
    %437 = arith.mulf %436, %434 : vector<8x32xf32>
    %438 = arith.mulf %429, %375 : vector<8x32xf32>
    %439 = arith.addf %437, %438 : vector<8x32xf32>
    %440 = vector.extract_strided_slice %413 {offsets = [0, 0], sizes = [8, 32], strides = [1, 1]} : vector<8x96xf32> to vector<8x32xf32>
    %441 = vector.extract_strided_slice %411 {offsets = [0, 0], sizes = [8, 32], strides = [1, 1]} : vector<8x96xf32> to vector<8x32xf32>
    %442 = arith.addf %440, %441 : vector<8x32xf32>
    %443 = arith.negf %442 : vector<8x32xf32>
    %444 = math.exp %443 : vector<8x32xf32>
    %cst_88 = arith.constant 1.000000e+00 : f32
    %445 = vector.broadcast %cst_88 : f32 to vector<8x32xf32>
    %446 = arith.addf %445, %444 : vector<8x32xf32>
    %447 = arith.divf %445, %446 : vector<8x32xf32>
    %448 = vector.extract_strided_slice %413 {offsets = [0, 32], sizes = [8, 32], strides = [1, 1]} : vector<8x96xf32> to vector<8x32xf32>
    %449 = vector.extract_strided_slice %411 {offsets = [0, 32], sizes = [8, 32], strides = [1, 1]} : vector<8x96xf32> to vector<8x32xf32>
    %450 = arith.addf %448, %449 : vector<8x32xf32>
    %451 = arith.negf %450 : vector<8x32xf32>
    %452 = math.exp %451 : vector<8x32xf32>
    %cst_89 = arith.constant 1.000000e+00 : f32
    %453 = vector.broadcast %cst_89 : f32 to vector<8x32xf32>
    %454 = arith.addf %453, %452 : vector<8x32xf32>
    %455 = arith.divf %453, %454 : vector<8x32xf32>
    %456 = vector.extract_strided_slice %413 {offsets = [0, 64], sizes = [8, 32], strides = [1, 1]} : vector<8x96xf32> to vector<8x32xf32>
    %457 = vector.extract_strided_slice %411 {offsets = [0, 64], sizes = [8, 32], strides = [1, 1]} : vector<8x96xf32> to vector<8x32xf32>
    %458 = arith.mulf %447, %457 : vector<8x32xf32>
    %459 = arith.addf %456, %458 : vector<8x32xf32>
    %460 = math.tanh %459 : vector<8x32xf32>
    %cst_90 = arith.constant 1.000000e+00 : f32
    %461 = vector.broadcast %cst_90 : f32 to vector<8x32xf32>
    %462 = arith.subf %461, %455 : vector<8x32xf32>
    %463 = arith.mulf %462, %460 : vector<8x32xf32>
    %464 = arith.mulf %455, %401 : vector<8x32xf32>
    %465 = arith.addf %463, %464 : vector<8x32xf32>
    %c48_91 = arith.constant 48 : index
    %c0_92 = arith.constant 0 : index
    %466 = vector.load %arg17[%c48_91, %c0_92] : memref<64x64xf32, #tpu.memory_space<vmem>>, vector<8x32xf32>
    tpu.vector_store %arg17[%c48_91, %c0_92], %439 {strides = array<i32>} : memref<64x64xf32, #tpu.memory_space<vmem>>, vector<8x32xf32>,
    %c8_93 = arith.constant 8 : index
    %c32_94 = arith.constant 32 : index
    %467 = vector.load %arg17[%c8_93, %c32_94] : memref<64x64xf32, #tpu.memory_space<vmem>>, vector<8x32xf32>
    tpu.vector_store %arg17[%c8_93, %c32_94], %465 {strides = array<i32>} : memref<64x64xf32, #tpu.memory_space<vmem>>, vector<8x32xf32>,
    %468 = arith.truncf %439 : vector<8x32xf32> to vector<8x32xbf16>
    %cst_95 = arith.constant dense<0.000000e+00> : vector<8x96xf32>
    %469 = tpu.matmul %468, %14, %cst_95 {dimension_numbers = #tpu.dot_dimension_numbers<[1], [0], [0], [1], [0, 0, 1, 1], [], []>} : vector<8x32xbf16>, vector<32x96xbf16>, vector<8x96xf32> -> vector<8x96xf32>
    %470 = vector.broadcast %16 : vector<1x96xf32> to vector<8x96xf32>
    %471 = arith.addf %469, %470 : vector<8x96xf32>
    %472 = arith.truncf %465 : vector<8x32xf32> to vector<8x32xbf16>
    %cst_96 = arith.constant dense<0.000000e+00> : vector<8x96xf32>
    %473 = tpu.matmul %472, %15, %cst_96 {dimension_numbers = #tpu.dot_dimension_numbers<[1], [0], [0], [1], [0, 0, 1, 1], [], []>} : vector<8x32xbf16>, vector<32x96xbf16>, vector<8x96xf32> -> vector<8x96xf32>
    %474 = vector.broadcast %17 : vector<1x96xf32> to vector<8x96xf32>
    %475 = arith.addf %473, %474 : vector<8x96xf32>
    %476 = vector.extract_strided_slice %13 {offsets = [56, 0], sizes = [8, 96], strides = [1, 1]} : vector<64x192xf32> to vector<8x96xf32>
    %477 = vector.extract_strided_slice %13 {offsets = [0, 96], sizes = [8, 96], strides = [1, 1]} : vector<64x192xf32> to vector<8x96xf32>
    %478 = vector.extract_strided_slice %476 {offsets = [0, 0], sizes = [8, 32], strides = [1, 1]} : vector<8x96xf32> to vector<8x32xf32>
    %479 = vector.extract_strided_slice %471 {offsets = [0, 0], sizes = [8, 32], strides = [1, 1]} : vector<8x96xf32> to vector<8x32xf32>
    %480 = arith.addf %478, %479 : vector<8x32xf32>
    %481 = arith.negf %480 : vector<8x32xf32>
    %482 = math.exp %481 : vector<8x32xf32>
    %cst_97 = arith.constant 1.000000e+00 : f32
    %483 = vector.broadcast %cst_97 : f32 to vector<8x32xf32>
    %484 = arith.addf %483, %482 : vector<8x32xf32>
    %485 = arith.divf %483, %484 : vector<8x32xf32>
    %486 = vector.extract_strided_slice %476 {offsets = [0, 32], sizes = [8, 32], strides = [1, 1]} : vector<8x96xf32> to vector<8x32xf32>
    %487 = vector.extract_strided_slice %471 {offsets = [0, 32], sizes = [8, 32], strides = [1, 1]} : vector<8x96xf32> to vector<8x32xf32>
    %488 = arith.addf %486, %487 : vector<8x32xf32>
    %489 = arith.negf %488 : vector<8x32xf32>
    %490 = math.exp %489 : vector<8x32xf32>
    %cst_98 = arith.constant 1.000000e+00 : f32
    %491 = vector.broadcast %cst_98 : f32 to vector<8x32xf32>
    %492 = arith.addf %491, %490 : vector<8x32xf32>
    %493 = arith.divf %491, %492 : vector<8x32xf32>
    %494 = vector.extract_strided_slice %476 {offsets = [0, 64], sizes = [8, 32], strides = [1, 1]} : vector<8x96xf32> to vector<8x32xf32>
    %495 = vector.extract_strided_slice %471 {offsets = [0, 64], sizes = [8, 32], strides = [1, 1]} : vector<8x96xf32> to vector<8x32xf32>
    %496 = arith.mulf %485, %495 : vector<8x32xf32>
    %497 = arith.addf %494, %496 : vector<8x32xf32>
    %498 = math.tanh %497 : vector<8x32xf32>
    %cst_99 = arith.constant 1.000000e+00 : f32
    %499 = vector.broadcast %cst_99 : f32 to vector<8x32xf32>
    %500 = arith.subf %499, %493 : vector<8x32xf32>
    %501 = arith.mulf %500, %498 : vector<8x32xf32>
    %502 = arith.mulf %493, %439 : vector<8x32xf32>
    %503 = arith.addf %501, %502 : vector<8x32xf32>
    %504 = vector.extract_strided_slice %477 {offsets = [0, 0], sizes = [8, 32], strides = [1, 1]} : vector<8x96xf32> to vector<8x32xf32>
    %505 = vector.extract_strided_slice %475 {offsets = [0, 0], sizes = [8, 32], strides = [1, 1]} : vector<8x96xf32> to vector<8x32xf32>
    %506 = arith.addf %504, %505 : vector<8x32xf32>
    %507 = arith.negf %506 : vector<8x32xf32>
    %508 = math.exp %507 : vector<8x32xf32>
    %cst_100 = arith.constant 1.000000e+00 : f32
    %509 = vector.broadcast %cst_100 : f32 to vector<8x32xf32>
    %510 = arith.addf %509, %508 : vector<8x32xf32>
    %511 = arith.divf %509, %510 : vector<8x32xf32>
    %512 = vector.extract_strided_slice %477 {offsets = [0, 32], sizes = [8, 32], strides = [1, 1]} : vector<8x96xf32> to vector<8x32xf32>
    %513 = vector.extract_strided_slice %475 {offsets = [0, 32], sizes = [8, 32], strides = [1, 1]} : vector<8x96xf32> to vector<8x32xf32>
    %514 = arith.addf %512, %513 : vector<8x32xf32>
    %515 = arith.negf %514 : vector<8x32xf32>
    %516 = math.exp %515 : vector<8x32xf32>
    %cst_101 = arith.constant 1.000000e+00 : f32
    %517 = vector.broadcast %cst_101 : f32 to vector<8x32xf32>
    %518 = arith.addf %517, %516 : vector<8x32xf32>
    %519 = arith.divf %517, %518 : vector<8x32xf32>
    %520 = vector.extract_strided_slice %477 {offsets = [0, 64], sizes = [8, 32], strides = [1, 1]} : vector<8x96xf32> to vector<8x32xf32>
    %521 = vector.extract_strided_slice %475 {offsets = [0, 64], sizes = [8, 32], strides = [1, 1]} : vector<8x96xf32> to vector<8x32xf32>
    %522 = arith.mulf %511, %521 : vector<8x32xf32>
    %523 = arith.addf %520, %522 : vector<8x32xf32>
    %524 = math.tanh %523 : vector<8x32xf32>
    %cst_102 = arith.constant 1.000000e+00 : f32
    %525 = vector.broadcast %cst_102 : f32 to vector<8x32xf32>
    %526 = arith.subf %525, %519 : vector<8x32xf32>
    %527 = arith.mulf %526, %524 : vector<8x32xf32>
    %528 = arith.mulf %519, %465 : vector<8x32xf32>
    %529 = arith.addf %527, %528 : vector<8x32xf32>
    %c56_103 = arith.constant 56 : index
    %c0_104 = arith.constant 0 : index
    %530 = vector.load %arg17[%c56_103, %c0_104] : memref<64x64xf32, #tpu.memory_space<vmem>>, vector<8x32xf32>
    tpu.vector_store %arg17[%c56_103, %c0_104], %503 {strides = array<i32>} : memref<64x64xf32, #tpu.memory_space<vmem>>, vector<8x32xf32>,
    %c0_105 = arith.constant 0 : index
    %c32_106 = arith.constant 32 : index
    %531 = vector.load %arg17[%c0_105, %c32_106] : memref<64x64xf32, #tpu.memory_space<vmem>>, vector<8x32xf32>
    tpu.vector_store %arg17[%c0_105, %c32_106], %529 {strides = array<i32>} : memref<64x64xf32, #tpu.memory_space<vmem>>, vector<8x32xf32>,
    %c0_107 = arith.constant 0 : index
    %c0_108 = arith.constant 0 : index
    %532 = vector.load %arg17[%c0_107, %c0_108] : memref<64x64xf32, #tpu.memory_space<vmem>>, vector<64x64xf32>
    %533 = arith.truncf %532 : vector<64x64xf32> to vector<64x64xbf16>
    %c0_109 = arith.constant 0 : index
    %c0_110 = arith.constant 0 : index
    %534 = vector.load %arg8[%c0_109, %c0_110] : memref<64x192xbf16, #tpu.memory_space<vmem>>, vector<64x192xbf16>
    %cst_111 = arith.constant dense<0.000000e+00> : vector<64x192xf32>
    %535 = tpu.matmul %533, %534, %cst_111 {dimension_numbers = #tpu.dot_dimension_numbers<[1], [0], [0], [1], [0, 0, 1, 1], [], []>} : vector<64x64xbf16>, vector<64x192xbf16>, vector<64x192xf32> -> vector<64x192xf32>
    %c0_112 = arith.constant 0 : index
    %c0_113 = arith.constant 0 : index
    %536 = vector.load %arg11[%c0_112, %c0_113] : memref<1x192xf32, #tpu.memory_space<vmem>>, vector<1x192xf32>
    %537 = vector.broadcast %536 : vector<1x192xf32> to vector<64x192xf32>
    %538 = arith.addf %535, %537 : vector<64x192xf32>
    %c0_114 = arith.constant 0 : index
    %c0_115 = arith.constant 0 : index
    %539 = vector.load %arg9[%c0_114, %c0_115] : memref<32x96xbf16, #tpu.memory_space<vmem>>, vector<32x96xbf16>
    %c0_116 = arith.constant 0 : index
    %c0_117 = arith.constant 0 : index
    %540 = vector.load %arg10[%c0_116, %c0_117] : memref<32x96xbf16, #tpu.memory_space<vmem>>, vector<32x96xbf16>
    %c0_118 = arith.constant 0 : index
    %c0_119 = arith.constant 0 : index
    %541 = vector.load %arg12[%c0_118, %c0_119] : memref<1x96xf32, #tpu.memory_space<vmem>>, vector<1x96xf32>
    %c0_120 = arith.constant 0 : index
    %c0_121 = arith.constant 0 : index
    %542 = vector.load %arg13[%c0_120, %c0_121] : memref<1x96xf32, #tpu.memory_space<vmem>>, vector<1x96xf32>
    %cst_122 = arith.constant 0.000000e+00 : f32
    %543 = vector.broadcast %cst_122 : f32 to vector<8x32xf32>
    %cst_123 = arith.constant 0.000000e+00 : f32
    %544 = vector.broadcast %cst_123 : f32 to vector<8x32xf32>
    %545 = arith.truncf %543 : vector<8x32xf32> to vector<8x32xbf16>
    %cst_124 = arith.constant dense<0.000000e+00> : vector<8x96xf32>
    %546 = tpu.matmul %545, %539, %cst_124 {dimension_numbers = #tpu.dot_dimension_numbers<[1], [0], [0], [1], [0, 0, 1, 1], [], []>} : vector<8x32xbf16>, vector<32x96xbf16>, vector<8x96xf32> -> vector<8x96xf32>
    %547 = vector.broadcast %541 : vector<1x96xf32> to vector<8x96xf32>
    %548 = arith.addf %546, %547 : vector<8x96xf32>
    %549 = arith.truncf %544 : vector<8x32xf32> to vector<8x32xbf16>
    %cst_125 = arith.constant dense<0.000000e+00> : vector<8x96xf32>
    %550 = tpu.matmul %549, %540, %cst_125 {dimension_numbers = #tpu.dot_dimension_numbers<[1], [0], [0], [1], [0, 0, 1, 1], [], []>} : vector<8x32xbf16>, vector<32x96xbf16>, vector<8x96xf32> -> vector<8x96xf32>
    %551 = vector.broadcast %542 : vector<1x96xf32> to vector<8x96xf32>
    %552 = arith.addf %550, %551 : vector<8x96xf32>
    %553 = vector.extract_strided_slice %538 {offsets = [0, 0], sizes = [8, 96], strides = [1, 1]} : vector<64x192xf32> to vector<8x96xf32>
    %554 = vector.extract_strided_slice %538 {offsets = [56, 96], sizes = [8, 96], strides = [1, 1]} : vector<64x192xf32> to vector<8x96xf32>
    %555 = vector.extract_strided_slice %553 {offsets = [0, 0], sizes = [8, 32], strides = [1, 1]} : vector<8x96xf32> to vector<8x32xf32>
    %556 = vector.extract_strided_slice %548 {offsets = [0, 0], sizes = [8, 32], strides = [1, 1]} : vector<8x96xf32> to vector<8x32xf32>
    %557 = arith.addf %555, %556 : vector<8x32xf32>
    %558 = arith.negf %557 : vector<8x32xf32>
    %559 = math.exp %558 : vector<8x32xf32>
    %cst_126 = arith.constant 1.000000e+00 : f32
    %560 = vector.broadcast %cst_126 : f32 to vector<8x32xf32>
    %561 = arith.addf %560, %559 : vector<8x32xf32>
    %562 = arith.divf %560, %561 : vector<8x32xf32>
    %563 = vector.extract_strided_slice %553 {offsets = [0, 32], sizes = [8, 32], strides = [1, 1]} : vector<8x96xf32> to vector<8x32xf32>
    %564 = vector.extract_strided_slice %548 {offsets = [0, 32], sizes = [8, 32], strides = [1, 1]} : vector<8x96xf32> to vector<8x32xf32>
    %565 = arith.addf %563, %564 : vector<8x32xf32>
    %566 = arith.negf %565 : vector<8x32xf32>
    %567 = math.exp %566 : vector<8x32xf32>
    %cst_127 = arith.constant 1.000000e+00 : f32
    %568 = vector.broadcast %cst_127 : f32 to vector<8x32xf32>
    %569 = arith.addf %568, %567 : vector<8x32xf32>
    %570 = arith.divf %568, %569 : vector<8x32xf32>
    %571 = vector.extract_strided_slice %553 {offsets = [0, 64], sizes = [8, 32], strides = [1, 1]} : vector<8x96xf32> to vector<8x32xf32>
    %572 = vector.extract_strided_slice %548 {offsets = [0, 64], sizes = [8, 32], strides = [1, 1]} : vector<8x96xf32> to vector<8x32xf32>
    %573 = arith.mulf %562, %572 : vector<8x32xf32>
    %574 = arith.addf %571, %573 : vector<8x32xf32>
    %575 = math.tanh %574 : vector<8x32xf32>
    %cst_128 = arith.constant 1.000000e+00 : f32
    %576 = vector.broadcast %cst_128 : f32 to vector<8x32xf32>
    %577 = arith.subf %576, %570 : vector<8x32xf32>
    %578 = arith.mulf %577, %575 : vector<8x32xf32>
    %579 = arith.mulf %570, %543 : vector<8x32xf32>
    %580 = arith.addf %578, %579 : vector<8x32xf32>
    %581 = vector.extract_strided_slice %554 {offsets = [0, 0], sizes = [8, 32], strides = [1, 1]} : vector<8x96xf32> to vector<8x32xf32>
    %582 = vector.extract_strided_slice %552 {offsets = [0, 0], sizes = [8, 32], strides = [1, 1]} : vector<8x96xf32> to vector<8x32xf32>
    %583 = arith.addf %581, %582 : vector<8x32xf32>
    %584 = arith.negf %583 : vector<8x32xf32>
    %585 = math.exp %584 : vector<8x32xf32>
    %cst_129 = arith.constant 1.000000e+00 : f32
    %586 = vector.broadcast %cst_129 : f32 to vector<8x32xf32>
    %587 = arith.addf %586, %585 : vector<8x32xf32>
    %588 = arith.divf %586, %587 : vector<8x32xf32>
    %589 = vector.extract_strided_slice %554 {offsets = [0, 32], sizes = [8, 32], strides = [1, 1]} : vector<8x96xf32> to vector<8x32xf32>
    %590 = vector.extract_strided_slice %552 {offsets = [0, 32], sizes = [8, 32], strides = [1, 1]} : vector<8x96xf32> to vector<8x32xf32>
    %591 = arith.addf %589, %590 : vector<8x32xf32>
    %592 = arith.negf %591 : vector<8x32xf32>
    %593 = math.exp %592 : vector<8x32xf32>
    %cst_130 = arith.constant 1.000000e+00 : f32
    %594 = vector.broadcast %cst_130 : f32 to vector<8x32xf32>
    %595 = arith.addf %594, %593 : vector<8x32xf32>
    %596 = arith.divf %594, %595 : vector<8x32xf32>
    %597 = vector.extract_strided_slice %554 {offsets = [0, 64], sizes = [8, 32], strides = [1, 1]} : vector<8x96xf32> to vector<8x32xf32>
    %598 = vector.extract_strided_slice %552 {offsets = [0, 64], sizes = [8, 32], strides = [1, 1]} : vector<8x96xf32> to vector<8x32xf32>
    %599 = arith.mulf %588, %598 : vector<8x32xf32>
    %600 = arith.addf %597, %599 : vector<8x32xf32>
    %601 = math.tanh %600 : vector<8x32xf32>
    %cst_131 = arith.constant 1.000000e+00 : f32
    %602 = vector.broadcast %cst_131 : f32 to vector<8x32xf32>
    %603 = arith.subf %602, %596 : vector<8x32xf32>
    %604 = arith.mulf %603, %601 : vector<8x32xf32>
    %605 = arith.mulf %596, %544 : vector<8x32xf32>
    %606 = arith.addf %604, %605 : vector<8x32xf32>
    %c0_132 = arith.constant 0 : index
    %c0_133 = arith.constant 0 : index
    %607 = vector.load %arg17[%c0_132, %c0_133] : memref<64x64xf32, #tpu.memory_space<vmem>>, vector<8x32xf32>
    tpu.vector_store %arg17[%c0_132, %c0_133], %580 {strides = array<i32>} : memref<64x64xf32, #tpu.memory_space<vmem>>, vector<8x32xf32>,
    %c56_134 = arith.constant 56 : index
    %c32_135 = arith.constant 32 : index
    %608 = vector.load %arg17[%c56_134, %c32_135] : memref<64x64xf32, #tpu.memory_space<vmem>>, vector<8x32xf32>
    tpu.vector_store %arg17[%c56_134, %c32_135], %606 {strides = array<i32>} : memref<64x64xf32, #tpu.memory_space<vmem>>, vector<8x32xf32>,
    %609 = arith.truncf %580 : vector<8x32xf32> to vector<8x32xbf16>
    %cst_136 = arith.constant dense<0.000000e+00> : vector<8x96xf32>
    %610 = tpu.matmul %609, %539, %cst_136 {dimension_numbers = #tpu.dot_dimension_numbers<[1], [0], [0], [1], [0, 0, 1, 1], [], []>} : vector<8x32xbf16>, vector<32x96xbf16>, vector<8x96xf32> -> vector<8x96xf32>
    %611 = vector.broadcast %541 : vector<1x96xf32> to vector<8x96xf32>
    %612 = arith.addf %610, %611 : vector<8x96xf32>
    %613 = arith.truncf %606 : vector<8x32xf32> to vector<8x32xbf16>
    %cst_137 = arith.constant dense<0.000000e+00> : vector<8x96xf32>
    %614 = tpu.matmul %613, %540, %cst_137 {dimension_numbers = #tpu.dot_dimension_numbers<[1], [0], [0], [1], [0, 0, 1, 1], [], []>} : vector<8x32xbf16>, vector<32x96xbf16>, vector<8x96xf32> -> vector<8x96xf32>
    %615 = vector.broadcast %542 : vector<1x96xf32> to vector<8x96xf32>
    %616 = arith.addf %614, %615 : vector<8x96xf32>
    %617 = vector.extract_strided_slice %538 {offsets = [8, 0], sizes = [8, 96], strides = [1, 1]} : vector<64x192xf32> to vector<8x96xf32>
    %618 = vector.extract_strided_slice %538 {offsets = [48, 96], sizes = [8, 96], strides = [1, 1]} : vector<64x192xf32> to vector<8x96xf32>
    %619 = vector.extract_strided_slice %617 {offsets = [0, 0], sizes = [8, 32], strides = [1, 1]} : vector<8x96xf32> to vector<8x32xf32>
    %620 = vector.extract_strided_slice %612 {offsets = [0, 0], sizes = [8, 32], strides = [1, 1]} : vector<8x96xf32> to vector<8x32xf32>
    %621 = arith.addf %619, %620 : vector<8x32xf32>
    %622 = arith.negf %621 : vector<8x32xf32>
    %623 = math.exp %622 : vector<8x32xf32>
    %cst_138 = arith.constant 1.000000e+00 : f32
    %624 = vector.broadcast %cst_138 : f32 to vector<8x32xf32>
    %625 = arith.addf %624, %623 : vector<8x32xf32>
    %626 = arith.divf %624, %625 : vector<8x32xf32>
    %627 = vector.extract_strided_slice %617 {offsets = [0, 32], sizes = [8, 32], strides = [1, 1]} : vector<8x96xf32> to vector<8x32xf32>
    %628 = vector.extract_strided_slice %612 {offsets = [0, 32], sizes = [8, 32], strides = [1, 1]} : vector<8x96xf32> to vector<8x32xf32>
    %629 = arith.addf %627, %628 : vector<8x32xf32>
    %630 = arith.negf %629 : vector<8x32xf32>
    %631 = math.exp %630 : vector<8x32xf32>
    %cst_139 = arith.constant 1.000000e+00 : f32
    %632 = vector.broadcast %cst_139 : f32 to vector<8x32xf32>
    %633 = arith.addf %632, %631 : vector<8x32xf32>
    %634 = arith.divf %632, %633 : vector<8x32xf32>
    %635 = vector.extract_strided_slice %617 {offsets = [0, 64], sizes = [8, 32], strides = [1, 1]} : vector<8x96xf32> to vector<8x32xf32>
    %636 = vector.extract_strided_slice %612 {offsets = [0, 64], sizes = [8, 32], strides = [1, 1]} : vector<8x96xf32> to vector<8x32xf32>
    %637 = arith.mulf %626, %636 : vector<8x32xf32>
    %638 = arith.addf %635, %637 : vector<8x32xf32>
    %639 = math.tanh %638 : vector<8x32xf32>
    %cst_140 = arith.constant 1.000000e+00 : f32
    %640 = vector.broadcast %cst_140 : f32 to vector<8x32xf32>
    %641 = arith.subf %640, %634 : vector<8x32xf32>
    %642 = arith.mulf %641, %639 : vector<8x32xf32>
    %643 = arith.mulf %634, %580 : vector<8x32xf32>
    %644 = arith.addf %642, %643 : vector<8x32xf32>
    %645 = vector.extract_strided_slice %618 {offsets = [0, 0], sizes = [8, 32], strides = [1, 1]} : vector<8x96xf32> to vector<8x32xf32>
    %646 = vector.extract_strided_slice %616 {offsets = [0, 0], sizes = [8, 32], strides = [1, 1]} : vector<8x96xf32> to vector<8x32xf32>
    %647 = arith.addf %645, %646 : vector<8x32xf32>
    %648 = arith.negf %647 : vector<8x32xf32>
    %649 = math.exp %648 : vector<8x32xf32>
    %cst_141 = arith.constant 1.000000e+00 : f32
    %650 = vector.broadcast %cst_141 : f32 to vector<8x32xf32>
    %651 = arith.addf %650, %649 : vector<8x32xf32>
    %652 = arith.divf %650, %651 : vector<8x32xf32>
    %653 = vector.extract_strided_slice %618 {offsets = [0, 32], sizes = [8, 32], strides = [1, 1]} : vector<8x96xf32> to vector<8x32xf32>
    %654 = vector.extract_strided_slice %616 {offsets = [0, 32], sizes = [8, 32], strides = [1, 1]} : vector<8x96xf32> to vector<8x32xf32>
    %655 = arith.addf %653, %654 : vector<8x32xf32>
    %656 = arith.negf %655 : vector<8x32xf32>
    %657 = math.exp %656 : vector<8x32xf32>
    %cst_142 = arith.constant 1.000000e+00 : f32
    %658 = vector.broadcast %cst_142 : f32 to vector<8x32xf32>
    %659 = arith.addf %658, %657 : vector<8x32xf32>
    %660 = arith.divf %658, %659 : vector<8x32xf32>
    %661 = vector.extract_strided_slice %618 {offsets = [0, 64], sizes = [8, 32], strides = [1, 1]} : vector<8x96xf32> to vector<8x32xf32>
    %662 = vector.extract_strided_slice %616 {offsets = [0, 64], sizes = [8, 32], strides = [1, 1]} : vector<8x96xf32> to vector<8x32xf32>
    %663 = arith.mulf %652, %662 : vector<8x32xf32>
    %664 = arith.addf %661, %663 : vector<8x32xf32>
    %665 = math.tanh %664 : vector<8x32xf32>
    %cst_143 = arith.constant 1.000000e+00 : f32
    %666 = vector.broadcast %cst_143 : f32 to vector<8x32xf32>
    %667 = arith.subf %666, %660 : vector<8x32xf32>
    %668 = arith.mulf %667, %665 : vector<8x32xf32>
    %669 = arith.mulf %660, %606 : vector<8x32xf32>
    %670 = arith.addf %668, %669 : vector<8x32xf32>
    %c8_144 = arith.constant 8 : index
    %c0_145 = arith.constant 0 : index
    %671 = vector.load %arg17[%c8_144, %c0_145] : memref<64x64xf32, #tpu.memory_space<vmem>>, vector<8x32xf32>
    tpu.vector_store %arg17[%c8_144, %c0_145], %644 {strides = array<i32>} : memref<64x64xf32, #tpu.memory_space<vmem>>, vector<8x32xf32>,
    %c48_146 = arith.constant 48 : index
    %c32_147 = arith.constant 32 : index
    %672 = vector.load %arg17[%c48_146, %c32_147] : memref<64x64xf32, #tpu.memory_space<vmem>>, vector<8x32xf32>
    tpu.vector_store %arg17[%c48_146, %c32_147], %670 {strides = array<i32>} : memref<64x64xf32, #tpu.memory_space<vmem>>, vector<8x32xf32>,
    %673 = arith.truncf %644 : vector<8x32xf32> to vector<8x32xbf16>
    %cst_148 = arith.constant dense<0.000000e+00> : vector<8x96xf32>
    %674 = tpu.matmul %673, %539, %cst_148 {dimension_numbers = #tpu.dot_dimension_numbers<[1], [0], [0], [1], [0, 0, 1, 1], [], []>} : vector<8x32xbf16>, vector<32x96xbf16>, vector<8x96xf32> -> vector<8x96xf32>
    %675 = vector.broadcast %541 : vector<1x96xf32> to vector<8x96xf32>
    %676 = arith.addf %674, %675 : vector<8x96xf32>
    %677 = arith.truncf %670 : vector<8x32xf32> to vector<8x32xbf16>
    %cst_149 = arith.constant dense<0.000000e+00> : vector<8x96xf32>
    %678 = tpu.matmul %677, %540, %cst_149 {dimension_numbers = #tpu.dot_dimension_numbers<[1], [0], [0], [1], [0, 0, 1, 1], [], []>} : vector<8x32xbf16>, vector<32x96xbf16>, vector<8x96xf32> -> vector<8x96xf32>
    %679 = vector.broadcast %542 : vector<1x96xf32> to vector<8x96xf32>
    %680 = arith.addf %678, %679 : vector<8x96xf32>
    %681 = vector.extract_strided_slice %538 {offsets = [16, 0], sizes = [8, 96], strides = [1, 1]} : vector<64x192xf32> to vector<8x96xf32>
    %682 = vector.extract_strided_slice %538 {offsets = [40, 96], sizes = [8, 96], strides = [1, 1]} : vector<64x192xf32> to vector<8x96xf32>
    %683 = vector.extract_strided_slice %681 {offsets = [0, 0], sizes = [8, 32], strides = [1, 1]} : vector<8x96xf32> to vector<8x32xf32>
    %684 = vector.extract_strided_slice %676 {offsets = [0, 0], sizes = [8, 32], strides = [1, 1]} : vector<8x96xf32> to vector<8x32xf32>
    %685 = arith.addf %683, %684 : vector<8x32xf32>
    %686 = arith.negf %685 : vector<8x32xf32>
    %687 = math.exp %686 : vector<8x32xf32>
    %cst_150 = arith.constant 1.000000e+00 : f32
    %688 = vector.broadcast %cst_150 : f32 to vector<8x32xf32>
    %689 = arith.addf %688, %687 : vector<8x32xf32>
    %690 = arith.divf %688, %689 : vector<8x32xf32>
    %691 = vector.extract_strided_slice %681 {offsets = [0, 32], sizes = [8, 32], strides = [1, 1]} : vector<8x96xf32> to vector<8x32xf32>
    %692 = vector.extract_strided_slice %676 {offsets = [0, 32], sizes = [8, 32], strides = [1, 1]} : vector<8x96xf32> to vector<8x32xf32>
    %693 = arith.addf %691, %692 : vector<8x32xf32>
    %694 = arith.negf %693 : vector<8x32xf32>
    %695 = math.exp %694 : vector<8x32xf32>
    %cst_151 = arith.constant 1.000000e+00 : f32
    %696 = vector.broadcast %cst_151 : f32 to vector<8x32xf32>
    %697 = arith.addf %696, %695 : vector<8x32xf32>
    %698 = arith.divf %696, %697 : vector<8x32xf32>
    %699 = vector.extract_strided_slice %681 {offsets = [0, 64], sizes = [8, 32], strides = [1, 1]} : vector<8x96xf32> to vector<8x32xf32>
    %700 = vector.extract_strided_slice %676 {offsets = [0, 64], sizes = [8, 32], strides = [1, 1]} : vector<8x96xf32> to vector<8x32xf32>
    %701 = arith.mulf %690, %700 : vector<8x32xf32>
    %702 = arith.addf %699, %701 : vector<8x32xf32>
    %703 = math.tanh %702 : vector<8x32xf32>
    %cst_152 = arith.constant 1.000000e+00 : f32
    %704 = vector.broadcast %cst_152 : f32 to vector<8x32xf32>
    %705 = arith.subf %704, %698 : vector<8x32xf32>
    %706 = arith.mulf %705, %703 : vector<8x32xf32>
    %707 = arith.mulf %698, %644 : vector<8x32xf32>
    %708 = arith.addf %706, %707 : vector<8x32xf32>
    %709 = vector.extract_strided_slice %682 {offsets = [0, 0], sizes = [8, 32], strides = [1, 1]} : vector<8x96xf32> to vector<8x32xf32>
    %710 = vector.extract_strided_slice %680 {offsets = [0, 0], sizes = [8, 32], strides = [1, 1]} : vector<8x96xf32> to vector<8x32xf32>
    %711 = arith.addf %709, %710 : vector<8x32xf32>
    %712 = arith.negf %711 : vector<8x32xf32>
    %713 = math.exp %712 : vector<8x32xf32>
    %cst_153 = arith.constant 1.000000e+00 : f32
    %714 = vector.broadcast %cst_153 : f32 to vector<8x32xf32>
    %715 = arith.addf %714, %713 : vector<8x32xf32>
    %716 = arith.divf %714, %715 : vector<8x32xf32>
    %717 = vector.extract_strided_slice %682 {offsets = [0, 32], sizes = [8, 32], strides = [1, 1]} : vector<8x96xf32> to vector<8x32xf32>
    %718 = vector.extract_strided_slice %680 {offsets = [0, 32], sizes = [8, 32], strides = [1, 1]} : vector<8x96xf32> to vector<8x32xf32>
    %719 = arith.addf %717, %718 : vector<8x32xf32>
    %720 = arith.negf %719 : vector<8x32xf32>
    %721 = math.exp %720 : vector<8x32xf32>
    %cst_154 = arith.constant 1.000000e+00 : f32
    %722 = vector.broadcast %cst_154 : f32 to vector<8x32xf32>
    %723 = arith.addf %722, %721 : vector<8x32xf32>
    %724 = arith.divf %722, %723 : vector<8x32xf32>
    %725 = vector.extract_strided_slice %682 {offsets = [0, 64], sizes = [8, 32], strides = [1, 1]} : vector<8x96xf32> to vector<8x32xf32>
    %726 = vector.extract_strided_slice %680 {offsets = [0, 64], sizes = [8, 32], strides = [1, 1]} : vector<8x96xf32> to vector<8x32xf32>
    %727 = arith.mulf %716, %726 : vector<8x32xf32>
    %728 = arith.addf %725, %727 : vector<8x32xf32>
    %729 = math.tanh %728 : vector<8x32xf32>
    %cst_155 = arith.constant 1.000000e+00 : f32
    %730 = vector.broadcast %cst_155 : f32 to vector<8x32xf32>
    %731 = arith.subf %730, %724 : vector<8x32xf32>
    %732 = arith.mulf %731, %729 : vector<8x32xf32>
    %733 = arith.mulf %724, %670 : vector<8x32xf32>
    %734 = arith.addf %732, %733 : vector<8x32xf32>
    %c16_156 = arith.constant 16 : index
    %c0_157 = arith.constant 0 : index
    %735 = vector.load %arg17[%c16_156, %c0_157] : memref<64x64xf32, #tpu.memory_space<vmem>>, vector<8x32xf32>
    tpu.vector_store %arg17[%c16_156, %c0_157], %708 {strides = array<i32>} : memref<64x64xf32, #tpu.memory_space<vmem>>, vector<8x32xf32>,
    %c40_158 = arith.constant 40 : index
    %c32_159 = arith.constant 32 : index
    %736 = vector.load %arg17[%c40_158, %c32_159] : memref<64x64xf32, #tpu.memory_space<vmem>>, vector<8x32xf32>
    tpu.vector_store %arg17[%c40_158, %c32_159], %734 {strides = array<i32>} : memref<64x64xf32, #tpu.memory_space<vmem>>, vector<8x32xf32>,
    %737 = arith.truncf %708 : vector<8x32xf32> to vector<8x32xbf16>
    %cst_160 = arith.constant dense<0.000000e+00> : vector<8x96xf32>
    %738 = tpu.matmul %737, %539, %cst_160 {dimension_numbers = #tpu.dot_dimension_numbers<[1], [0], [0], [1], [0, 0, 1, 1], [], []>} : vector<8x32xbf16>, vector<32x96xbf16>, vector<8x96xf32> -> vector<8x96xf32>
    %739 = vector.broadcast %541 : vector<1x96xf32> to vector<8x96xf32>
    %740 = arith.addf %738, %739 : vector<8x96xf32>
    %741 = arith.truncf %734 : vector<8x32xf32> to vector<8x32xbf16>
    %cst_161 = arith.constant dense<0.000000e+00> : vector<8x96xf32>
    %742 = tpu.matmul %741, %540, %cst_161 {dimension_numbers = #tpu.dot_dimension_numbers<[1], [0], [0], [1], [0, 0, 1, 1], [], []>} : vector<8x32xbf16>, vector<32x96xbf16>, vector<8x96xf32> -> vector<8x96xf32>
    %743 = vector.broadcast %542 : vector<1x96xf32> to vector<8x96xf32>
    %744 = arith.addf %742, %743 : vector<8x96xf32>
    %745 = vector.extract_strided_slice %538 {offsets = [24, 0], sizes = [8, 96], strides = [1, 1]} : vector<64x192xf32> to vector<8x96xf32>
    %746 = vector.extract_strided_slice %538 {offsets = [32, 96], sizes = [8, 96], strides = [1, 1]} : vector<64x192xf32> to vector<8x96xf32>
    %747 = vector.extract_strided_slice %745 {offsets = [0, 0], sizes = [8, 32], strides = [1, 1]} : vector<8x96xf32> to vector<8x32xf32>
    %748 = vector.extract_strided_slice %740 {offsets = [0, 0], sizes = [8, 32], strides = [1, 1]} : vector<8x96xf32> to vector<8x32xf32>
    %749 = arith.addf %747, %748 : vector<8x32xf32>
    %750 = arith.negf %749 : vector<8x32xf32>
    %751 = math.exp %750 : vector<8x32xf32>
    %cst_162 = arith.constant 1.000000e+00 : f32
    %752 = vector.broadcast %cst_162 : f32 to vector<8x32xf32>
    %753 = arith.addf %752, %751 : vector<8x32xf32>
    %754 = arith.divf %752, %753 : vector<8x32xf32>
    %755 = vector.extract_strided_slice %745 {offsets = [0, 32], sizes = [8, 32], strides = [1, 1]} : vector<8x96xf32> to vector<8x32xf32>
    %756 = vector.extract_strided_slice %740 {offsets = [0, 32], sizes = [8, 32], strides = [1, 1]} : vector<8x96xf32> to vector<8x32xf32>
    %757 = arith.addf %755, %756 : vector<8x32xf32>
    %758 = arith.negf %757 : vector<8x32xf32>
    %759 = math.exp %758 : vector<8x32xf32>
    %cst_163 = arith.constant 1.000000e+00 : f32
    %760 = vector.broadcast %cst_163 : f32 to vector<8x32xf32>
    %761 = arith.addf %760, %759 : vector<8x32xf32>
    %762 = arith.divf %760, %761 : vector<8x32xf32>
    %763 = vector.extract_strided_slice %745 {offsets = [0, 64], sizes = [8, 32], strides = [1, 1]} : vector<8x96xf32> to vector<8x32xf32>
    %764 = vector.extract_strided_slice %740 {offsets = [0, 64], sizes = [8, 32], strides = [1, 1]} : vector<8x96xf32> to vector<8x32xf32>
    %765 = arith.mulf %754, %764 : vector<8x32xf32>
    %766 = arith.addf %763, %765 : vector<8x32xf32>
    %767 = math.tanh %766 : vector<8x32xf32>
    %cst_164 = arith.constant 1.000000e+00 : f32
    %768 = vector.broadcast %cst_164 : f32 to vector<8x32xf32>
    %769 = arith.subf %768, %762 : vector<8x32xf32>
    %770 = arith.mulf %769, %767 : vector<8x32xf32>
    %771 = arith.mulf %762, %708 : vector<8x32xf32>
    %772 = arith.addf %770, %771 : vector<8x32xf32>
    %773 = vector.extract_strided_slice %746 {offsets = [0, 0], sizes = [8, 32], strides = [1, 1]} : vector<8x96xf32> to vector<8x32xf32>
    %774 = vector.extract_strided_slice %744 {offsets = [0, 0], sizes = [8, 32], strides = [1, 1]} : vector<8x96xf32> to vector<8x32xf32>
    %775 = arith.addf %773, %774 : vector<8x32xf32>
    %776 = arith.negf %775 : vector<8x32xf32>
    %777 = math.exp %776 : vector<8x32xf32>
    %cst_165 = arith.constant 1.000000e+00 : f32
    %778 = vector.broadcast %cst_165 : f32 to vector<8x32xf32>
    %779 = arith.addf %778, %777 : vector<8x32xf32>
    %780 = arith.divf %778, %779 : vector<8x32xf32>
    %781 = vector.extract_strided_slice %746 {offsets = [0, 32], sizes = [8, 32], strides = [1, 1]} : vector<8x96xf32> to vector<8x32xf32>
    %782 = vector.extract_strided_slice %744 {offsets = [0, 32], sizes = [8, 32], strides = [1, 1]} : vector<8x96xf32> to vector<8x32xf32>
    %783 = arith.addf %781, %782 : vector<8x32xf32>
    %784 = arith.negf %783 : vector<8x32xf32>
    %785 = math.exp %784 : vector<8x32xf32>
    %cst_166 = arith.constant 1.000000e+00 : f32
    %786 = vector.broadcast %cst_166 : f32 to vector<8x32xf32>
    %787 = arith.addf %786, %785 : vector<8x32xf32>
    %788 = arith.divf %786, %787 : vector<8x32xf32>
    %789 = vector.extract_strided_slice %746 {offsets = [0, 64], sizes = [8, 32], strides = [1, 1]} : vector<8x96xf32> to vector<8x32xf32>
    %790 = vector.extract_strided_slice %744 {offsets = [0, 64], sizes = [8, 32], strides = [1, 1]} : vector<8x96xf32> to vector<8x32xf32>
    %791 = arith.mulf %780, %790 : vector<8x32xf32>
    %792 = arith.addf %789, %791 : vector<8x32xf32>
    %793 = math.tanh %792 : vector<8x32xf32>
    %cst_167 = arith.constant 1.000000e+00 : f32
    %794 = vector.broadcast %cst_167 : f32 to vector<8x32xf32>
    %795 = arith.subf %794, %788 : vector<8x32xf32>
    %796 = arith.mulf %795, %793 : vector<8x32xf32>
    %797 = arith.mulf %788, %734 : vector<8x32xf32>
    %798 = arith.addf %796, %797 : vector<8x32xf32>
    %c24_168 = arith.constant 24 : index
    %c0_169 = arith.constant 0 : index
    %799 = vector.load %arg17[%c24_168, %c0_169] : memref<64x64xf32, #tpu.memory_space<vmem>>, vector<8x32xf32>
    tpu.vector_store %arg17[%c24_168, %c0_169], %772 {strides = array<i32>} : memref<64x64xf32, #tpu.memory_space<vmem>>, vector<8x32xf32>,
    %c32_170 = arith.constant 32 : index
    %c32_171 = arith.constant 32 : index
    %800 = vector.load %arg17[%c32_170, %c32_171] : memref<64x64xf32, #tpu.memory_space<vmem>>, vector<8x32xf32>
    tpu.vector_store %arg17[%c32_170, %c32_171], %798 {strides = array<i32>} : memref<64x64xf32, #tpu.memory_space<vmem>>, vector<8x32xf32>,
    %801 = arith.truncf %772 : vector<8x32xf32> to vector<8x32xbf16>
    %cst_172 = arith.constant dense<0.000000e+00> : vector<8x96xf32>
    %802 = tpu.matmul %801, %539, %cst_172 {dimension_numbers = #tpu.dot_dimension_numbers<[1], [0], [0], [1], [0, 0, 1, 1], [], []>} : vector<8x32xbf16>, vector<32x96xbf16>, vector<8x96xf32> -> vector<8x96xf32>
    %803 = vector.broadcast %541 : vector<1x96xf32> to vector<8x96xf32>
    %804 = arith.addf %802, %803 : vector<8x96xf32>
    %805 = arith.truncf %798 : vector<8x32xf32> to vector<8x32xbf16>
    %cst_173 = arith.constant dense<0.000000e+00> : vector<8x96xf32>
    %806 = tpu.matmul %805, %540, %cst_173 {dimension_numbers = #tpu.dot_dimension_numbers<[1], [0], [0], [1], [0, 0, 1, 1], [], []>} : vector<8x32xbf16>, vector<32x96xbf16>, vector<8x96xf32> -> vector<8x96xf32>
    %807 = vector.broadcast %542 : vector<1x96xf32> to vector<8x96xf32>
    %808 = arith.addf %806, %807 : vector<8x96xf32>
    %809 = vector.extract_strided_slice %538 {offsets = [32, 0], sizes = [8, 96], strides = [1, 1]} : vector<64x192xf32> to vector<8x96xf32>
    %810 = vector.extract_strided_slice %538 {offsets = [24, 96], sizes = [8, 96], strides = [1, 1]} : vector<64x192xf32> to vector<8x96xf32>
    %811 = vector.extract_strided_slice %809 {offsets = [0, 0], sizes = [8, 32], strides = [1, 1]} : vector<8x96xf32> to vector<8x32xf32>
    %812 = vector.extract_strided_slice %804 {offsets = [0, 0], sizes = [8, 32], strides = [1, 1]} : vector<8x96xf32> to vector<8x32xf32>
    %813 = arith.addf %811, %812 : vector<8x32xf32>
    %814 = arith.negf %813 : vector<8x32xf32>
    %815 = math.exp %814 : vector<8x32xf32>
    %cst_174 = arith.constant 1.000000e+00 : f32
    %816 = vector.broadcast %cst_174 : f32 to vector<8x32xf32>
    %817 = arith.addf %816, %815 : vector<8x32xf32>
    %818 = arith.divf %816, %817 : vector<8x32xf32>
    %819 = vector.extract_strided_slice %809 {offsets = [0, 32], sizes = [8, 32], strides = [1, 1]} : vector<8x96xf32> to vector<8x32xf32>
    %820 = vector.extract_strided_slice %804 {offsets = [0, 32], sizes = [8, 32], strides = [1, 1]} : vector<8x96xf32> to vector<8x32xf32>
    %821 = arith.addf %819, %820 : vector<8x32xf32>
    %822 = arith.negf %821 : vector<8x32xf32>
    %823 = math.exp %822 : vector<8x32xf32>
    %cst_175 = arith.constant 1.000000e+00 : f32
    %824 = vector.broadcast %cst_175 : f32 to vector<8x32xf32>
    %825 = arith.addf %824, %823 : vector<8x32xf32>
    %826 = arith.divf %824, %825 : vector<8x32xf32>
    %827 = vector.extract_strided_slice %809 {offsets = [0, 64], sizes = [8, 32], strides = [1, 1]} : vector<8x96xf32> to vector<8x32xf32>
    %828 = vector.extract_strided_slice %804 {offsets = [0, 64], sizes = [8, 32], strides = [1, 1]} : vector<8x96xf32> to vector<8x32xf32>
    %829 = arith.mulf %818, %828 : vector<8x32xf32>
    %830 = arith.addf %827, %829 : vector<8x32xf32>
    %831 = math.tanh %830 : vector<8x32xf32>
    %cst_176 = arith.constant 1.000000e+00 : f32
    %832 = vector.broadcast %cst_176 : f32 to vector<8x32xf32>
    %833 = arith.subf %832, %826 : vector<8x32xf32>
    %834 = arith.mulf %833, %831 : vector<8x32xf32>
    %835 = arith.mulf %826, %772 : vector<8x32xf32>
    %836 = arith.addf %834, %835 : vector<8x32xf32>
    %837 = vector.extract_strided_slice %810 {offsets = [0, 0], sizes = [8, 32], strides = [1, 1]} : vector<8x96xf32> to vector<8x32xf32>
    %838 = vector.extract_strided_slice %808 {offsets = [0, 0], sizes = [8, 32], strides = [1, 1]} : vector<8x96xf32> to vector<8x32xf32>
    %839 = arith.addf %837, %838 : vector<8x32xf32>
    %840 = arith.negf %839 : vector<8x32xf32>
    %841 = math.exp %840 : vector<8x32xf32>
    %cst_177 = arith.constant 1.000000e+00 : f32
    %842 = vector.broadcast %cst_177 : f32 to vector<8x32xf32>
    %843 = arith.addf %842, %841 : vector<8x32xf32>
    %844 = arith.divf %842, %843 : vector<8x32xf32>
    %845 = vector.extract_strided_slice %810 {offsets = [0, 32], sizes = [8, 32], strides = [1, 1]} : vector<8x96xf32> to vector<8x32xf32>
    %846 = vector.extract_strided_slice %808 {offsets = [0, 32], sizes = [8, 32], strides = [1, 1]} : vector<8x96xf32> to vector<8x32xf32>
    %847 = arith.addf %845, %846 : vector<8x32xf32>
    %848 = arith.negf %847 : vector<8x32xf32>
    %849 = math.exp %848 : vector<8x32xf32>
    %cst_178 = arith.constant 1.000000e+00 : f32
    %850 = vector.broadcast %cst_178 : f32 to vector<8x32xf32>
    %851 = arith.addf %850, %849 : vector<8x32xf32>
    %852 = arith.divf %850, %851 : vector<8x32xf32>
    %853 = vector.extract_strided_slice %810 {offsets = [0, 64], sizes = [8, 32], strides = [1, 1]} : vector<8x96xf32> to vector<8x32xf32>
    %854 = vector.extract_strided_slice %808 {offsets = [0, 64], sizes = [8, 32], strides = [1, 1]} : vector<8x96xf32> to vector<8x32xf32>
    %855 = arith.mulf %844, %854 : vector<8x32xf32>
    %856 = arith.addf %853, %855 : vector<8x32xf32>
    %857 = math.tanh %856 : vector<8x32xf32>
    %cst_179 = arith.constant 1.000000e+00 : f32
    %858 = vector.broadcast %cst_179 : f32 to vector<8x32xf32>
    %859 = arith.subf %858, %852 : vector<8x32xf32>
    %860 = arith.mulf %859, %857 : vector<8x32xf32>
    %861 = arith.mulf %852, %798 : vector<8x32xf32>
    %862 = arith.addf %860, %861 : vector<8x32xf32>
    %c32_180 = arith.constant 32 : index
    %c0_181 = arith.constant 0 : index
    %863 = vector.load %arg17[%c32_180, %c0_181] : memref<64x64xf32, #tpu.memory_space<vmem>>, vector<8x32xf32>
    tpu.vector_store %arg17[%c32_180, %c0_181], %836 {strides = array<i32>} : memref<64x64xf32, #tpu.memory_space<vmem>>, vector<8x32xf32>,
    %c24_182 = arith.constant 24 : index
    %c32_183 = arith.constant 32 : index
    %864 = vector.load %arg17[%c24_182, %c32_183] : memref<64x64xf32, #tpu.memory_space<vmem>>, vector<8x32xf32>
    tpu.vector_store %arg17[%c24_182, %c32_183], %862 {strides = array<i32>} : memref<64x64xf32, #tpu.memory_space<vmem>>, vector<8x32xf32>,
    %865 = arith.truncf %836 : vector<8x32xf32> to vector<8x32xbf16>
    %cst_184 = arith.constant dense<0.000000e+00> : vector<8x96xf32>
    %866 = tpu.matmul %865, %539, %cst_184 {dimension_numbers = #tpu.dot_dimension_numbers<[1], [0], [0], [1], [0, 0, 1, 1], [], []>} : vector<8x32xbf16>, vector<32x96xbf16>, vector<8x96xf32> -> vector<8x96xf32>
    %867 = vector.broadcast %541 : vector<1x96xf32> to vector<8x96xf32>
    %868 = arith.addf %866, %867 : vector<8x96xf32>
    %869 = arith.truncf %862 : vector<8x32xf32> to vector<8x32xbf16>
    %cst_185 = arith.constant dense<0.000000e+00> : vector<8x96xf32>
    %870 = tpu.matmul %869, %540, %cst_185 {dimension_numbers = #tpu.dot_dimension_numbers<[1], [0], [0], [1], [0, 0, 1, 1], [], []>} : vector<8x32xbf16>, vector<32x96xbf16>, vector<8x96xf32> -> vector<8x96xf32>
    %871 = vector.broadcast %542 : vector<1x96xf32> to vector<8x96xf32>
    %872 = arith.addf %870, %871 : vector<8x96xf32>
    %873 = vector.extract_strided_slice %538 {offsets = [40, 0], sizes = [8, 96], strides = [1, 1]} : vector<64x192xf32> to vector<8x96xf32>
    %874 = vector.extract_strided_slice %538 {offsets = [16, 96], sizes = [8, 96], strides = [1, 1]} : vector<64x192xf32> to vector<8x96xf32>
    %875 = vector.extract_strided_slice %873 {offsets = [0, 0], sizes = [8, 32], strides = [1, 1]} : vector<8x96xf32> to vector<8x32xf32>
    %876 = vector.extract_strided_slice %868 {offsets = [0, 0], sizes = [8, 32], strides = [1, 1]} : vector<8x96xf32> to vector<8x32xf32>
    %877 = arith.addf %875, %876 : vector<8x32xf32>
    %878 = arith.negf %877 : vector<8x32xf32>
    %879 = math.exp %878 : vector<8x32xf32>
    %cst_186 = arith.constant 1.000000e+00 : f32
    %880 = vector.broadcast %cst_186 : f32 to vector<8x32xf32>
    %881 = arith.addf %880, %879 : vector<8x32xf32>
    %882 = arith.divf %880, %881 : vector<8x32xf32>
    %883 = vector.extract_strided_slice %873 {offsets = [0, 32], sizes = [8, 32], strides = [1, 1]} : vector<8x96xf32> to vector<8x32xf32>
    %884 = vector.extract_strided_slice %868 {offsets = [0, 32], sizes = [8, 32], strides = [1, 1]} : vector<8x96xf32> to vector<8x32xf32>
    %885 = arith.addf %883, %884 : vector<8x32xf32>
    %886 = arith.negf %885 : vector<8x32xf32>
    %887 = math.exp %886 : vector<8x32xf32>
    %cst_187 = arith.constant 1.000000e+00 : f32
    %888 = vector.broadcast %cst_187 : f32 to vector<8x32xf32>
    %889 = arith.addf %888, %887 : vector<8x32xf32>
    %890 = arith.divf %888, %889 : vector<8x32xf32>
    %891 = vector.extract_strided_slice %873 {offsets = [0, 64], sizes = [8, 32], strides = [1, 1]} : vector<8x96xf32> to vector<8x32xf32>
    %892 = vector.extract_strided_slice %868 {offsets = [0, 64], sizes = [8, 32], strides = [1, 1]} : vector<8x96xf32> to vector<8x32xf32>
    %893 = arith.mulf %882, %892 : vector<8x32xf32>
    %894 = arith.addf %891, %893 : vector<8x32xf32>
    %895 = math.tanh %894 : vector<8x32xf32>
    %cst_188 = arith.constant 1.000000e+00 : f32
    %896 = vector.broadcast %cst_188 : f32 to vector<8x32xf32>
    %897 = arith.subf %896, %890 : vector<8x32xf32>
    %898 = arith.mulf %897, %895 : vector<8x32xf32>
    %899 = arith.mulf %890, %836 : vector<8x32xf32>
    %900 = arith.addf %898, %899 : vector<8x32xf32>
    %901 = vector.extract_strided_slice %874 {offsets = [0, 0], sizes = [8, 32], strides = [1, 1]} : vector<8x96xf32> to vector<8x32xf32>
    %902 = vector.extract_strided_slice %872 {offsets = [0, 0], sizes = [8, 32], strides = [1, 1]} : vector<8x96xf32> to vector<8x32xf32>
    %903 = arith.addf %901, %902 : vector<8x32xf32>
    %904 = arith.negf %903 : vector<8x32xf32>
    %905 = math.exp %904 : vector<8x32xf32>
    %cst_189 = arith.constant 1.000000e+00 : f32
    %906 = vector.broadcast %cst_189 : f32 to vector<8x32xf32>
    %907 = arith.addf %906, %905 : vector<8x32xf32>
    %908 = arith.divf %906, %907 : vector<8x32xf32>
    %909 = vector.extract_strided_slice %874 {offsets = [0, 32], sizes = [8, 32], strides = [1, 1]} : vector<8x96xf32> to vector<8x32xf32>
    %910 = vector.extract_strided_slice %872 {offsets = [0, 32], sizes = [8, 32], strides = [1, 1]} : vector<8x96xf32> to vector<8x32xf32>
    %911 = arith.addf %909, %910 : vector<8x32xf32>
    %912 = arith.negf %911 : vector<8x32xf32>
    %913 = math.exp %912 : vector<8x32xf32>
    %cst_190 = arith.constant 1.000000e+00 : f32
    %914 = vector.broadcast %cst_190 : f32 to vector<8x32xf32>
    %915 = arith.addf %914, %913 : vector<8x32xf32>
    %916 = arith.divf %914, %915 : vector<8x32xf32>
    %917 = vector.extract_strided_slice %874 {offsets = [0, 64], sizes = [8, 32], strides = [1, 1]} : vector<8x96xf32> to vector<8x32xf32>
    %918 = vector.extract_strided_slice %872 {offsets = [0, 64], sizes = [8, 32], strides = [1, 1]} : vector<8x96xf32> to vector<8x32xf32>
    %919 = arith.mulf %908, %918 : vector<8x32xf32>
    %920 = arith.addf %917, %919 : vector<8x32xf32>
    %921 = math.tanh %920 : vector<8x32xf32>
    %cst_191 = arith.constant 1.000000e+00 : f32
    %922 = vector.broadcast %cst_191 : f32 to vector<8x32xf32>
    %923 = arith.subf %922, %916 : vector<8x32xf32>
    %924 = arith.mulf %923, %921 : vector<8x32xf32>
    %925 = arith.mulf %916, %862 : vector<8x32xf32>
    %926 = arith.addf %924, %925 : vector<8x32xf32>
    %c40_192 = arith.constant 40 : index
    %c0_193 = arith.constant 0 : index
    %927 = vector.load %arg17[%c40_192, %c0_193] : memref<64x64xf32, #tpu.memory_space<vmem>>, vector<8x32xf32>
    tpu.vector_store %arg17[%c40_192, %c0_193], %900 {strides = array<i32>} : memref<64x64xf32, #tpu.memory_space<vmem>>, vector<8x32xf32>,
    %c16_194 = arith.constant 16 : index
    %c32_195 = arith.constant 32 : index
    %928 = vector.load %arg17[%c16_194, %c32_195] : memref<64x64xf32, #tpu.memory_space<vmem>>, vector<8x32xf32>
    tpu.vector_store %arg17[%c16_194, %c32_195], %926 {strides = array<i32>} : memref<64x64xf32, #tpu.memory_space<vmem>>, vector<8x32xf32>,
    %929 = arith.truncf %900 : vector<8x32xf32> to vector<8x32xbf16>
    %cst_196 = arith.constant dense<0.000000e+00> : vector<8x96xf32>
    %930 = tpu.matmul %929, %539, %cst_196 {dimension_numbers = #tpu.dot_dimension_numbers<[1], [0], [0], [1], [0, 0, 1, 1], [], []>} : vector<8x32xbf16>, vector<32x96xbf16>, vector<8x96xf32> -> vector<8x96xf32>
    %931 = vector.broadcast %541 : vector<1x96xf32> to vector<8x96xf32>
    %932 = arith.addf %930, %931 : vector<8x96xf32>
    %933 = arith.truncf %926 : vector<8x32xf32> to vector<8x32xbf16>
    %cst_197 = arith.constant dense<0.000000e+00> : vector<8x96xf32>
    %934 = tpu.matmul %933, %540, %cst_197 {dimension_numbers = #tpu.dot_dimension_numbers<[1], [0], [0], [1], [0, 0, 1, 1], [], []>} : vector<8x32xbf16>, vector<32x96xbf16>, vector<8x96xf32> -> vector<8x96xf32>
    %935 = vector.broadcast %542 : vector<1x96xf32> to vector<8x96xf32>
    %936 = arith.addf %934, %935 : vector<8x96xf32>
    %937 = vector.extract_strided_slice %538 {offsets = [48, 0], sizes = [8, 96], strides = [1, 1]} : vector<64x192xf32> to vector<8x96xf32>
    %938 = vector.extract_strided_slice %538 {offsets = [8, 96], sizes = [8, 96], strides = [1, 1]} : vector<64x192xf32> to vector<8x96xf32>
    %939 = vector.extract_strided_slice %937 {offsets = [0, 0], sizes = [8, 32], strides = [1, 1]} : vector<8x96xf32> to vector<8x32xf32>
    %940 = vector.extract_strided_slice %932 {offsets = [0, 0], sizes = [8, 32], strides = [1, 1]} : vector<8x96xf32> to vector<8x32xf32>
    %941 = arith.addf %939, %940 : vector<8x32xf32>
    %942 = arith.negf %941 : vector<8x32xf32>
    %943 = math.exp %942 : vector<8x32xf32>
    %cst_198 = arith.constant 1.000000e+00 : f32
    %944 = vector.broadcast %cst_198 : f32 to vector<8x32xf32>
    %945 = arith.addf %944, %943 : vector<8x32xf32>
    %946 = arith.divf %944, %945 : vector<8x32xf32>
    %947 = vector.extract_strided_slice %937 {offsets = [0, 32], sizes = [8, 32], strides = [1, 1]} : vector<8x96xf32> to vector<8x32xf32>
    %948 = vector.extract_strided_slice %932 {offsets = [0, 32], sizes = [8, 32], strides = [1, 1]} : vector<8x96xf32> to vector<8x32xf32>
    %949 = arith.addf %947, %948 : vector<8x32xf32>
    %950 = arith.negf %949 : vector<8x32xf32>
    %951 = math.exp %950 : vector<8x32xf32>
    %cst_199 = arith.constant 1.000000e+00 : f32
    %952 = vector.broadcast %cst_199 : f32 to vector<8x32xf32>
    %953 = arith.addf %952, %951 : vector<8x32xf32>
    %954 = arith.divf %952, %953 : vector<8x32xf32>
    %955 = vector.extract_strided_slice %937 {offsets = [0, 64], sizes = [8, 32], strides = [1, 1]} : vector<8x96xf32> to vector<8x32xf32>
    %956 = vector.extract_strided_slice %932 {offsets = [0, 64], sizes = [8, 32], strides = [1, 1]} : vector<8x96xf32> to vector<8x32xf32>
    %957 = arith.mulf %946, %956 : vector<8x32xf32>
    %958 = arith.addf %955, %957 : vector<8x32xf32>
    %959 = math.tanh %958 : vector<8x32xf32>
    %cst_200 = arith.constant 1.000000e+00 : f32
    %960 = vector.broadcast %cst_200 : f32 to vector<8x32xf32>
    %961 = arith.subf %960, %954 : vector<8x32xf32>
    %962 = arith.mulf %961, %959 : vector<8x32xf32>
    %963 = arith.mulf %954, %900 : vector<8x32xf32>
    %964 = arith.addf %962, %963 : vector<8x32xf32>
    %965 = vector.extract_strided_slice %938 {offsets = [0, 0], sizes = [8, 32], strides = [1, 1]} : vector<8x96xf32> to vector<8x32xf32>
    %966 = vector.extract_strided_slice %936 {offsets = [0, 0], sizes = [8, 32], strides = [1, 1]} : vector<8x96xf32> to vector<8x32xf32>
    %967 = arith.addf %965, %966 : vector<8x32xf32>
    %968 = arith.negf %967 : vector<8x32xf32>
    %969 = math.exp %968 : vector<8x32xf32>
    %cst_201 = arith.constant 1.000000e+00 : f32
    %970 = vector.broadcast %cst_201 : f32 to vector<8x32xf32>
    %971 = arith.addf %970, %969 : vector<8x32xf32>
    %972 = arith.divf %970, %971 : vector<8x32xf32>
    %973 = vector.extract_strided_slice %938 {offsets = [0, 32], sizes = [8, 32], strides = [1, 1]} : vector<8x96xf32> to vector<8x32xf32>
    %974 = vector.extract_strided_slice %936 {offsets = [0, 32], sizes = [8, 32], strides = [1, 1]} : vector<8x96xf32> to vector<8x32xf32>
    %975 = arith.addf %973, %974 : vector<8x32xf32>
    %976 = arith.negf %975 : vector<8x32xf32>
    %977 = math.exp %976 : vector<8x32xf32>
    %cst_202 = arith.constant 1.000000e+00 : f32
    %978 = vector.broadcast %cst_202 : f32 to vector<8x32xf32>
    %979 = arith.addf %978, %977 : vector<8x32xf32>
    %980 = arith.divf %978, %979 : vector<8x32xf32>
    %981 = vector.extract_strided_slice %938 {offsets = [0, 64], sizes = [8, 32], strides = [1, 1]} : vector<8x96xf32> to vector<8x32xf32>
    %982 = vector.extract_strided_slice %936 {offsets = [0, 64], sizes = [8, 32], strides = [1, 1]} : vector<8x96xf32> to vector<8x32xf32>
    %983 = arith.mulf %972, %982 : vector<8x32xf32>
    %984 = arith.addf %981, %983 : vector<8x32xf32>
    %985 = math.tanh %984 : vector<8x32xf32>
    %cst_203 = arith.constant 1.000000e+00 : f32
    %986 = vector.broadcast %cst_203 : f32 to vector<8x32xf32>
    %987 = arith.subf %986, %980 : vector<8x32xf32>
    %988 = arith.mulf %987, %985 : vector<8x32xf32>
    %989 = arith.mulf %980, %926 : vector<8x32xf32>
    %990 = arith.addf %988, %989 : vector<8x32xf32>
    %c48_204 = arith.constant 48 : index
    %c0_205 = arith.constant 0 : index
    %991 = vector.load %arg17[%c48_204, %c0_205] : memref<64x64xf32, #tpu.memory_space<vmem>>, vector<8x32xf32>
    tpu.vector_store %arg17[%c48_204, %c0_205], %964 {strides = array<i32>} : memref<64x64xf32, #tpu.memory_space<vmem>>, vector<8x32xf32>,
    %c8_206 = arith.constant 8 : index
    %c32_207 = arith.constant 32 : index
    %992 = vector.load %arg17[%c8_206, %c32_207] : memref<64x64xf32, #tpu.memory_space<vmem>>, vector<8x32xf32>
    tpu.vector_store %arg17[%c8_206, %c32_207], %990 {strides = array<i32>} : memref<64x64xf32, #tpu.memory_space<vmem>>, vector<8x32xf32>,
    %993 = arith.truncf %964 : vector<8x32xf32> to vector<8x32xbf16>
    %cst_208 = arith.constant dense<0.000000e+00> : vector<8x96xf32>
    %994 = tpu.matmul %993, %539, %cst_208 {dimension_numbers = #tpu.dot_dimension_numbers<[1], [0], [0], [1], [0, 0, 1, 1], [], []>} : vector<8x32xbf16>, vector<32x96xbf16>, vector<8x96xf32> -> vector<8x96xf32>
    %995 = vector.broadcast %541 : vector<1x96xf32> to vector<8x96xf32>
    %996 = arith.addf %994, %995 : vector<8x96xf32>
    %997 = arith.truncf %990 : vector<8x32xf32> to vector<8x32xbf16>
    %cst_209 = arith.constant dense<0.000000e+00> : vector<8x96xf32>
    %998 = tpu.matmul %997, %540, %cst_209 {dimension_numbers = #tpu.dot_dimension_numbers<[1], [0], [0], [1], [0, 0, 1, 1], [], []>} : vector<8x32xbf16>, vector<32x96xbf16>, vector<8x96xf32> -> vector<8x96xf32>
    %999 = vector.broadcast %542 : vector<1x96xf32> to vector<8x96xf32>
    %1000 = arith.addf %998, %999 : vector<8x96xf32>
    %1001 = vector.extract_strided_slice %538 {offsets = [56, 0], sizes = [8, 96], strides = [1, 1]} : vector<64x192xf32> to vector<8x96xf32>
    %1002 = vector.extract_strided_slice %538 {offsets = [0, 96], sizes = [8, 96], strides = [1, 1]} : vector<64x192xf32> to vector<8x96xf32>
    %1003 = vector.extract_strided_slice %1001 {offsets = [0, 0], sizes = [8, 32], strides = [1, 1]} : vector<8x96xf32> to vector<8x32xf32>
    %1004 = vector.extract_strided_slice %996 {offsets = [0, 0], sizes = [8, 32], strides = [1, 1]} : vector<8x96xf32> to vector<8x32xf32>
    %1005 = arith.addf %1003, %1004 : vector<8x32xf32>
    %1006 = arith.negf %1005 : vector<8x32xf32>
    %1007 = math.exp %1006 : vector<8x32xf32>
    %cst_210 = arith.constant 1.000000e+00 : f32
    %1008 = vector.broadcast %cst_210 : f32 to vector<8x32xf32>
    %1009 = arith.addf %1008, %1007 : vector<8x32xf32>
    %1010 = arith.divf %1008, %1009 : vector<8x32xf32>
    %1011 = vector.extract_strided_slice %1001 {offsets = [0, 32], sizes = [8, 32], strides = [1, 1]} : vector<8x96xf32> to vector<8x32xf32>
    %1012 = vector.extract_strided_slice %996 {offsets = [0, 32], sizes = [8, 32], strides = [1, 1]} : vector<8x96xf32> to vector<8x32xf32>
    %1013 = arith.addf %1011, %1012 : vector<8x32xf32>
    %1014 = arith.negf %1013 : vector<8x32xf32>
    %1015 = math.exp %1014 : vector<8x32xf32>
    %cst_211 = arith.constant 1.000000e+00 : f32
    %1016 = vector.broadcast %cst_211 : f32 to vector<8x32xf32>
    %1017 = arith.addf %1016, %1015 : vector<8x32xf32>
    %1018 = arith.divf %1016, %1017 : vector<8x32xf32>
    %1019 = vector.extract_strided_slice %1001 {offsets = [0, 64], sizes = [8, 32], strides = [1, 1]} : vector<8x96xf32> to vector<8x32xf32>
    %1020 = vector.extract_strided_slice %996 {offsets = [0, 64], sizes = [8, 32], strides = [1, 1]} : vector<8x96xf32> to vector<8x32xf32>
    %1021 = arith.mulf %1010, %1020 : vector<8x32xf32>
    %1022 = arith.addf %1019, %1021 : vector<8x32xf32>
    %1023 = math.tanh %1022 : vector<8x32xf32>
    %cst_212 = arith.constant 1.000000e+00 : f32
    %1024 = vector.broadcast %cst_212 : f32 to vector<8x32xf32>
    %1025 = arith.subf %1024, %1018 : vector<8x32xf32>
    %1026 = arith.mulf %1025, %1023 : vector<8x32xf32>
    %1027 = arith.mulf %1018, %964 : vector<8x32xf32>
    %1028 = arith.addf %1026, %1027 : vector<8x32xf32>
    %1029 = vector.extract_strided_slice %1002 {offsets = [0, 0], sizes = [8, 32], strides = [1, 1]} : vector<8x96xf32> to vector<8x32xf32>
    %1030 = vector.extract_strided_slice %1000 {offsets = [0, 0], sizes = [8, 32], strides = [1, 1]} : vector<8x96xf32> to vector<8x32xf32>
    %1031 = arith.addf %1029, %1030 : vector<8x32xf32>
    %1032 = arith.negf %1031 : vector<8x32xf32>
    %1033 = math.exp %1032 : vector<8x32xf32>
    %cst_213 = arith.constant 1.000000e+00 : f32
    %1034 = vector.broadcast %cst_213 : f32 to vector<8x32xf32>
    %1035 = arith.addf %1034, %1033 : vector<8x32xf32>
    %1036 = arith.divf %1034, %1035 : vector<8x32xf32>
    %1037 = vector.extract_strided_slice %1002 {offsets = [0, 32], sizes = [8, 32], strides = [1, 1]} : vector<8x96xf32> to vector<8x32xf32>
    %1038 = vector.extract_strided_slice %1000 {offsets = [0, 32], sizes = [8, 32], strides = [1, 1]} : vector<8x96xf32> to vector<8x32xf32>
    %1039 = arith.addf %1037, %1038 : vector<8x32xf32>
    %1040 = arith.negf %1039 : vector<8x32xf32>
    %1041 = math.exp %1040 : vector<8x32xf32>
    %cst_214 = arith.constant 1.000000e+00 : f32
    %1042 = vector.broadcast %cst_214 : f32 to vector<8x32xf32>
    %1043 = arith.addf %1042, %1041 : vector<8x32xf32>
    %1044 = arith.divf %1042, %1043 : vector<8x32xf32>
    %1045 = vector.extract_strided_slice %1002 {offsets = [0, 64], sizes = [8, 32], strides = [1, 1]} : vector<8x96xf32> to vector<8x32xf32>
    %1046 = vector.extract_strided_slice %1000 {offsets = [0, 64], sizes = [8, 32], strides = [1, 1]} : vector<8x96xf32> to vector<8x32xf32>
    %1047 = arith.mulf %1036, %1046 : vector<8x32xf32>
    %1048 = arith.addf %1045, %1047 : vector<8x32xf32>
    %1049 = math.tanh %1048 : vector<8x32xf32>
    %cst_215 = arith.constant 1.000000e+00 : f32
    %1050 = vector.broadcast %cst_215 : f32 to vector<8x32xf32>
    %1051 = arith.subf %1050, %1044 : vector<8x32xf32>
    %1052 = arith.mulf %1051, %1049 : vector<8x32xf32>
    %1053 = arith.mulf %1044, %990 : vector<8x32xf32>
    %1054 = arith.addf %1052, %1053 : vector<8x32xf32>
    %c56_216 = arith.constant 56 : index
    %c0_217 = arith.constant 0 : index
    %1055 = vector.load %arg17[%c56_216, %c0_217] : memref<64x64xf32, #tpu.memory_space<vmem>>, vector<8x32xf32>
    tpu.vector_store %arg17[%c56_216, %c0_217], %1028 {strides = array<i32>} : memref<64x64xf32, #tpu.memory_space<vmem>>, vector<8x32xf32>,
    %c0_218 = arith.constant 0 : index
    %c32_219 = arith.constant 32 : index
    %1056 = vector.load %arg17[%c0_218, %c32_219] : memref<64x64xf32, #tpu.memory_space<vmem>>, vector<8x32xf32>
    tpu.vector_store %arg17[%c0_218, %c32_219], %1054 {strides = array<i32>} : memref<64x64xf32, #tpu.memory_space<vmem>>, vector<8x32xf32>,
    %c0_220 = arith.constant 0 : index
    %c0_221 = arith.constant 0 : index
    %1057 = vector.load %arg17[%c0_220, %c0_221] : memref<64x64xf32, #tpu.memory_space<vmem>>, vector<64x64xf32>
    %1058 = arith.truncf %1057 : vector<64x64xf32> to vector<64x64xbf16>
    %c0_222 = arith.constant 0 : index
    %c0_223 = arith.constant 0 : index
    %1059 = vector.load %arg14[%c0_222, %c0_223] : memref<64x128xbf16, #tpu.memory_space<vmem>>, vector<64x128xbf16>
    %cst_224 = arith.constant dense<0.000000e+00> : vector<64x128xf32>
    %1060 = tpu.matmul %1058, %1059, %cst_224 {dimension_numbers = #tpu.dot_dimension_numbers<[1], [0], [0], [1], [0, 0, 1, 1], [], []>} : vector<64x64xbf16>, vector<64x128xbf16>, vector<64x128xf32> -> vector<64x128xf32>
    %c0_225 = arith.constant 0 : index
    %c0_226 = arith.constant 0 : index
    %1061 = vector.load %arg15[%c0_225, %c0_226] : memref<1x128xf32, #tpu.memory_space<vmem>>, vector<1x128xf32>
    %1062 = vector.broadcast %1061 : vector<1x128xf32> to vector<64x128xf32>
    %1063 = arith.addf %1060, %1062 : vector<64x128xf32>
    %c0_227 = arith.constant 0 : index
    %c0_228 = arith.constant 0 : index
    %1064 = vector.load %arg16[%c0_227, %c0_228] : memref<64x128xf32, #tpu.memory_space<vmem>>, vector<64x128xf32>
    tpu.vector_store %arg16[%c0_227, %c0_228], %1063 {strides = array<i32>} : memref<64x128xf32, #tpu.memory_space<vmem>>, vector<64x128xf32>,
    return
  }
}

</mosaic_0001>

<llo_original>
// kernel: bigru_forward.1
$region0: #{bigru_forward.1}
  #allocation0 [shape = 'u32[]', space=smem, size = 0x4, offset = 0x4, fixed_abs, tag = 'smem constant byte address 0x4 - core index']
  #allocation1 [shape = 'u32[144,128]{1,0:T(1,128)}', space=vmem, size = 0x12000, scoped, tag = 'internal scratch']
  #allocation2 [shape = 'f32[64,64]{1,0:T(8,128)}', space=vmem, size = 0x8000, scoped, tag = 'scratch operand']
  %s0 = inlined_call_operand.vmem [shape: s32[64,1], index: 0, kind: input, shape index: {}]
  %s1 = inlined_call_operand.vmem [shape: f32[128,32], index: 1, kind: input, shape index: {}]
  %s2 = inlined_call_operand.vmem [shape: bf16[32,192], index: 2, kind: input, shape index: {}]
  %s3 = inlined_call_operand.vmem [shape: bf16[32,96], index: 3, kind: input, shape index: {}]
  %s4 = inlined_call_operand.vmem [shape: bf16[32,96], index: 4, kind: input, shape index: {}]
  %s5 = inlined_call_operand.vmem [shape: f32[1,192], index: 5, kind: input, shape index: {}]
  %s6 = inlined_call_operand.vmem [shape: f32[1,96], index: 6, kind: input, shape index: {}]
  %s7 = inlined_call_operand.vmem [shape: f32[1,96], index: 7, kind: input, shape index: {}]
  %s8 = inlined_call_operand.vmem [shape: bf16[64,192], index: 8, kind: input, shape index: {}]
  %s9 = inlined_call_operand.vmem [shape: bf16[32,96], index: 9, kind: input, shape index: {}]
  %s10 = inlined_call_operand.vmem [shape: bf16[32,96], index: 10, kind: input, shape index: {}]
  %s11 = inlined_call_operand.vmem [shape: f32[1,192], index: 11, kind: input, shape index: {}]
  %s12 = inlined_call_operand.vmem [shape: f32[1,96], index: 12, kind: input, shape index: {}]
  %s13 = inlined_call_operand.vmem [shape: f32[1,96], index: 13, kind: input, shape index: {}]
  %s14 = inlined_call_operand.vmem [shape: bf16[64,128], index: 14, kind: input, shape index: {}]
  %s15 = inlined_call_operand.vmem [shape: f32[1,128], index: 15, kind: input, shape index: {}]
  %s16 = inlined_call_operand.vmem [shape: f32[64,128], index: 16, kind: output, shape index: {}]
  %s17 = sld [smem:[#allocation0]]
  $region74: #{bigru_forward.1} parent=0
    _
  %s19 = ssub.s32 1, %s17
  %s20 = scalar_select 0, %s19, %s17
  // Predicated region
  $region2: #{bigru_forward.1} parent=0 // pred_check
    _
  $region3: #{bigru_forward.1} parent=0 // pred_check_branch
    %22 = sbr.rel (0) target = $region5
  $region4: #{bigru_forward.1} parent=0 // pred_region
    _
  $region5: #{bigru_forward.1} parent=0 // pred_fallthru
    _
  // Predicated region
  $region6: #{bigru_forward.1} parent=0 // pred_check
    _
  $region7: #{bigru_forward.1} parent=0 // pred_check_branch
    %24 = sbr.rel (0) target = $region9
  $region8: #{bigru_forward.1} parent=0 // pred_region
    _
  $region9: #{bigru_forward.1} parent=0 // pred_fallthru
    _
  // Predicated region
  $region10: #{bigru_forward.1} parent=0 // pred_check
    _
  $region11: #{bigru_forward.1} parent=0 // pred_check_branch
    %26 = sbr.rel (0) target = $region13
  $region12: #{bigru_forward.1} parent=0 // pred_region
    _
  $region13: #{bigru_forward.1} parent=0 // pred_fallthru
    _
  // Predicated region
  $region14: #{bigru_forward.1} parent=0 // pred_check
    _
  $region15: #{bigru_forward.1} parent=0 // pred_check_branch
    %28 = sbr.rel (0) target = $region17
  $region16: #{bigru_forward.1} parent=0 // pred_region
    _
  $region17: #{bigru_forward.1} parent=0 // pred_fallthru
    _
  // Predicated region
  $region18: #{bigru_forward.1} parent=0 // pred_check
    _
  $region19: #{bigru_forward.1} parent=0 // pred_check_branch
    %30 = sbr.rel (0) target = $region21
  $region20: #{bigru_forward.1} parent=0 // pred_region
    _
  $region21: #{bigru_forward.1} parent=0 // pred_fallthru
    _
  // Predicated region
  $region22: #{bigru_forward.1} parent=0 // pred_check
    _
  $region23: #{bigru_forward.1} parent=0 // pred_check_branch
    %32 = sbr.rel (0) target = $region25
  $region24: #{bigru_forward.1} parent=0 // pred_region
    _
  $region25: #{bigru_forward.1} parent=0 // pred_fallthru
    _
  // Predicated region
  $region26: #{bigru_forward.1} parent=0 // pred_check
    _
  $region27: #{bigru_forward.1} parent=0 // pred_check_branch
    %34 = sbr.rel (0) target = $region29
  $region28: #{bigru_forward.1} parent=0 // pred_region
    _
  $region29: #{bigru_forward.1} parent=0 // pred_fallthru
    _
  // Predicated region
  $region30: #{bigru_forward.1} parent=0 // pred_check
    _
  $region31: #{bigru_forward.1} parent=0 // pred_check_branch
    %36 = sbr.rel (0) target = $region33
  $region32: #{bigru_forward.1} parent=0 // pred_region
    _
  $region33: #{bigru_forward.1} parent=0 // pred_fallthru
    _
  // Predicated region
  $region34: #{bigru_forward.1} parent=0 // pred_check
    _
  $region35: #{bigru_forward.1} parent=0 // pred_check_branch
    %38 = sbr.rel (0) target = $region37
  $region36: #{bigru_forward.1} parent=0 // pred_region
    _
  $region37: #{bigru_forward.1} parent=0 // pred_fallthru
    _
  // Predicated region
  $region38: #{bigru_forward.1} parent=0 // pred_check
    _
  $region39: #{bigru_forward.1} parent=0 // pred_check_branch
    %40 = sbr.rel (0) target = $region41
  $region40: #{bigru_forward.1} parent=0 // pred_region
    _
  $region41: #{bigru_forward.1} parent=0 // pred_fallthru
    _
  // Predicated region
  $region42: #{bigru_forward.1} parent=0 // pred_check
    _
  $region43: #{bigru_forward.1} parent=0 // pred_check_branch
    %42 = sbr.rel (0) target = $region45
  $region44: #{bigru_forward.1} parent=0 // pred_region
    _
  $region45: #{bigru_forward.1} parent=0 // pred_fallthru
    _
  // Predicated region
  $region46: #{bigru_forward.1} parent=0 // pred_check
    _
  $region47: #{bigru_forward.1} parent=0 // pred_check_branch
    %44 = sbr.rel (0) target = $region49
  $region48: #{bigru_forward.1} parent=0 // pred_region
    _
  $region49: #{bigru_forward.1} parent=0 // pred_fallthru
    _
  // Predicated region
  $region50: #{bigru_forward.1} parent=0 // pred_check
    _
  $region51: #{bigru_forward.1} parent=0 // pred_check_branch
    %46 = sbr.rel (0) target = $region53
  $region52: #{bigru_forward.1} parent=0 // pred_region
    _
  $region53: #{bigru_forward.1} parent=0 // pred_fallthru
    _
  // Predicated region
  $region54: #{bigru_forward.1} parent=0 // pred_check
    _
  $region55: #{bigru_forward.1} parent=0 // pred_check_branch
    %48 = sbr.rel (0) target = $region57
  $region56: #{bigru_forward.1} parent=0 // pred_region
    _
  $region57: #{bigru_forward.1} parent=0 // pred_fallthru
    _
  // Predicated region
  $region58: #{bigru_forward.1} parent=0 // pred_check
    _
  $region59: #{bigru_forward.1} parent=0 // pred_check_branch
    %50 = sbr.rel (0) target = $region61
  $region60: #{bigru_forward.1} parent=0 // pred_region
    _
  $region61: #{bigru_forward.1} parent=0 // pred_fallthru
    _
  // Predicated region
  $region62: #{bigru_forward.1} parent=0 // pred_check
    _
  $region63: #{bigru_forward.1} parent=0 // pred_check_branch
    %52 = sbr.rel (0) target = $region65
  $region64: #{bigru_forward.1} parent=0 // pred_region
    _
  $region65: #{bigru_forward.1} parent=0 // pred_fallthru
    _
  %v54 = vld [vmem:[%s0] sm:$0xff]
  %v55 = vld [vmem:[%s0 + $0x8] sm:$0xff]
  %v56 = vld [vmem:[%s0 + $0x10] sm:$0xff]
  %v57 = vld [vmem:[%s0 + $0x18] sm:$0xff]
  %v58 = vld [vmem:[%s0 + $0x20] sm:$0xff]
  %v59 = vld [vmem:[%s0 + $0x28] sm:$0xff]
  %v60 = vld [vmem:[%s0 + $0x30] sm:$0xff]
  %v61 = vld [vmem:[%s0 + $0x38] sm:$0xff]
  %v62 = vlaneseq
  %v63 = vand.u32 %v62, 127
  %64 = vset.pattern.permute.xlu0 0
  %65 = vperm.xlu0 %64, %v54
  %v66 = vpop.permute.xlu0 %65
  %67 = vset.pattern.permute.xlu0 0
  %68 = vperm.xlu0 %67, %v55
  %v69 = vpop.permute.xlu0 %68
  %70 = vset.pattern.permute.xlu0 0
  %71 = vperm.xlu0 %70, %v56
  %v72 = vpop.permute.xlu0 %71
  %73 = vset.pattern.permute.xlu0 0
  %74 = vperm.xlu0 %73, %v57
  %v75 = vpop.permute.xlu0 %74
  %76 = vset.pattern.permute.xlu0 0
  %77 = vperm.xlu0 %76, %v58
  %v78 = vpop.permute.xlu0 %77
  %79 = vset.pattern.permute.xlu0 0
  %80 = vperm.xlu0 %79, %v59
  %v81 = vpop.permute.xlu0 %80
  %82 = vset.pattern.permute.xlu0 0
  %83 = vperm.xlu0 %82, %v60
  %v84 = vpop.permute.xlu0 %83
  %85 = vset.pattern.permute.xlu0 0
  %86 = vperm.xlu0 %85, %v61
  %v87 = vpop.permute.xlu0 %86
  %vm88 = vcmp.eq.s32.totalorder %v63, %v66
  %vm89 = vcmp.eq.s32.totalorder %v63, %v69
  %vm90 = vcmp.eq.s32.totalorder %v63, %v72
  %vm91 = vcmp.eq.s32.totalorder %v63, %v75
  %vm92 = vcmp.eq.s32.totalorder %v63, %v78
  %vm93 = vcmp.eq.s32.totalorder %v63, %v81
  %vm94 = vcmp.eq.s32.totalorder %v63, %v84
  %vm95 = vcmp.eq.s32.totalorder %v63, %v87
  %v96 = vsel %vm88, 1, 0
  %v97 = vsel %vm89, 1, 0
  %v98 = vsel %vm90, 1, 0
  %v99 = vsel %vm91, 1, 0
  %v100 = vsel %vm92, 1, 0
  %v101 = vsel %vm93, 1, 0
  %v102 = vsel %vm94, 1, 0
  %v103 = vsel %vm95, 1, 0
  %v104 = vcvt.s32.f32 %v96
  %v105 = vcvt.s32.f32 %v97
  %v106 = vcvt.s32.f32 %v98
  %v107 = vcvt.s32.f32 %v99
  %v108 = vcvt.s32.f32 %v100
  %v109 = vcvt.s32.f32 %v101
  %v110 = vcvt.s32.f32 %v102
  %v111 = vcvt.s32.f32 %v103
  %v112 = vld [vmem:[%s1] sm:$0xff]
  %v113 = vld [vmem:[%s1 + $0x8] sm:$0xff]
  %v114 = vld [vmem:[%s1 + $0x10] sm:$0xff]
  %v115 = vld [vmem:[%s1 + $0x18] sm:$0xff]
  %v116 = vld [vmem:[%s1 + $0x20] sm:$0xff]
  %v117 = vld [vmem:[%s1 + $0x28] sm:$0xff]
  %v118 = vld [vmem:[%s1 + $0x30] sm:$0xff]
  %v119 = vld [vmem:[%s1 + $0x38] sm:$0xff]
  %v120 = vld [vmem:[%s1 + $0x40] sm:$0xff]
  %v121 = vld [vmem:[%s1 + $0x48] sm:$0xff]
  %v122 = vld [vmem:[%s1 + $0x50] sm:$0xff]
  %v123 = vld [vmem:[%s1 + $0x58] sm:$0xff]
  %v124 = vld [vmem:[%s1 + $0x60] sm:$0xff]
  %v125 = vld [vmem:[%s1 + $0x68] sm:$0xff]
  %v126 = vld [vmem:[%s1 + $0x70] sm:$0xff]
  %v127 = vld [vmem:[%s1 + $0x78] sm:$0xff]
  %128 = vmatprep.subr.mxu0 0.0
  %129 = vmatpush1.msra.mxu0 %v127
  %130 = vmatprep.subr.mxu0 0.0
  %131 = vmatpush1.msra.mxu0 %v126
  %132 = vmatprep.subr.mxu0 0.0
  %133 = vmatpush1.msra.mxu0 %v125
  %134 = vmatprep.subr.mxu0 0.0
  %135 = vmatpush1.msra.mxu0 %v124
  %136 = vmatprep.subr.mxu0 0.0
  %137 = vmatpush1.msra.mxu0 %v123
  %138 = vmatprep.subr.mxu0 0.0
  %139 = vmatpush1.msra.mxu0 %v122
  %140 = vmatprep.subr.mxu0 0.0
  %141 = vmatpush1.msra.mxu0 %v121
  %142 = vmatprep.subr.mxu0 0.0
  %143 = vmatpush1.msra.mxu0 %v120
  %144 = vmatprep.subr.mxu0 0.0
  %145 = vmatpush1.msra.mxu0 %v119
  %146 = vmatprep.subr.mxu0 0.0
  %147 = vmatpush1.msra.mxu0 %v118
  %148 = vmatprep.subr.mxu0 0.0
  %149 = vmatpush1.msra.mxu0 %v117
  %150 = vmatprep.subr.mxu0 0.0
  %151 = vmatpush1.msra.mxu0 %v116
  %152 = vmatprep.subr.mxu0 0.0
  %153 = vmatpush1.msra.mxu0 %v115
  %154 = vmatprep.subr.mxu0 0.0
  %155 = vmatpush1.msra.mxu0 %v114
  %156 = vmatprep.subr.mxu0 0.0
  %157 = vmatpush1.msra.mxu0 %v113
  %158 = vmatprep.subr.mxu0 0.0
  %159 = vmatpush1.msra.mxu0 %v112
  %160 = vmatprep.subr.mxu0 0.0
  %161 = vmatpush2.msra.mxu0 0.0
  %162 = vmatprep.subr.mxu0 0.0
  %163 = vmatpush2.msra.mxu0 0.0
  %164 = vmatprep.subr.mxu0 0.0
  %165 = vmatpush2.msra.mxu0 0.0
  %166 = vmatprep.subr.mxu0 0.0
  %167 = vmatpush2.msra.mxu0 0.0
  %168 = vmatprep.subr.mxu0 0.0
  %169 = vmatpush2.msra.mxu0 0.0
  %170 = vmatprep.subr.mxu0 0.0
  %171 = vmatpush2.msra.mxu0 0.0
  %172 = vmatprep.subr.mxu0 0.0
  %173 = vmatpush2.msra.mxu0 0.0
  %174 = vmatprep.subr.mxu0 0.0
  %175 = vmatpush2.msra.mxu0 0.0
  %176 = vmatprep.subr.mxu0 0.0
  %177 = vmatpush2.msra.mxu0 0.0
  %178 = vmatprep.subr.mxu0 0.0
  %179 = vmatpush2.msra.mxu0 0.0
  %180 = vmatprep.subr.mxu0 0.0
  %181 = vmatpush2.msra.mxu0 0.0
  %182 = vmatprep.subr.mxu0 0.0
  %183 = vmatpush2.msra.mxu0 0.0
  %184 = vmatprep.subr.mxu0 0.0
  %185 = vmatpush2.msra.mxu0 0.0
  %186 = vmatprep.subr.mxu0 0.0
  %187 = vmatpush2.msra.mxu0 0.0
  %188 = vmatprep.subr.mxu0 0.0
  %189 = vmatpush2.msra.mxu0 0.0
  %190 = vmatprep.subr.mxu0 0.0
  %191 = vmatpush2.msra.mxu0 0.0
  %192 = vmatprep.mubr.f32.mxu0 0.0
  %193 = vmatmul.mubr.f32.gmra.mxu0 %v104
  %v194 = vpop.f32.mrf.mxu0
  %v195 = vadd.f32 0.0, %v194
  %v196 = vpop.f32.mrf.mxu0
  %197 = vmatprep.mubr.f32.mxu0 0.0
  %198 = vmatmul.mubr.f32.gmra.mxu0 %v105
  %v199 = vpop.f32.mrf.mxu0
  %v200 = vadd.f32 0.0, %v199
  %v201 = vpop.f32.mrf.mxu0
  %202 = vmatprep.mubr.f32.mxu0 0.0
  %203 = vmatmul.mubr.f32.gmra.mxu0 %v106
  %v204 = vpop.f32.mrf.mxu0
  %v205 = vadd.f32 0.0, %v204
  %v206 = vpop.f32.mrf.mxu0
  %207 = vmatprep.mubr.f32.mxu0 0.0
  %208 = vmatmul.mubr.f32.gmra.mxu0 %v107
  %v209 = vpop.f32.mrf.mxu0
  %v210 = vadd.f32 0.0, %v209
  %v211 = vpop.f32.mrf.mxu0
  %212 = vmatprep.mubr.f32.mxu0 0.0
  %213 = vmatmul.mubr.f32.gmra.mxu0 %v108
  %v214 = vpop.f32.mrf.mxu0
  %v215 = vadd.f32 0.0, %v214
  %v216 = vpop.f32.mrf.mxu0
  %217 = vmatprep.mubr.f32.mxu0 0.0
  %218 = vmatmul.mubr.f32.gmra.mxu0 %v109
  %v219 = vpop.f32.mrf.mxu0
  %v220 = vadd.f32 0.0, %v219
  %v221 = vpop.f32.mrf.mxu0
  %222 = vmatprep.mubr.f32.mxu0 0.0
  %223 = vmatmul.mubr.f32.gmra.mxu0 %v110
  %v224 = vpop.f32.mrf.mxu0
  %v225 = vadd.f32 0.0, %v224
  %v226 = vpop.f32.mrf.mxu0
  %227 = vmatprep.mubr.f32.mxu0 0.0
  %228 = vmatmul.mubr.f32.gmra.mxu0 %v111
  %v229 = vpop.f32.mrf.mxu0
  %v230 = vadd.f32 0.0, %v229
  %v231 = vpop.f32.mrf.mxu0
  %232 = vdwg.mxu0
  %v233 = vpack.c.bf16 %v200, %v195
  %v234 = vpack.c.bf16 %v210, %v205
  %v235 = vpack.c.bf16 %v220, %v215
  %v236 = vpack.c.bf16 %v230, %v225
  %v237 = vld [vmem:[%s2] sm:$0xff]
  %v238 = vld [vmem:[%s2 + $0x8] sm:$0xff]
  %v239 = vld [vmem:[%s2 + $0x10] sm:$0xff]
  %v240 = vld [vmem:[%s2 + $0x18] sm:$0xff]
  %v241 = vld [vmem:[%s5] sm:$0x3]
  %v243 = vlaneseq
  %v244 = vshrl.u32 %v243, 7
  %v245 = vsub.s32 0, %v244
  %v246 = vrot.slane %v241, %v245
  %v247 = vlaneseq
  %v248 = vshrl.u32 %v247, 7
  %v249 = vsub.s32 1, %v248
  %v250 = vrot.slane %v241, %v249
  %v257 = vunpack.c.l.b16 %v237
  %v258 = vunpack.c.h.b16 %v237
  %v259 = vunpack.c.l.b16 %v238
  %v260 = vunpack.c.h.b16 %v238
  %v261 = vunpack.c.l.b16 %v239
  %v262 = vunpack.c.h.b16 %v239
  %v263 = vunpack.c.l.b16 %v240
  %v264 = vunpack.c.h.b16 %v240
  %v265 = vpack.c.b16 %v259, %v257
  %v266 = vpack.c.b16 %v260, %v258
  %v267 = vpack.c.b16 %v263, %v261
  %v268 = vpack.c.b16 %v264, %v262
  %vm273 = vcmask 261120
  %v275 = vsel %vm273, %v233, 0
  %v278 = vsel %vm273, %v234, 0
  %v281 = vsel %vm273, %v235, 0
  %v284 = vsel %vm273, %v236, 0
  %286 = vmatprep.subr.bf16.mxu0 0
  %287 = vmatpush1.bf16.msra.mxu0 0
  %288 = vmatprep.subr.bf16.mxu0 0
  %289 = vmatpush1.bf16.msra.mxu0 0
  %290 = vmatprep.subr.bf16.mxu0 0
  %291 = vmatpush1.bf16.msra.mxu0 0
  %292 = vmatprep.subr.bf16.mxu0 0
  %293 = vmatpush1.bf16.msra.mxu0 0
  %294 = vmatprep.subr.bf16.mxu0 0
  %295 = vmatpush1.bf16.msra.mxu0 0
  %296 = vmatprep.subr.bf16.mxu0 0
  %297 = vmatpush1.bf16.msra.mxu0 0
  %298 = vmatprep.subr.bf16.mxu0 %v268
  %299 = vmatpush1.bf16.msra.mxu0 %v267
  %300 = vmatprep.subr.bf16.mxu0 %v266
  %301 = vmatpush1.bf16.msra.mxu0 %v265
  %302 = vmatprep.subr.bf16.mxu0 0
  %303 = vmatpush2.bf16.msra.mxu0 0
  %304 = vmatprep.subr.bf16.mxu0 0
  %305 = vmatpush2.bf16.msra.mxu0 0
  %306 = vmatprep.subr.bf16.mxu0 0
  %307 = vmatpush2.bf16.msra.mxu0 0
  %308 = vmatprep.subr.bf16.mxu0 0
  %309 = vmatpush2.bf16.msra.mxu0 0
  %310 = vmatprep.subr.bf16.mxu0 0
  %311 = vmatpush2.bf16.msra.mxu0 0
  %312 = vmatprep.subr.bf16.mxu0 0
  %313 = vmatpush2.bf16.msra.mxu0 0
  %314 = vmatprep.subr.bf16.mxu0 0
  %315 = vmatpush2.bf16.msra.mxu0 0
  %316 = vmatprep.subr.bf16.mxu0 0
  %317 = vmatpush2.bf16.msra.mxu0 0
  %318 = vmatprep.mubr.bf16.mxu0 0
  %319 = vmatmul.mubr.bf16.gmra.mxu0 %v275
  %v320 = vpop.f32.mrf.mxu0
  %v321 = vadd.f32 %v246, %v320
  %v322 = vpop.f32.mrf.mxu0
  %v323 = vadd.f32 %v250, %v322
  %v324 = vpop.f32.mrf.mxu0
  %v325 = vadd.f32 %v246, %v324
  %v326 = vpop.f32.mrf.mxu0
  %v327 = vadd.f32 %v250, %v326
  %328 = vmatprep.mubr.bf16.mxu0 0
  %329 = vmatmul.mubr.bf16.gmra.mxu0 %v278
  %v330 = vpop.f32.mrf.mxu0
  %v331 = vadd.f32 %v246, %v330
  %v332 = vpop.f32.mrf.mxu0
  %v333 = vadd.f32 %v250, %v332
  %v334 = vpop.f32.mrf.mxu0
  %v335 = vadd.f32 %v246, %v334
  %v336 = vpop.f32.mrf.mxu0
  %v337 = vadd.f32 %v250, %v336
  %338 = vmatprep.mubr.bf16.mxu0 0
  %339 = vmatmul.mubr.bf16.gmra.mxu0 %v281
  %v340 = vpop.f32.mrf.mxu0
  %v341 = vadd.f32 %v246, %v340
  %v342 = vpop.f32.mrf.mxu0
  %v343 = vadd.f32 %v250, %v342
  %v344 = vpop.f32.mrf.mxu0
  %v345 = vadd.f32 %v246, %v344
  %v346 = vpop.f32.mrf.mxu0
  %v347 = vadd.f32 %v250, %v346
  %348 = vmatprep.mubr.bf16.mxu0 0
  %349 = vmatmul.mubr.bf16.gmra.mxu0 %v284
  %v350 = vpop.f32.mrf.mxu0
  %v351 = vadd.f32 %v246, %v350
  %v352 = vpop.f32.mrf.mxu0
  %v353 = vadd.f32 %v250, %v352
  %v354 = vpop.f32.mrf.mxu0
  %v355 = vadd.f32 %v246, %v354
  %v356 = vpop.f32.mrf.mxu0
  %v357 = vadd.f32 %v250, %v356
  %358 = vdwg.mxu0
  %v359 = vld [vmem:[%s3] sm:$0xf]
  %v360 = vld [vmem:[%s3 + $0x4] sm:$0xf]
  %v361 = vld [vmem:[%s3 + $0x8] sm:$0xf]
  %v362 = vld [vmem:[%s3 + $0xc] sm:$0xf]
  %v363 = vld [vmem:[%s4] sm:$0xf]
  %v364 = vld [vmem:[%s4 + $0x4] sm:$0xf]
  %v365 = vld [vmem:[%s4 + $0x8] sm:$0xf]
  %v366 = vld [vmem:[%s4 + $0xc] sm:$0xf]
  %v367 = vld [vmem:[%s6] sm:$0x1]
  %v368 = vld [vmem:[%s7] sm:$0x1]
  %v370 = vlaneseq
  %v371 = vshrl.u32 %v370, 7
  %v372 = vsub.s32 0, %v371
  %v373 = vrot.slane %v367, %v372
  %v379 = vunpack.c.l.b16 %v359
  %v380 = vunpack.c.l.b16 %v360
  %v381 = vunpack.c.l.b16 %v361
  %v382 = vunpack.c.l.b16 %v362
  %v383 = vpack.c.b16 %v380, %v379
  %v384 = vpack.c.b16 %v382, %v381
  %v388 = vsel %vm273, 0, 0
  %390 = vmatprep.subr.bf16.mxu0 0
  %391 = vmatpush1.bf16.msra.mxu0 0
  %392 = vmatprep.subr.bf16.mxu0 0
  %393 = vmatpush1.bf16.msra.mxu0 0
  %394 = vmatprep.subr.bf16.mxu0 0
  %395 = vmatpush1.bf16.msra.mxu0 0
  %396 = vmatprep.subr.bf16.mxu0 0
  %397 = vmatpush1.bf16.msra.mxu0 0
  %398 = vmatprep.subr.bf16.mxu0 0
  %399 = vmatpush1.bf16.msra.mxu0 0
  %400 = vmatprep.subr.bf16.mxu0 0
  %401 = vmatpush1.bf16.msra.mxu0 0
  %402 = vmatprep.subr.bf16.mxu0 0
  %403 = vmatpush1.bf16.msra.mxu0 %v384
  %404 = vmatprep.subr.bf16.mxu0 0
  %405 = vmatpush1.bf16.msra.mxu0 %v383
  %406 = vmatprep.subr.bf16.mxu0 0
  %407 = vmatpush2.bf16.msra.mxu0 0
  %408 = vmatprep.subr.bf16.mxu0 0
  %409 = vmatpush2.bf16.msra.mxu0 0
  %410 = vmatprep.subr.bf16.mxu0 0
  %411 = vmatpush2.bf16.msra.mxu0 0
  %412 = vmatprep.subr.bf16.mxu0 0
  %413 = vmatpush2.bf16.msra.mxu0 0
  %414 = vmatprep.subr.bf16.mxu0 0
  %415 = vmatpush2.bf16.msra.mxu0 0
  %416 = vmatprep.subr.bf16.mxu0 0
  %417 = vmatpush2.bf16.msra.mxu0 0
  %418 = vmatprep.subr.bf16.mxu0 0
  %419 = vmatpush2.bf16.msra.mxu0 0
  %420 = vmatprep.subr.bf16.mxu0 0
  %421 = vmatpush2.bf16.msra.mxu0 0
  %422 = vmatprep.mubr.bf16.mxu0 0
  %423 = vmatmul.mubr.bf16.gmra.mxu0 %v388
  %v424 = vpop.f32.mrf.mxu0
  %v425 = vadd.f32 %v373, %v424
  %v426 = vpop.f32.mrf.mxu0
  %v427 = vpop.f32.mrf.mxu0
  %v428 = vpop.f32.mrf.mxu0
  %429 = vdwg.mxu0
  %v431 = vlaneseq
  %v432 = vshrl.u32 %v431, 7
  %v433 = vsub.s32 0, %v432
  %v434 = vrot.slane %v368, %v433
  %v440 = vunpack.c.l.b16 %v363
  %v441 = vunpack.c.l.b16 %v364
  %v442 = vunpack.c.l.b16 %v365
  %v443 = vunpack.c.l.b16 %v366
  %v444 = vpack.c.b16 %v441, %v440
  %v445 = vpack.c.b16 %v443, %v442
  %448 = vmatprep.subr.bf16.mxu0 0
  %449 = vmatpush1.bf16.msra.mxu0 0
  %450 = vmatprep.subr.bf16.mxu0 0
  %451 = vmatpush1.bf16.msra.mxu0 0
  %452 = vmatprep.subr.bf16.mxu0 0
  %453 = vmatpush1.bf16.msra.mxu0 0
  %454 = vmatprep.subr.bf16.mxu0 0
  %455 = vmatpush1.bf16.msra.mxu0 0
  %456 = vmatprep.subr.bf16.mxu0 0
  %457 = vmatpush1.bf16.msra.mxu0 0
  %458 = vmatprep.subr.bf16.mxu0 0
  %459 = vmatpush1.bf16.msra.mxu0 0
  %460 = vmatprep.subr.bf16.mxu0 0
  %461 = vmatpush1.bf16.msra.mxu0 %v445
  %462 = vmatprep.subr.bf16.mxu0 0
  %463 = vmatpush1.bf16.msra.mxu0 %v444
  %464 = vmatprep.subr.bf16.mxu0 0
  %465 = vmatpush2.bf16.msra.mxu0 0
  %466 = vmatprep.subr.bf16.mxu0 0
  %467 = vmatpush2.bf16.msra.mxu0 0
  %468 = vmatprep.subr.bf16.mxu0 0
  %469 = vmatpush2.bf16.msra.mxu0 0
  %470 = vmatprep.subr.bf16.mxu0 0
  %471 = vmatpush2.bf16.msra.mxu0 0
  %472 = vmatprep.subr.bf16.mxu0 0
  %473 = vmatpush2.bf16.msra.mxu0 0
  %474 = vmatprep.subr.bf16.mxu0 0
  %475 = vmatpush2.bf16.msra.mxu0 0
  %476 = vmatprep.subr.bf16.mxu0 0
  %477 = vmatpush2.bf16.msra.mxu0 0
  %478 = vmatprep.subr.bf16.mxu0 0
  %479 = vmatpush2.bf16.msra.mxu0 0
  %480 = vmatprep.mubr.bf16.mxu0 0
  %481 = vmatmul.mubr.bf16.gmra.mxu0 %v388
  %v482 = vpop.f32.mrf.mxu0
  %v483 = vadd.f32 %v434, %v482
  %v484 = vpop.f32.mrf.mxu0
  %v485 = vpop.f32.mrf.mxu0
  %v486 = vpop.f32.mrf.mxu0
  %487 = vdwg.mxu0
  %v488 = vadd.f32 %v321, %v425
  %v489 = vxor.u32 %v488, 2147483648
  %v490 = vmul.f32 %v489, 1.442695
  %v491 = vpow.pop %v490
  %v492 = vadd.f32 %v491, 1.0
  %v493 = vrcp.pop %v492
  %v494 = vmul.f32 1.0, %v493
  %496 = vrot.lane.b32.xlu0 %v425, 64
  %v497 = vpop.permute.xlu0 %496
  %v499 = vmul.f32 %v494, %v497
  %501 = vrot.lane.b32.xlu0 %v499, 64
  %v502 = vpop.permute.xlu0 %501
  %v504 = vadd.f32 %v321, %v502
  %v505 = vtanh.pop %v504
  %v506 = vsub.f32 1.0, %v494
  %508 = vrot.lane.b32.xlu0 %v505, 96
  %v509 = vpop.permute.xlu0 %508
  %v511 = vmul.f32 %v506, %v509
  %v512 = vmul.f32 %v494, 0.0
  %v513 = vadd.f32 %v511, %v512
  %515 = vrot.lane.b32.xlu0 %v483, 96
  %v516 = vpop.permute.xlu0 %515
  %v518 = vadd.f32 %v355, %v516
  %v519 = vxor.u32 %v518, 2147483648
  %v520 = vmul.f32 %v519, 1.442695
  %v521 = vpow.pop %v520
  %v522 = vadd.f32 %v521, 1.0
  %v523 = vrcp.pop %v522
  %v524 = vmul.f32 1.0, %v523
  %v525 = vadd.f32 %v357, %v516
  %v526 = vxor.u32 %v525, 2147483648
  %v527 = vmul.f32 %v526, 1.442695
  %v528 = vpow.pop %v527
  %v529 = vadd.f32 %v528, 1.0
  %v530 = vrcp.pop %v529
  %v531 = vmul.f32 1.0, %v530
  %532 = vrot.lane.b32.xlu0 %v483, 32
  %v533 = vpop.permute.xlu0 %532
  %v535 = vmul.f32 %v524, %v533
  %537 = vrot.lane.b32.xlu0 %v535, 64
  %v538 = vpop.permute.xlu0 %537
  %v540 = vadd.f32 %v357, %v538
  %v541 = vtanh.pop %v540
  %v542 = vsub.f32 1.0, %v531
  %544 = vrot.lane.b32.xlu0 %v541, 96
  %v545 = vpop.permute.xlu0 %544
  %v547 = vmul.f32 %v542, %v545
  %v548 = vmul.f32 %v531, 0.0
  %v549 = vadd.f32 %v547, %v548
  %551 = vrot.lane.b32.xlu0 %v513, 96
  %v552 = vpop.permute.xlu0 %551
  %554 = vst.msk [vmem:[#allocation2] sm:$0xff] %vm273, %v552
  %556 = vrot.lane.b32.xlu0 %v549, 32
  %v557 = vpop.permute.xlu0 %556
  %vm559 = vcmask 523520
  %560 = vst.msk [vmem:[#allocation2 + $0x38] sm:$0xff] %vm559, %v557
  %v561 = vpack.c.bf16 %v513, %v513
  %563 = vrot.lane.b32.xlu0 %v561, 96
  %v564 = vpop.permute.xlu0 %563
  %v566 = vsel %vm273, %v564, 0
  %568 = vmatprep.subr.bf16.mxu0 0
  %569 = vmatpush1.bf16.msra.mxu0 0
  %570 = vmatprep.subr.bf16.mxu0 0
  %571 = vmatpush1.bf16.msra.mxu0 0
  %572 = vmatprep.subr.bf16.mxu0 0
  %573 = vmatpush1.bf16.msra.mxu0 0
  %574 = vmatprep.subr.bf16.mxu0 0
  %575 = vmatpush1.bf16.msra.mxu0 0
  %576 = vmatprep.subr.bf16.mxu0 0
  %577 = vmatpush1.bf16.msra.mxu0 0
  %578 = vmatprep.subr.bf16.mxu0 0
  %579 = vmatpush1.bf16.msra.mxu0 0
  %580 = vmatprep.subr.bf16.mxu0 0
  %581 = vmatpush1.bf16.msra.mxu0 %v384
  %582 = vmatprep.subr.bf16.mxu0 0
  %583 = vmatpush1.bf16.msra.mxu0 %v383
  %584 = vmatprep.subr.bf16.mxu0 0
  %585 = vmatpush2.bf16.msra.mxu0 0
  %586 = vmatprep.subr.bf16.mxu0 0
  %587 = vmatpush2.bf16.msra.mxu0 0
  %588 = vmatprep.subr.bf16.mxu0 0
  %589 = vmatpush2.bf16.msra.mxu0 0
  %590 = vmatprep.subr.bf16.mxu0 0
  %591 = vmatpush2.bf16.msra.mxu0 0
  %592 = vmatprep.subr.bf16.mxu0 0
  %593 = vmatpush2.bf16.msra.mxu0 0
  %594 = vmatprep.subr.bf16.mxu0 0
  %595 = vmatpush2.bf16.msra.mxu0 0
  %596 = vmatprep.subr.bf16.mxu0 0
  %597 = vmatpush2.bf16.msra.mxu0 0
  %598 = vmatprep.subr.bf16.mxu0 0
  %599 = vmatpush2.bf16.msra.mxu0 0
  %600 = vmatprep.mubr.bf16.mxu0 0
  %601 = vmatmul.mubr.bf16.gmra.mxu0 %v566
  %v602 = vpop.f32.mrf.mxu0
  %v603 = vadd.f32 %v373, %v602
  %v604 = vpop.f32.mrf.mxu0
  %v605 = vpop.f32.mrf.mxu0
  %v606 = vpop.f32.mrf.mxu0
  %607 = vdwg.mxu0
  %v608 = vpack.c.bf16 %v549, %v549
  %v610 = vsel %vm273, %v608, 0
  %612 = vmatprep.subr.bf16.mxu0 0
  %613 = vmatpush1.bf16.msra.mxu0 0
  %614 = vmatprep.subr.bf16.mxu0 0
  %615 = vmatpush1.bf16.msra.mxu0 0
  %616 = vmatprep.subr.bf16.mxu0 0
  %617 = vmatpush1.bf16.msra.mxu0 0
  %618 = vmatprep.subr.bf16.mxu0 0
  %619 = vmatpush1.bf16.msra.mxu0 0
  %620 = vmatprep.subr.bf16.mxu0 0
  %621 = vmatpush1.bf16.msra.mxu0 0
  %622 = vmatprep.subr.bf16.mxu0 0
  %623 = vmatpush1.bf16.msra.mxu0 0
  %624 = vmatprep.subr.bf16.mxu0 0
  %625 = vmatpush1.bf16.msra.mxu0 %v445
  %626 = vmatprep.subr.bf16.mxu0 0
  %627 = vmatpush1.bf16.msra.mxu0 %v444
  %628 = vmatprep.subr.bf16.mxu0 0
  %629 = vmatpush2.bf16.msra.mxu0 0
  %630 = vmatprep.subr.bf16.mxu0 0
  %631 = vmatpush2.bf16.msra.mxu0 0
  %632 = vmatprep.subr.bf16.mxu0 0
  %633 = vmatpush2.bf16.msra.mxu0 0
  %634 = vmatprep.subr.bf16.mxu0 0
  %635 = vmatpush2.bf16.msra.mxu0 0
  %636 = vmatprep.subr.bf16.mxu0 0
  %637 = vmatpush2.bf16.msra.mxu0 0
  %638 = vmatprep.subr.bf16.mxu0 0
  %639 = vmatpush2.bf16.msra.mxu0 0
  %640 = vmatprep.subr.bf16.mxu0 0
  %641 = vmatpush2.bf16.msra.mxu0 0
  %642 = vmatprep.subr.bf16.mxu0 0
  %643 = vmatpush2.bf16.msra.mxu0 0
  %644 = vmatprep.mubr.bf16.mxu0 0
  %645 = vmatmul.mubr.bf16.gmra.mxu0 %v610
  %v646 = vpop.f32.mrf.mxu0
  %v647 = vadd.f32 %v434, %v646
  %v648 = vpop.f32.mrf.mxu0
  %v649 = vpop.f32.mrf.mxu0
  %v650 = vpop.f32.mrf.mxu0
  %651 = vdwg.mxu0
  %v652 = vadd.f32 %v325, %v603
  %v653 = vxor.u32 %v652, 2147483648
  %v654 = vmul.f32 %v653, 1.442695
  %v655 = vpow.pop %v654
  %v656 = vadd.f32 %v655, 1.0
  %v657 = vrcp.pop %v656
  %v658 = vmul.f32 1.0, %v657
  %660 = vrot.lane.b32.xlu0 %v603, 64
  %v661 = vpop.permute.xlu0 %660
  %v663 = vmul.f32 %v658, %v661
  %665 = vrot.lane.b32.xlu0 %v663, 64
  %v666 = vpop.permute.xlu0 %665
  %v668 = vadd.f32 %v325, %v666
  %v669 = vtanh.pop %v668
  %v670 = vsub.f32 1.0, %v658
  %672 = vrot.lane.b32.xlu0 %v669, 96
  %v673 = vpop.permute.xlu0 %672
  %v675 = vmul.f32 %v670, %v673
  %v676 = vmul.f32 %v658, %v513
  %v677 = vadd.f32 %v675, %v676
  %679 = vrot.lane.b32.xlu0 %v647, 96
  %v680 = vpop.permute.xlu0 %679
  %v682 = vadd.f32 %v351, %v680
  %v683 = vxor.u32 %v682, 2147483648
  %v684 = vmul.f32 %v683, 1.442695
  %v685 = vpow.pop %v684
  %v686 = vadd.f32 %v685, 1.0
  %v687 = vrcp.pop %v686
  %v688 = vmul.f32 1.0, %v687
  %v689 = vadd.f32 %v353, %v680
  %v690 = vxor.u32 %v689, 2147483648
  %v691 = vmul.f32 %v690, 1.442695
  %v692 = vpow.pop %v691
  %v693 = vadd.f32 %v692, 1.0
  %v694 = vrcp.pop %v693
  %v695 = vmul.f32 1.0, %v694
  %696 = vrot.lane.b32.xlu0 %v647, 32
  %v697 = vpop.permute.xlu0 %696
  %v699 = vmul.f32 %v688, %v697
  %701 = vrot.lane.b32.xlu0 %v699, 64
  %v702 = vpop.permute.xlu0 %701
  %v704 = vadd.f32 %v353, %v702
  %v705 = vtanh.pop %v704
  %v706 = vsub.f32 1.0, %v695
  %708 = vrot.lane.b32.xlu0 %v705, 96
  %v709 = vpop.permute.xlu0 %708
  %v711 = vmul.f32 %v706, %v709
  %v712 = vmul.f32 %v695, %v549
  %v713 = vadd.f32 %v711, %v712
  %715 = vrot.lane.b32.xlu0 %v677, 96
  %v716 = vpop.permute.xlu0 %715
  %718 = vst.msk [vmem:[#allocation2 + $0x8] sm:$0xff] %vm273, %v716
  %720 = vrot.lane.b32.xlu0 %v713, 32
  %v721 = vpop.permute.xlu0 %720
  %723 = vst.msk [vmem:[#allocation2 + $0x30] sm:$0xff] %vm559, %v721
  %v724 = vpack.c.bf16 %v677, %v677
  %726 = vrot.lane.b32.xlu0 %v724, 96
  %v727 = vpop.permute.xlu0 %726
  %v729 = vsel %vm273, %v727, 0
  %731 = vmatprep.subr.bf16.mxu0 0
  %732 = vmatpush1.bf16.msra.mxu0 0
  %733 = vmatprep.subr.bf16.mxu0 0
  %734 = vmatpush1.bf16.msra.mxu0 0
  %735 = vmatprep.subr.bf16.mxu0 0
  %736 = vmatpush1.bf16.msra.mxu0 0
  %737 = vmatprep.subr.bf16.mxu0 0
  %738 = vmatpush1.bf16.msra.mxu0 0
  %739 = vmatprep.subr.bf16.mxu0 0
  %740 = vmatpush1.bf16.msra.mxu0 0
  %741 = vmatprep.subr.bf16.mxu0 0
  %742 = vmatpush1.bf16.msra.mxu0 0
  %743 = vmatprep.subr.bf16.mxu0 0
  %744 = vmatpush1.bf16.msra.mxu0 %v384
  %745 = vmatprep.subr.bf16.mxu0 0
  %746 = vmatpush1.bf16.msra.mxu0 %v383
  %747 = vmatprep.subr.bf16.mxu0 0
  %748 = vmatpush2.bf16.msra.mxu0 0
  %749 = vmatprep.subr.bf16.mxu0 0
  %750 = vmatpush2.bf16.msra.mxu0 0
  %751 = vmatprep.subr.bf16.mxu0 0
  %752 = vmatpush2.bf16.msra.mxu0 0
  %753 = vmatprep.subr.bf16.mxu0 0
  %754 = vmatpush2.bf16.msra.mxu0 0
  %755 = vmatprep.subr.bf16.mxu0 0
  %756 = vmatpush2.bf16.msra.mxu0 0
  %757 = vmatprep.subr.bf16.mxu0 0
  %758 = vmatpush2.bf16.msra.mxu0 0
  %759 = vmatprep.subr.bf16.mxu0 0
  %760 = vmatpush2.bf16.msra.mxu0 0
  %761 = vmatprep.subr.bf16.mxu0 0
  %762 = vmatpush2.bf16.msra.mxu0 0
  %763 = vmatprep.mubr.bf16.mxu0 0
  %764 = vmatmul.mubr.bf16.gmra.mxu0 %v729
  %v765 = vpop.f32.mrf.mxu0
  %v766 = vadd.f32 %v373, %v765
  %v767 = vpop.f32.mrf.mxu0
  %v768 = vpop.f32.mrf.mxu0
  %v769 = vpop.f32.mrf.mxu0
  %770 = vdwg.mxu0
  %v771 = vpack.c.bf16 %v713, %v713
  %v773 = vsel %vm273, %v771, 0
  %775 = vmatprep.subr.bf16.mxu0 0
  %776 = vmatpush1.bf16.msra.mxu0 0
  %777 = vmatprep.subr.bf16.mxu0 0
  %778 = vmatpush1.bf16.msra.mxu0 0
  %779 = vmatprep.subr.bf16.mxu0 0
  %780 = vmatpush1.bf16.msra.mxu0 0
  %781 = vmatprep.subr.bf16.mxu0 0
  %782 = vmatpush1.bf16.msra.mxu0 0
  %783 = vmatprep.subr.bf16.mxu0 0
  %784 = vmatpush1.bf16.msra.mxu0 0
  %785 = vmatprep.subr.bf16.mxu0 0
  %786 = vmatpush1.bf16.msra.mxu0 0
  %787 = vmatprep.subr.bf16.mxu0 0
  %788 = vmatpush1.bf16.msra.mxu0 %v445
  %789 = vmatprep.subr.bf16.mxu0 0
  %790 = vmatpush1.bf16.msra.mxu0 %v444
  %791 = vmatprep.subr.bf16.mxu0 0
  %792 = vmatpush2.bf16.msra.mxu0 0
  %793 = vmatprep.subr.bf16.mxu0 0
  %794 = vmatpush2.bf16.msra.mxu0 0
  %795 = vmatprep.subr.bf16.mxu0 0
  %796 = vmatpush2.bf16.msra.mxu0 0
  %797 = vmatprep.subr.bf16.mxu0 0
  %798 = vmatpush2.bf16.msra.mxu0 0
  %799 = vmatprep.subr.bf16.mxu0 0
  %800 = vmatpush2.bf16.msra.mxu0 0
  %801 = vmatprep.subr.bf16.mxu0 0
  %802 = vmatpush2.bf16.msra.mxu0 0
  %803 = vmatprep.subr.bf16.mxu0 0
  %804 = vmatpush2.bf16.msra.mxu0 0
  %805 = vmatprep.subr.bf16.mxu0 0
  %806 = vmatpush2.bf16.msra.mxu0 0
  %807 = vmatprep.mubr.bf16.mxu0 0
  %808 = vmatmul.mubr.bf16.gmra.mxu0 %v773
  %v809 = vpop.f32.mrf.mxu0
  %v810 = vadd.f32 %v434, %v809
  %v811 = vpop.f32.mrf.mxu0
  %v812 = vpop.f32.mrf.mxu0
  %v813 = vpop.f32.mrf.mxu0
  %814 = vdwg.mxu0
  %v815 = vadd.f32 %v331, %v766
  %v816 = vxor.u32 %v815, 2147483648
  %v817 = vmul.f32 %v816, 1.442695
  %v818 = vpow.pop %v817
  %v819 = vadd.f32 %v818, 1.0
  %v820 = vrcp.pop %v819
  %v821 = vmul.f32 1.0, %v820
  %823 = vrot.lane.b32.xlu0 %v766, 64
  %v824 = vpop.permute.xlu0 %823
  %v826 = vmul.f32 %v821, %v824
  %828 = vrot.lane.b32.xlu0 %v826, 64
  %v829 = vpop.permute.xlu0 %828
  %v831 = vadd.f32 %v331, %v829
  %v832 = vtanh.pop %v831
  %v833 = vsub.f32 1.0, %v821
  %835 = vrot.lane.b32.xlu0 %v832, 96
  %v836 = vpop.permute.xlu0 %835
  %v838 = vmul.f32 %v833, %v836
  %v839 = vmul.f32 %v821, %v677
  %v840 = vadd.f32 %v838, %v839
  %842 = vrot.lane.b32.xlu0 %v810, 96
  %v843 = vpop.permute.xlu0 %842
  %v845 = vadd.f32 %v345, %v843
  %v846 = vxor.u32 %v845, 2147483648
  %v847 = vmul.f32 %v846, 1.442695
  %v848 = vpow.pop %v847
  %v849 = vadd.f32 %v848, 1.0
  %v850 = vrcp.pop %v849
  %v851 = vmul.f32 1.0, %v850
  %v852 = vadd.f32 %v347, %v843
  %v853 = vxor.u32 %v852, 2147483648
  %v854 = vmul.f32 %v853, 1.442695
  %v855 = vpow.pop %v854
  %v856 = vadd.f32 %v855, 1.0
  %v857 = vrcp.pop %v856
  %v858 = vmul.f32 1.0, %v857
  %859 = vrot.lane.b32.xlu0 %v810, 32
  %v860 = vpop.permute.xlu0 %859
  %v862 = vmul.f32 %v851, %v860
  %864 = vrot.lane.b32.xlu0 %v862, 64
  %v865 = vpop.permute.xlu0 %864
  %v867 = vadd.f32 %v347, %v865
  %v868 = vtanh.pop %v867
  %v869 = vsub.f32 1.0, %v858
  %871 = vrot.lane.b32.xlu0 %v868, 96
  %v872 = vpop.permute.xlu0 %871
  %v874 = vmul.f32 %v869, %v872
  %v875 = vmul.f32 %v858, %v713
  %v876 = vadd.f32 %v874, %v875
  %878 = vrot.lane.b32.xlu0 %v840, 96
  %v879 = vpop.permute.xlu0 %878
  %881 = vst.msk [vmem:[#allocation2 + $0x10] sm:$0xff] %vm273, %v879
  %883 = vrot.lane.b32.xlu0 %v876, 32
  %v884 = vpop.permute.xlu0 %883
  %886 = vst.msk [vmem:[#allocation2 + $0x28] sm:$0xff] %vm559, %v884
  %v887 = vpack.c.bf16 %v840, %v840
  %889 = vrot.lane.b32.xlu0 %v887, 96
  %v890 = vpop.permute.xlu0 %889
  %v892 = vsel %vm273, %v890, 0
  %894 = vmatprep.subr.bf16.mxu0 0
  %895 = vmatpush1.bf16.msra.mxu0 0
  %896 = vmatprep.subr.bf16.mxu0 0
  %897 = vmatpush1.bf16.msra.mxu0 0
  %898 = vmatprep.subr.bf16.mxu0 0
  %899 = vmatpush1.bf16.msra.mxu0 0
  %900 = vmatprep.subr.bf16.mxu0 0
  %901 = vmatpush1.bf16.msra.mxu0 0
  %902 = vmatprep.subr.bf16.mxu0 0
  %903 = vmatpush1.bf16.msra.mxu0 0
  %904 = vmatprep.subr.bf16.mxu0 0
  %905 = vmatpush1.bf16.msra.mxu0 0
  %906 = vmatprep.subr.bf16.mxu0 0
  %907 = vmatpush1.bf16.msra.mxu0 %v384
  %908 = vmatprep.subr.bf16.mxu0 0
  %909 = vmatpush1.bf16.msra.mxu0 %v383
  %910 = vmatprep.subr.bf16.mxu0 0
  %911 = vmatpush2.bf16.msra.mxu0 0
  %912 = vmatprep.subr.bf16.mxu0 0
  %913 = vmatpush2.bf16.msra.mxu0 0
  %914 = vmatprep.subr.bf16.mxu0 0
  %915 = vmatpush2.bf16.msra.mxu0 0
  %916 = vmatprep.subr.bf16.mxu0 0
  %917 = vmatpush2.bf16.msra.mxu0 0
  %918 = vmatprep.subr.bf16.mxu0 0
  %919 = vmatpush2.bf16.msra.mxu0 0
  %920 = vmatprep.subr.bf16.mxu0 0
  %921 = vmatpush2.bf16.msra.mxu0 0
  %922 = vmatprep.subr.bf16.mxu0 0
  %923 = vmatpush2.bf16.msra.mxu0 0
  %924 = vmatprep.subr.bf16.mxu0 0
  %925 = vmatpush2.bf16.msra.mxu0 0
  %926 = vmatprep.mubr.bf16.mxu0 0
  %927 = vmatmul.mubr.bf16.gmra.mxu0 %v892
  %v928 = vpop.f32.mrf.mxu0
  %v929 = vadd.f32 %v373, %v928
  %v930 = vpop.f32.mrf.mxu0
  %v931 = vpop.f32.mrf.mxu0
  %v932 = vpop.f32.mrf.mxu0
  %933 = vdwg.mxu0
  %v934 = vpack.c.bf16 %v876, %v876
  %v936 = vsel %vm273, %v934, 0
  %938 = vmatprep.subr.bf16.mxu0 0
  %939 = vmatpush1.bf16.msra.mxu0 0
  %940 = vmatprep.subr.bf16.mxu0 0
  %941 = vmatpush1.bf16.msra.mxu0 0
  %942 = vmatprep.subr.bf16.mxu0 0
  %943 = vmatpush1.bf16.msra.mxu0 0
  %944 = vmatprep.subr.bf16.mxu0 0
  %945 = vmatpush1.bf16.msra.mxu0 0
  %946 = vmatprep.subr.bf16.mxu0 0
  %947 = vmatpush1.bf16.msra.mxu0 0
  %948 = vmatprep.subr.bf16.mxu0 0
  %949 = vmatpush1.bf16.msra.mxu0 0
  %950 = vmatprep.subr.bf16.mxu0 0
  %951 = vmatpush1.bf16.msra.mxu0 %v445
  %952 = vmatprep.subr.bf16.mxu0 0
  %953 = vmatpush1.bf16.msra.mxu0 %v444
  %954 = vmatprep.subr.bf16.mxu0 0
  %955 = vmatpush2.bf16.msra.mxu0 0
  %956 = vmatprep.subr.bf16.mxu0 0
  %957 = vmatpush2.bf16.msra.mxu0 0
  %958 = vmatprep.subr.bf16.mxu0 0
  %959 = vmatpush2.bf16.msra.mxu0 0
  %960 = vmatprep.subr.bf16.mxu0 0
  %961 = vmatpush2.bf16.msra.mxu0 0
  %962 = vmatprep.subr.bf16.mxu0 0
  %963 = vmatpush2.bf16.msra.mxu0 0
  %964 = vmatprep.subr.bf16.mxu0 0
  %965 = vmatpush2.bf16.msra.mxu0 0
  %966 = vmatprep.subr.bf16.mxu0 0
  %967 = vmatpush2.bf16.msra.mxu0 0
  %968 = vmatprep.subr.bf16.mxu0 0
  %969 = vmatpush2.bf16.msra.mxu0 0
  %970 = vmatprep.mubr.bf16.mxu0 0
  %971 = vmatmul.mubr.bf16.gmra.mxu0 %v936
  %v972 = vpop.f32.mrf.mxu0
  %v973 = vadd.f32 %v434, %v972
  %v974 = vpop.f32.mrf.mxu0
  %v975 = vpop.f32.mrf.mxu0
  %v976 = vpop.f32.mrf.mxu0
  %977 = vdwg.mxu0
  %v978 = vadd.f32 %v335, %v929
  %v979 = vxor.u32 %v978, 2147483648
  %v980 = vmul.f32 %v979, 1.442695
  %v981 = vpow.pop %v980
  %v982 = vadd.f32 %v981, 1.0
  %v983 = vrcp.pop %v982
  %v984 = vmul.f32 1.0, %v983
  %986 = vrot.lane.b32.xlu0 %v929, 64
  %v987 = vpop.permute.xlu0 %986
  %v989 = vmul.f32 %v984, %v987
  %991 = vrot.lane.b32.xlu0 %v989, 64
  %v992 = vpop.permute.xlu0 %991
  %v994 = vadd.f32 %v335, %v992
  %v995 = vtanh.pop %v994
  %v996 = vsub.f32 1.0, %v984
  %998 = vrot.lane.b32.xlu0 %v995, 96
  %v999 = vpop.permute.xlu0 %998
  %v1001 = vmul.f32 %v996, %v999
  %v1002 = vmul.f32 %v984, %v840
  %v1003 = vadd.f32 %v1001, %v1002
  %1005 = vrot.lane.b32.xlu0 %v973, 96
  %v1006 = vpop.permute.xlu0 %1005
  %v1008 = vadd.f32 %v341, %v1006
  %v1009 = vxor.u32 %v1008, 2147483648
  %v1010 = vmul.f32 %v1009, 1.442695
  %v1011 = vpow.pop %v1010
  %v1012 = vadd.f32 %v1011, 1.0
  %v1013 = vrcp.pop %v1012
  %v1014 = vmul.f32 1.0, %v1013
  %v1015 = vadd.f32 %v343, %v1006
  %v1016 = vxor.u32 %v1015, 2147483648
  %v1017 = vmul.f32 %v1016, 1.442695
  %v1018 = vpow.pop %v1017
  %v1019 = vadd.f32 %v1018, 1.0
  %v1020 = vrcp.pop %v1019
  %v1021 = vmul.f32 1.0, %v1020
  %1022 = vrot.lane.b32.xlu0 %v973, 32
  %v1023 = vpop.permute.xlu0 %1022
  %v1025 = vmul.f32 %v1014, %v1023
  %1027 = vrot.lane.b32.xlu0 %v1025, 64
  %v1028 = vpop.permute.xlu0 %1027
  %v1030 = vadd.f32 %v343, %v1028
  %v1031 = vtanh.pop %v1030
  %v1032 = vsub.f32 1.0, %v1021
  %1034 = vrot.lane.b32.xlu0 %v1031, 96
  %v1035 = vpop.permute.xlu0 %1034
  %v1037 = vmul.f32 %v1032, %v1035
  %v1038 = vmul.f32 %v1021, %v876
  %v1039 = vadd.f32 %v1037, %v1038
  %1041 = vrot.lane.b32.xlu0 %v1003, 96
  %v1042 = vpop.permute.xlu0 %1041
  %1044 = vst.msk [vmem:[#allocation2 + $0x18] sm:$0xff] %vm273, %v1042
  %1046 = vrot.lane.b32.xlu0 %v1039, 32
  %v1047 = vpop.permute.xlu0 %1046
  %1049 = vst.msk [vmem:[#allocation2 + $0x20] sm:$0xff] %vm559, %v1047
  %v1050 = vpack.c.bf16 %v1003, %v1003
  %1052 = vrot.lane.b32.xlu0 %v1050, 96
  %v1053 = vpop.permute.xlu0 %1052
  %v1055 = vsel %vm273, %v1053, 0
  %1057 = vmatprep.subr.bf16.mxu0 0
  %1058 = vmatpush1.bf16.msra.mxu0 0
  %1059 = vmatprep.subr.bf16.mxu0 0
  %1060 = vmatpush1.bf16.msra.mxu0 0
  %1061 = vmatprep.subr.bf16.mxu0 0
  %1062 = vmatpush1.bf16.msra.mxu0 0
  %1063 = vmatprep.subr.bf16.mxu0 0
  %1064 = vmatpush1.bf16.msra.mxu0 0
  %1065 = vmatprep.subr.bf16.mxu0 0
  %1066 = vmatpush1.bf16.msra.mxu0 0
  %1067 = vmatprep.subr.bf16.mxu0 0
  %1068 = vmatpush1.bf16.msra.mxu0 0
  %1069 = vmatprep.subr.bf16.mxu0 0
  %1070 = vmatpush1.bf16.msra.mxu0 %v384
  %1071 = vmatprep.subr.bf16.mxu0 0
  %1072 = vmatpush1.bf16.msra.mxu0 %v383
  %1073 = vmatprep.subr.bf16.mxu0 0
  %1074 = vmatpush2.bf16.msra.mxu0 0
  %1075 = vmatprep.subr.bf16.mxu0 0
  %1076 = vmatpush2.bf16.msra.mxu0 0
  %1077 = vmatprep.subr.bf16.mxu0 0
  %1078 = vmatpush2.bf16.msra.mxu0 0
  %1079 = vmatprep.subr.bf16.mxu0 0
  %1080 = vmatpush2.bf16.msra.mxu0 0
  %1081 = vmatprep.subr.bf16.mxu0 0
  %1082 = vmatpush2.bf16.msra.mxu0 0
  %1083 = vmatprep.subr.bf16.mxu0 0
  %1084 = vmatpush2.bf16.msra.mxu0 0
  %1085 = vmatprep.subr.bf16.mxu0 0
  %1086 = vmatpush2.bf16.msra.mxu0 0
  %1087 = vmatprep.subr.bf16.mxu0 0
  %1088 = vmatpush2.bf16.msra.mxu0 0
  %1089 = vmatprep.mubr.bf16.mxu0 0
  %1090 = vmatmul.mubr.bf16.gmra.mxu0 %v1055
  %v1091 = vpop.f32.mrf.mxu0
  %v1092 = vadd.f32 %v373, %v1091
  %v1093 = vpop.f32.mrf.mxu0
  %v1094 = vpop.f32.mrf.mxu0
  %v1095 = vpop.f32.mrf.mxu0
  %1096 = vdwg.mxu0
  %v1097 = vpack.c.bf16 %v1039, %v1039
  %v1099 = vsel %vm273, %v1097, 0
  %1101 = vmatprep.subr.bf16.mxu0 0
  %1102 = vmatpush1.bf16.msra.mxu0 0
  %1103 = vmatprep.subr.bf16.mxu0 0
  %1104 = vmatpush1.bf16.msra.mxu0 0
  %1105 = vmatprep.subr.bf16.mxu0 0
  %1106 = vmatpush1.bf16.msra.mxu0 0
  %1107 = vmatprep.subr.bf16.mxu0 0
  %1108 = vmatpush1.bf16.msra.mxu0 0
  %1109 = vmatprep.subr.bf16.mxu0 0
  %1110 = vmatpush1.bf16.msra.mxu0 0
  %1111 = vmatprep.subr.bf16.mxu0 0
  %1112 = vmatpush1.bf16.msra.mxu0 0
  %1113 = vmatprep.subr.bf16.mxu0 0
  %1114 = vmatpush1.bf16.msra.mxu0 %v445
  %1115 = vmatprep.subr.bf16.mxu0 0
  %1116 = vmatpush1.bf16.msra.mxu0 %v444
  %1117 = vmatprep.subr.bf16.mxu0 0
  %1118 = vmatpush2.bf16.msra.mxu0 0
  %1119 = vmatprep.subr.bf16.mxu0 0
  %1120 = vmatpush2.bf16.msra.mxu0 0
  %1121 = vmatprep.subr.bf16.mxu0 0
  %1122 = vmatpush2.bf16.msra.mxu0 0
  %1123 = vmatprep.subr.bf16.mxu0 0
  %1124 = vmatpush2.bf16.msra.mxu0 0
  %1125 = vmatprep.subr.bf16.mxu0 0
  %1126 = vmatpush2.bf16.msra.mxu0 0
  %1127 = vmatprep.subr.bf16.mxu0 0
  %1128 = vmatpush2.bf16.msra.mxu0 0
  %1129 = vmatprep.subr.bf16.mxu0 0
  %1130 = vmatpush2.bf16.msra.mxu0 0
  %1131 = vmatprep.subr.bf16.mxu0 0
  %1132 = vmatpush2.bf16.msra.mxu0 0
  %1133 = vmatprep.mubr.bf16.mxu0 0
  %1134 = vmatmul.mubr.bf16.gmra.mxu0 %v1099
  %v1135 = vpop.f32.mrf.mxu0
  %v1136 = vadd.f32 %v434, %v1135
  %v1137 = vpop.f32.mrf.mxu0
  %v1138 = vpop.f32.mrf.mxu0
  %v1139 = vpop.f32.mrf.mxu0
  %1140 = vdwg.mxu0
  %v1141 = vadd.f32 %v341, %v1092
  %v1142 = vxor.u32 %v1141, 2147483648
  %v1143 = vmul.f32 %v1142, 1.442695
  %v1144 = vpow.pop %v1143
  %v1145 = vadd.f32 %v1144, 1.0
  %v1146 = vrcp.pop %v1145
  %v1147 = vmul.f32 1.0, %v1146
  %1149 = vrot.lane.b32.xlu0 %v1092, 64
  %v1150 = vpop.permute.xlu0 %1149
  %v1152 = vmul.f32 %v1147, %v1150
  %1154 = vrot.lane.b32.xlu0 %v1152, 64
  %v1155 = vpop.permute.xlu0 %1154
  %v1157 = vadd.f32 %v341, %v1155
  %v1158 = vtanh.pop %v1157
  %v1159 = vsub.f32 1.0, %v1147
  %1161 = vrot.lane.b32.xlu0 %v1158, 96
  %v1162 = vpop.permute.xlu0 %1161
  %v1164 = vmul.f32 %v1159, %v1162
  %v1165 = vmul.f32 %v1147, %v1003
  %v1166 = vadd.f32 %v1164, %v1165
  %1168 = vrot.lane.b32.xlu0 %v1136, 96
  %v1169 = vpop.permute.xlu0 %1168
  %v1171 = vadd.f32 %v335, %v1169
  %v1172 = vxor.u32 %v1171, 2147483648
  %v1173 = vmul.f32 %v1172, 1.442695
  %v1174 = vpow.pop %v1173
  %v1175 = vadd.f32 %v1174, 1.0
  %v1176 = vrcp.pop %v1175
  %v1177 = vmul.f32 1.0, %v1176
  %v1178 = vadd.f32 %v337, %v1169
  %v1179 = vxor.u32 %v1178, 2147483648
  %v1180 = vmul.f32 %v1179, 1.442695
  %v1181 = vpow.pop %v1180
  %v1182 = vadd.f32 %v1181, 1.0
  %v1183 = vrcp.pop %v1182
  %v1184 = vmul.f32 1.0, %v1183
  %1185 = vrot.lane.b32.xlu0 %v1136, 32
  %v1186 = vpop.permute.xlu0 %1185
  %v1188 = vmul.f32 %v1177, %v1186
  %1190 = vrot.lane.b32.xlu0 %v1188, 64
  %v1191 = vpop.permute.xlu0 %1190
  %v1193 = vadd.f32 %v337, %v1191
  %v1194 = vtanh.pop %v1193
  %v1195 = vsub.f32 1.0, %v1184
  %1197 = vrot.lane.b32.xlu0 %v1194, 96
  %v1198 = vpop.permute.xlu0 %1197
  %v1200 = vmul.f32 %v1195, %v1198
  %v1201 = vmul.f32 %v1184, %v1039
  %v1202 = vadd.f32 %v1200, %v1201
  %1204 = vrot.lane.b32.xlu0 %v1166, 96
  %v1205 = vpop.permute.xlu0 %1204
  %1207 = vst.msk [vmem:[#allocation2 + $0x20] sm:$0xff] %vm273, %v1205
  %1209 = vrot.lane.b32.xlu0 %v1202, 32
  %v1210 = vpop.permute.xlu0 %1209
  %1212 = vst.msk [vmem:[#allocation2 + $0x18] sm:$0xff] %vm559, %v1210
  %v1213 = vpack.c.bf16 %v1166, %v1166
  %1215 = vrot.lane.b32.xlu0 %v1213, 96
  %v1216 = vpop.permute.xlu0 %1215
  %v1218 = vsel %vm273, %v1216, 0
  %1220 = vmatprep.subr.bf16.mxu0 0
  %1221 = vmatpush1.bf16.msra.mxu0 0
  %1222 = vmatprep.subr.bf16.mxu0 0
  %1223 = vmatpush1.bf16.msra.mxu0 0
  %1224 = vmatprep.subr.bf16.mxu0 0
  %1225 = vmatpush1.bf16.msra.mxu0 0
  %1226 = vmatprep.subr.bf16.mxu0 0
  %1227 = vmatpush1.bf16.msra.mxu0 0
  %1228 = vmatprep.subr.bf16.mxu0 0
  %1229 = vmatpush1.bf16.msra.mxu0 0
  %1230 = vmatprep.subr.bf16.mxu0 0
  %1231 = vmatpush1.bf16.msra.mxu0 0
  %1232 = vmatprep.subr.bf16.mxu0 0
  %1233 = vmatpush1.bf16.msra.mxu0 %v384
  %1234 = vmatprep.subr.bf16.mxu0 0
  %1235 = vmatpush1.bf16.msra.mxu0 %v383
  %1236 = vmatprep.subr.bf16.mxu0 0
  %1237 = vmatpush2.bf16.msra.mxu0 0
  %1238 = vmatprep.subr.bf16.mxu0 0
  %1239 = vmatpush2.bf16.msra.mxu0 0
  %1240 = vmatprep.subr.bf16.mxu0 0
  %1241 = vmatpush2.bf16.msra.mxu0 0
  %1242 = vmatprep.subr.bf16.mxu0 0
  %1243 = vmatpush2.bf16.msra.mxu0 0
  %1244 = vmatprep.subr.bf16.mxu0 0
  %1245 = vmatpush2.bf16.msra.mxu0 0
  %1246 = vmatprep.subr.bf16.mxu0 0
  %1247 = vmatpush2.bf16.msra.mxu0 0
  %1248 = vmatprep.subr.bf16.mxu0 0
  %1249 = vmatpush2.bf16.msra.mxu0 0
  %1250 = vmatprep.subr.bf16.mxu0 0
  %1251 = vmatpush2.bf16.msra.mxu0 0
  %1252 = vmatprep.mubr.bf16.mxu0 0
  %1253 = vmatmul.mubr.bf16.gmra.mxu0 %v1218
  %v1254 = vpop.f32.mrf.mxu0
  %v1255 = vadd.f32 %v373, %v1254
  %v1256 = vpop.f32.mrf.mxu0
  %v1257 = vpop.f32.mrf.mxu0
  %v1258 = vpop.f32.mrf.mxu0
  %1259 = vdwg.mxu0
  %v1260 = vpack.c.bf16 %v1202, %v1202
  %v1262 = vsel %vm273, %v1260, 0
  %1264 = vmatprep.subr.bf16.mxu0 0
  %1265 = vmatpush1.bf16.msra.mxu0 0
  %1266 = vmatprep.subr.bf16.mxu0 0
  %1267 = vmatpush1.bf16.msra.mxu0 0
  %1268 = vmatprep.subr.bf16.mxu0 0
  %1269 = vmatpush1.bf16.msra.mxu0 0
  %1270 = vmatprep.subr.bf16.mxu0 0
  %1271 = vmatpush1.bf16.msra.mxu0 0
  %1272 = vmatprep.subr.bf16.mxu0 0
  %1273 = vmatpush1.bf16.msra.mxu0 0
  %1274 = vmatprep.subr.bf16.mxu0 0
  %1275 = vmatpush1.bf16.msra.mxu0 0
  %1276 = vmatprep.subr.bf16.mxu0 0
  %1277 = vmatpush1.bf16.msra.mxu0 %v445
  %1278 = vmatprep.subr.bf16.mxu0 0
  %1279 = vmatpush1.bf16.msra.mxu0 %v444
  %1280 = vmatprep.subr.bf16.mxu0 0
  %1281 = vmatpush2.bf16.msra.mxu0 0
  %1282 = vmatprep.subr.bf16.mxu0 0
  %1283 = vmatpush2.bf16.msra.mxu0 0
  %1284 = vmatprep.subr.bf16.mxu0 0
  %1285 = vmatpush2.bf16.msra.mxu0 0
  %1286 = vmatprep.subr.bf16.mxu0 0
  %1287 = vmatpush2.bf16.msra.mxu0 0
  %1288 = vmatprep.subr.bf16.mxu0 0
  %1289 = vmatpush2.bf16.msra.mxu0 0
  %1290 = vmatprep.subr.bf16.mxu0 0
  %1291 = vmatpush2.bf16.msra.mxu0 0
  %1292 = vmatprep.subr.bf16.mxu0 0
  %1293 = vmatpush2.bf16.msra.mxu0 0
  %1294 = vmatprep.subr.bf16.mxu0 0
  %1295 = vmatpush2.bf16.msra.mxu0 0
  %1296 = vmatprep.mubr.bf16.mxu0 0
  %1297 = vmatmul.mubr.bf16.gmra.mxu0 %v1262
  %v1298 = vpop.f32.mrf.mxu0
  %v1299 = vadd.f32 %v434, %v1298
  %v1300 = vpop.f32.mrf.mxu0
  %v1301 = vpop.f32.mrf.mxu0
  %v1302 = vpop.f32.mrf.mxu0
  %1303 = vdwg.mxu0
  %v1304 = vadd.f32 %v345, %v1255
  %v1305 = vxor.u32 %v1304, 2147483648
  %v1306 = vmul.f32 %v1305, 1.442695
  %v1307 = vpow.pop %v1306
  %v1308 = vadd.f32 %v1307, 1.0
  %v1309 = vrcp.pop %v1308
  %v1310 = vmul.f32 1.0, %v1309
  %1312 = vrot.lane.b32.xlu0 %v1255, 64
  %v1313 = vpop.permute.xlu0 %1312
  %v1315 = vmul.f32 %v1310, %v1313
  %1317 = vrot.lane.b32.xlu0 %v1315, 64
  %v1318 = vpop.permute.xlu0 %1317
  %v1320 = vadd.f32 %v345, %v1318
  %v1321 = vtanh.pop %v1320
  %v1322 = vsub.f32 1.0, %v1310
  %1324 = vrot.lane.b32.xlu0 %v1321, 96
  %v1325 = vpop.permute.xlu0 %1324
  %v1327 = vmul.f32 %v1322, %v1325
  %v1328 = vmul.f32 %v1310, %v1166
  %v1329 = vadd.f32 %v1327, %v1328
  %1331 = vrot.lane.b32.xlu0 %v1299, 96
  %v1332 = vpop.permute.xlu0 %1331
  %v1334 = vadd.f32 %v331, %v1332
  %v1335 = vxor.u32 %v1334, 2147483648
  %v1336 = vmul.f32 %v1335, 1.442695
  %v1337 = vpow.pop %v1336
  %v1338 = vadd.f32 %v1337, 1.0
  %v1339 = vrcp.pop %v1338
  %v1340 = vmul.f32 1.0, %v1339
  %v1341 = vadd.f32 %v333, %v1332
  %v1342 = vxor.u32 %v1341, 2147483648
  %v1343 = vmul.f32 %v1342, 1.442695
  %v1344 = vpow.pop %v1343
  %v1345 = vadd.f32 %v1344, 1.0
  %v1346 = vrcp.pop %v1345
  %v1347 = vmul.f32 1.0, %v1346
  %1348 = vrot.lane.b32.xlu0 %v1299, 32
  %v1349 = vpop.permute.xlu0 %1348
  %v1351 = vmul.f32 %v1340, %v1349
  %1353 = vrot.lane.b32.xlu0 %v1351, 64
  %v1354 = vpop.permute.xlu0 %1353
  %v1356 = vadd.f32 %v333, %v1354
  %v1357 = vtanh.pop %v1356
  %v1358 = vsub.f32 1.0, %v1347
  %1360 = vrot.lane.b32.xlu0 %v1357, 96
  %v1361 = vpop.permute.xlu0 %1360
  %v1363 = vmul.f32 %v1358, %v1361
  %v1364 = vmul.f32 %v1347, %v1202
  %v1365 = vadd.f32 %v1363, %v1364
  %1367 = vrot.lane.b32.xlu0 %v1329, 96
  %v1368 = vpop.permute.xlu0 %1367
  %1370 = vst.msk [vmem:[#allocation2 + $0x28] sm:$0xff] %vm273, %v1368
  %1372 = vrot.lane.b32.xlu0 %v1365, 32
  %v1373 = vpop.permute.xlu0 %1372
  %1375 = vst.msk [vmem:[#allocation2 + $0x10] sm:$0xff] %vm559, %v1373
  %v1376 = vpack.c.bf16 %v1329, %v1329
  %1378 = vrot.lane.b32.xlu0 %v1376, 96
  %v1379 = vpop.permute.xlu0 %1378
  %v1381 = vsel %vm273, %v1379, 0
  %1383 = vmatprep.subr.bf16.mxu0 0
  %1384 = vmatpush1.bf16.msra.mxu0 0
  %1385 = vmatprep.subr.bf16.mxu0 0
  %1386 = vmatpush1.bf16.msra.mxu0 0
  %1387 = vmatprep.subr.bf16.mxu0 0
  %1388 = vmatpush1.bf16.msra.mxu0 0
  %1389 = vmatprep.subr.bf16.mxu0 0
  %1390 = vmatpush1.bf16.msra.mxu0 0
  %1391 = vmatprep.subr.bf16.mxu0 0
  %1392 = vmatpush1.bf16.msra.mxu0 0
  %1393 = vmatprep.subr.bf16.mxu0 0
  %1394 = vmatpush1.bf16.msra.mxu0 0
  %1395 = vmatprep.subr.bf16.mxu0 0
  %1396 = vmatpush1.bf16.msra.mxu0 %v384
  %1397 = vmatprep.subr.bf16.mxu0 0
  %1398 = vmatpush1.bf16.msra.mxu0 %v383
  %1399 = vmatprep.subr.bf16.mxu0 0
  %1400 = vmatpush2.bf16.msra.mxu0 0
  %1401 = vmatprep.subr.bf16.mxu0 0
  %1402 = vmatpush2.bf16.msra.mxu0 0
  %1403 = vmatprep.subr.bf16.mxu0 0
  %1404 = vmatpush2.bf16.msra.mxu0 0
  %1405 = vmatprep.subr.bf16.mxu0 0
  %1406 = vmatpush2.bf16.msra.mxu0 0
  %1407 = vmatprep.subr.bf16.mxu0 0
  %1408 = vmatpush2.bf16.msra.mxu0 0
  %1409 = vmatprep.subr.bf16.mxu0 0
  %1410 = vmatpush2.bf16.msra.mxu0 0
  %1411 = vmatprep.subr.bf16.mxu0 0
  %1412 = vmatpush2.bf16.msra.mxu0 0
  %1413 = vmatprep.subr.bf16.mxu0 0
  %1414 = vmatpush2.bf16.msra.mxu0 0
  %1415 = vmatprep.mubr.bf16.mxu0 0
  %1416 = vmatmul.mubr.bf16.gmra.mxu0 %v1381
  %v1417 = vpop.f32.mrf.mxu0
  %v1418 = vadd.f32 %v373, %v1417
  %v1419 = vpop.f32.mrf.mxu0
  %v1420 = vpop.f32.mrf.mxu0
  %v1421 = vpop.f32.mrf.mxu0
  %1422 = vdwg.mxu0
  %v1423 = vpack.c.bf16 %v1365, %v1365
  %v1425 = vsel %vm273, %v1423, 0
  %1427 = vmatprep.subr.bf16.mxu0 0
  %1428 = vmatpush1.bf16.msra.mxu0 0
  %1429 = vmatprep.subr.bf16.mxu0 0
  %1430 = vmatpush1.bf16.msra.mxu0 0
  %1431 = vmatprep.subr.bf16.mxu0 0
  %1432 = vmatpush1.bf16.msra.mxu0 0
  %1433 = vmatprep.subr.bf16.mxu0 0
  %1434 = vmatpush1.bf16.msra.mxu0 0
  %1435 = vmatprep.subr.bf16.mxu0 0
  %1436 = vmatpush1.bf16.msra.mxu0 0
  %1437 = vmatprep.subr.bf16.mxu0 0
  %1438 = vmatpush1.bf16.msra.mxu0 0
  %1439 = vmatprep.subr.bf16.mxu0 0
  %1440 = vmatpush1.bf16.msra.mxu0 %v445
  %1441 = vmatprep.subr.bf16.mxu0 0
  %1442 = vmatpush1.bf16.msra.mxu0 %v444
  %1443 = vmatprep.subr.bf16.mxu0 0
  %1444 = vmatpush2.bf16.msra.mxu0 0
  %1445 = vmatprep.subr.bf16.mxu0 0
  %1446 = vmatpush2.bf16.msra.mxu0 0
  %1447 = vmatprep.subr.bf16.mxu0 0
  %1448 = vmatpush2.bf16.msra.mxu0 0
  %1449 = vmatprep.subr.bf16.mxu0 0
  %1450 = vmatpush2.bf16.msra.mxu0 0
  %1451 = vmatprep.subr.bf16.mxu0 0
  %1452 = vmatpush2.bf16.msra.mxu0 0
  %1453 = vmatprep.subr.bf16.mxu0 0
  %1454 = vmatpush2.bf16.msra.mxu0 0
  %1455 = vmatprep.subr.bf16.mxu0 0
  %1456 = vmatpush2.bf16.msra.mxu0 0
  %1457 = vmatprep.subr.bf16.mxu0 0
  %1458 = vmatpush2.bf16.msra.mxu0 0
  %1459 = vmatprep.mubr.bf16.mxu0 0
  %1460 = vmatmul.mubr.bf16.gmra.mxu0 %v1425
  %v1461 = vpop.f32.mrf.mxu0
  %v1462 = vadd.f32 %v434, %v1461
  %v1463 = vpop.f32.mrf.mxu0
  %v1464 = vpop.f32.mrf.mxu0
  %v1465 = vpop.f32.mrf.mxu0
  %1466 = vdwg.mxu0
  %v1467 = vadd.f32 %v351, %v1418
  %v1468 = vxor.u32 %v1467, 2147483648
  %v1469 = vmul.f32 %v1468, 1.442695
  %v1470 = vpow.pop %v1469
  %v1471 = vadd.f32 %v1470, 1.0
  %v1472 = vrcp.pop %v1471
  %v1473 = vmul.f32 1.0, %v1472
  %1475 = vrot.lane.b32.xlu0 %v1418, 64
  %v1476 = vpop.permute.xlu0 %1475
  %v1478 = vmul.f32 %v1473, %v1476
  %1480 = vrot.lane.b32.xlu0 %v1478, 64
  %v1481 = vpop.permute.xlu0 %1480
  %v1483 = vadd.f32 %v351, %v1481
  %v1484 = vtanh.pop %v1483
  %v1485 = vsub.f32 1.0, %v1473
  %1487 = vrot.lane.b32.xlu0 %v1484, 96
  %v1488 = vpop.permute.xlu0 %1487
  %v1490 = vmul.f32 %v1485, %v1488
  %v1491 = vmul.f32 %v1473, %v1329
  %v1492 = vadd.f32 %v1490, %v1491
  %1494 = vrot.lane.b32.xlu0 %v1462, 96
  %v1495 = vpop.permute.xlu0 %1494
  %v1497 = vadd.f32 %v325, %v1495
  %v1498 = vxor.u32 %v1497, 2147483648
  %v1499 = vmul.f32 %v1498, 1.442695
  %v1500 = vpow.pop %v1499
  %v1501 = vadd.f32 %v1500, 1.0
  %v1502 = vrcp.pop %v1501
  %v1503 = vmul.f32 1.0, %v1502
  %v1504 = vadd.f32 %v327, %v1495
  %v1505 = vxor.u32 %v1504, 2147483648
  %v1506 = vmul.f32 %v1505, 1.442695
  %v1507 = vpow.pop %v1506
  %v1508 = vadd.f32 %v1507, 1.0
  %v1509 = vrcp.pop %v1508
  %v1510 = vmul.f32 1.0, %v1509
  %1511 = vrot.lane.b32.xlu0 %v1462, 32
  %v1512 = vpop.permute.xlu0 %1511
  %v1514 = vmul.f32 %v1503, %v1512
  %1516 = vrot.lane.b32.xlu0 %v1514, 64
  %v1517 = vpop.permute.xlu0 %1516
  %v1519 = vadd.f32 %v327, %v1517
  %v1520 = vtanh.pop %v1519
  %v1521 = vsub.f32 1.0, %v1510
  %1523 = vrot.lane.b32.xlu0 %v1520, 96
  %v1524 = vpop.permute.xlu0 %1523
  %v1526 = vmul.f32 %v1521, %v1524
  %v1527 = vmul.f32 %v1510, %v1365
  %v1528 = vadd.f32 %v1526, %v1527
  %1530 = vrot.lane.b32.xlu0 %v1492, 96
  %v1531 = vpop.permute.xlu0 %1530
  %1533 = vst.msk [vmem:[#allocation2 + $0x30] sm:$0xff] %vm273, %v1531
  %1535 = vrot.lane.b32.xlu0 %v1528, 32
  %v1536 = vpop.permute.xlu0 %1535
  %1538 = vst.msk [vmem:[#allocation2 + $0x8] sm:$0xff] %vm559, %v1536
  %v1539 = vpack.c.bf16 %v1492, %v1492
  %1541 = vrot.lane.b32.xlu0 %v1539, 96
  %v1542 = vpop.permute.xlu0 %1541
  %v1544 = vsel %vm273, %v1542, 0
  %1546 = vmatprep.subr.bf16.mxu0 0
  %1547 = vmatpush1.bf16.msra.mxu0 0
  %1548 = vmatprep.subr.bf16.mxu0 0
  %1549 = vmatpush1.bf16.msra.mxu0 0
  %1550 = vmatprep.subr.bf16.mxu0 0
  %1551 = vmatpush1.bf16.msra.mxu0 0
  %1552 = vmatprep.subr.bf16.mxu0 0
  %1553 = vmatpush1.bf16.msra.mxu0 0
  %1554 = vmatprep.subr.bf16.mxu0 0
  %1555 = vmatpush1.bf16.msra.mxu0 0
  %1556 = vmatprep.subr.bf16.mxu0 0
  %1557 = vmatpush1.bf16.msra.mxu0 0
  %1558 = vmatprep.subr.bf16.mxu0 0
  %1559 = vmatpush1.bf16.msra.mxu0 %v384
  %1560 = vmatprep.subr.bf16.mxu0 0
  %1561 = vmatpush1.bf16.msra.mxu0 %v383
  %1562 = vmatprep.subr.bf16.mxu0 0
  %1563 = vmatpush2.bf16.msra.mxu0 0
  %1564 = vmatprep.subr.bf16.mxu0 0
  %1565 = vmatpush2.bf16.msra.mxu0 0
  %1566 = vmatprep.subr.bf16.mxu0 0
  %1567 = vmatpush2.bf16.msra.mxu0 0
  %1568 = vmatprep.subr.bf16.mxu0 0
  %1569 = vmatpush2.bf16.msra.mxu0 0
  %1570 = vmatprep.subr.bf16.mxu0 0
  %1571 = vmatpush2.bf16.msra.mxu0 0
  %1572 = vmatprep.subr.bf16.mxu0 0
  %1573 = vmatpush2.bf16.msra.mxu0 0
  %1574 = vmatprep.subr.bf16.mxu0 0
  %1575 = vmatpush2.bf16.msra.mxu0 0
  %1576 = vmatprep.subr.bf16.mxu0 0
  %1577 = vmatpush2.bf16.msra.mxu0 0
  %1578 = vmatprep.mubr.bf16.mxu0 0
  %1579 = vmatmul.mubr.bf16.gmra.mxu0 %v1544
  %v1580 = vpop.f32.mrf.mxu0
  %v1581 = vadd.f32 %v373, %v1580
  %v1582 = vpop.f32.mrf.mxu0
  %v1583 = vpop.f32.mrf.mxu0
  %v1584 = vpop.f32.mrf.mxu0
  %1585 = vdwg.mxu0
  %v1586 = vpack.c.bf16 %v1528, %v1528
  %v1588 = vsel %vm273, %v1586, 0
  %1590 = vmatprep.subr.bf16.mxu0 0
  %1591 = vmatpush1.bf16.msra.mxu0 0
  %1592 = vmatprep.subr.bf16.mxu0 0
  %1593 = vmatpush1.bf16.msra.mxu0 0
  %1594 = vmatprep.subr.bf16.mxu0 0
  %1595 = vmatpush1.bf16.msra.mxu0 0
  %1596 = vmatprep.subr.bf16.mxu0 0
  %1597 = vmatpush1.bf16.msra.mxu0 0
  %1598 = vmatprep.subr.bf16.mxu0 0
  %1599 = vmatpush1.bf16.msra.mxu0 0
  %1600 = vmatprep.subr.bf16.mxu0 0
  %1601 = vmatpush1.bf16.msra.mxu0 0
  %1602 = vmatprep.subr.bf16.mxu0 0
  %1603 = vmatpush1.bf16.msra.mxu0 %v445
  %1604 = vmatprep.subr.bf16.mxu0 0
  %1605 = vmatpush1.bf16.msra.mxu0 %v444
  %1606 = vmatprep.subr.bf16.mxu0 0
  %1607 = vmatpush2.bf16.msra.mxu0 0
  %1608 = vmatprep.subr.bf16.mxu0 0
  %1609 = vmatpush2.bf16.msra.mxu0 0
  %1610 = vmatprep.subr.bf16.mxu0 0
  %1611 = vmatpush2.bf16.msra.mxu0 0
  %1612 = vmatprep.subr.bf16.mxu0 0
  %1613 = vmatpush2.bf16.msra.mxu0 0
  %1614 = vmatprep.subr.bf16.mxu0 0
  %1615 = vmatpush2.bf16.msra.mxu0 0
  %1616 = vmatprep.subr.bf16.mxu0 0
  %1617 = vmatpush2.bf16.msra.mxu0 0
  %1618 = vmatprep.subr.bf16.mxu0 0
  %1619 = vmatpush2.bf16.msra.mxu0 0
  %1620 = vmatprep.subr.bf16.mxu0 0
  %1621 = vmatpush2.bf16.msra.mxu0 0
  %1622 = vmatprep.mubr.bf16.mxu0 0
  %1623 = vmatmul.mubr.bf16.gmra.mxu0 %v1588
  %v1624 = vpop.f32.mrf.mxu0
  %v1625 = vadd.f32 %v434, %v1624
  %v1626 = vpop.f32.mrf.mxu0
  %v1627 = vpop.f32.mrf.mxu0
  %v1628 = vpop.f32.mrf.mxu0
  %1629 = vdwg.mxu0
  %v1630 = vadd.f32 %v355, %v1581
  %v1631 = vxor.u32 %v1630, 2147483648
  %v1632 = vmul.f32 %v1631, 1.442695
  %v1633 = vpow.pop %v1632
  %v1634 = vadd.f32 %v1633, 1.0
  %v1635 = vrcp.pop %v1634
  %v1636 = vmul.f32 1.0, %v1635
  %1638 = vrot.lane.b32.xlu0 %v1581, 64
  %v1639 = vpop.permute.xlu0 %1638
  %v1641 = vmul.f32 %v1636, %v1639
  %1643 = vrot.lane.b32.xlu0 %v1641, 64
  %v1644 = vpop.permute.xlu0 %1643
  %v1646 = vadd.f32 %v355, %v1644
  %v1647 = vtanh.pop %v1646
  %v1648 = vsub.f32 1.0, %v1636
  %1650 = vrot.lane.b32.xlu0 %v1647, 96
  %v1651 = vpop.permute.xlu0 %1650
  %v1653 = vmul.f32 %v1648, %v1651
  %v1654 = vmul.f32 %v1636, %v1492
  %v1655 = vadd.f32 %v1653, %v1654
  %1657 = vrot.lane.b32.xlu0 %v1625, 96
  %v1658 = vpop.permute.xlu0 %1657
  %v1660 = vadd.f32 %v321, %v1658
  %v1661 = vxor.u32 %v1660, 2147483648
  %v1662 = vmul.f32 %v1661, 1.442695
  %v1663 = vpow.pop %v1662
  %v1664 = vadd.f32 %v1663, 1.0
  %v1665 = vrcp.pop %v1664
  %v1666 = vmul.f32 1.0, %v1665
  %v1667 = vadd.f32 %v323, %v1658
  %v1668 = vxor.u32 %v1667, 2147483648
  %v1669 = vmul.f32 %v1668, 1.442695
  %v1670 = vpow.pop %v1669
  %v1671 = vadd.f32 %v1670, 1.0
  %v1672 = vrcp.pop %v1671
  %v1673 = vmul.f32 1.0, %v1672
  %1674 = vrot.lane.b32.xlu0 %v1625, 32
  %v1675 = vpop.permute.xlu0 %1674
  %v1677 = vmul.f32 %v1666, %v1675
  %1679 = vrot.lane.b32.xlu0 %v1677, 64
  %v1680 = vpop.permute.xlu0 %1679
  %v1682 = vadd.f32 %v323, %v1680
  %v1683 = vtanh.pop %v1682
  %v1684 = vsub.f32 1.0, %v1673
  %1686 = vrot.lane.b32.xlu0 %v1683, 96
  %v1687 = vpop.permute.xlu0 %1686
  %v1689 = vmul.f32 %v1684, %v1687
  %v1690 = vmul.f32 %v1673, %v1528
  %v1691 = vadd.f32 %v1689, %v1690
  %1693 = vrot.lane.b32.xlu0 %v1655, 96
  %v1694 = vpop.permute.xlu0 %1693
  %1696 = vst.msk [vmem:[#allocation2 + $0x38] sm:$0xff] %vm273, %v1694
  %1698 = vrot.lane.b32.xlu0 %v1691, 32
  %v1699 = vpop.permute.xlu0 %1698
  %1701 = vst.msk [vmem:[#allocation2] sm:$0xff] %vm559, %v1699
  %v1702 = vld [vmem:[#allocation2] sm:$0xff]
  %v1703 = vld [vmem:[#allocation2 + $0x8] sm:$0xff]
  %v1704 = vld [vmem:[#allocation2 + $0x10] sm:$0xff]
  %v1705 = vld [vmem:[#allocation2 + $0x18] sm:$0xff]
  %v1706 = vld [vmem:[#allocation2 + $0x20] sm:$0xff]
  %v1707 = vld [vmem:[#allocation2 + $0x28] sm:$0xff]
  %v1708 = vld [vmem:[#allocation2 + $0x30] sm:$0xff]
  %v1709 = vld [vmem:[#allocation2 + $0x38] sm:$0xff]
  %v1710 = vpack.c.bf16 %v1703, %v1702
  %v1711 = vpack.c.bf16 %v1705, %v1704
  %v1712 = vpack.c.bf16 %v1707, %v1706
  %v1713 = vpack.c.bf16 %v1709, %v1708
  %v1714 = vld [vmem:[%s8] sm:$0xff]
  %v1715 = vld [vmem:[%s8 + $0x8] sm:$0xff]
  %v1716 = vld [vmem:[%s8 + $0x10] sm:$0xff]
  %v1717 = vld [vmem:[%s8 + $0x18] sm:$0xff]
  %v1718 = vld [vmem:[%s8 + $0x20] sm:$0xff]
  %v1719 = vld [vmem:[%s8 + $0x28] sm:$0xff]
  %v1720 = vld [vmem:[%s8 + $0x30] sm:$0xff]
  %v1721 = vld [vmem:[%s8 + $0x38] sm:$0xff]
  %v1722 = vld [vmem:[%s11] sm:$0x3]
  %v1724 = vlaneseq
  %v1725 = vshrl.u32 %v1724, 7
  %v1726 = vsub.s32 0, %v1725
  %v1727 = vrot.slane %v1722, %v1726
  %v1728 = vlaneseq
  %v1729 = vshrl.u32 %v1728, 7
  %v1730 = vsub.s32 1, %v1729
  %v1731 = vrot.slane %v1722, %v1730
  %v1742 = vunpack.c.l.b16 %v1714
  %v1743 = vunpack.c.h.b16 %v1714
  %v1744 = vunpack.c.l.b16 %v1715
  %v1745 = vunpack.c.h.b16 %v1715
  %v1746 = vunpack.c.l.b16 %v1716
  %v1747 = vunpack.c.h.b16 %v1716
  %v1748 = vunpack.c.l.b16 %v1717
  %v1749 = vunpack.c.h.b16 %v1717
  %v1750 = vunpack.c.l.b16 %v1718
  %v1751 = vunpack.c.h.b16 %v1718
  %v1752 = vunpack.c.l.b16 %v1719
  %v1753 = vunpack.c.h.b16 %v1719
  %v1754 = vunpack.c.l.b16 %v1720
  %v1755 = vunpack.c.h.b16 %v1720
  %v1756 = vunpack.c.l.b16 %v1721
  %v1757 = vunpack.c.h.b16 %v1721
  %v1758 = vpack.c.b16 %v1744, %v1742
  %v1759 = vpack.c.b16 %v1745, %v1743
  %v1760 = vpack.c.b16 %v1748, %v1746
  %v1761 = vpack.c.b16 %v1749, %v1747
  %v1762 = vpack.c.b16 %v1752, %v1750
  %v1763 = vpack.c.b16 %v1753, %v1751
  %v1764 = vpack.c.b16 %v1756, %v1754
  %v1765 = vpack.c.b16 %v1757, %v1755
  %vm1774 = vcmask 523264
  %v1776 = vsel %vm1774, %v1710, 0
  %v1779 = vsel %vm1774, %v1711, 0
  %v1782 = vsel %vm1774, %v1712, 0
  %v1785 = vsel %vm1774, %v1713, 0
  %1787 = vmatprep.subr.bf16.mxu0 0
  %1788 = vmatpush1.bf16.msra.mxu0 0
  %1789 = vmatprep.subr.bf16.mxu0 0
  %1790 = vmatpush1.bf16.msra.mxu0 0
  %1791 = vmatprep.subr.bf16.mxu0 0
  %1792 = vmatpush1.bf16.msra.mxu0 0
  %1793 = vmatprep.subr.bf16.mxu0 0
  %1794 = vmatpush1.bf16.msra.mxu0 0
  %1795 = vmatprep.subr.bf16.mxu0 %v1765
  %1796 = vmatpush1.bf16.msra.mxu0 %v1764
  %1797 = vmatprep.subr.bf16.mxu0 %v1763
  %1798 = vmatpush1.bf16.msra.mxu0 %v1762
  %1799 = vmatprep.subr.bf16.mxu0 %v1761
  %1800 = vmatpush1.bf16.msra.mxu0 %v1760
  %1801 = vmatprep.subr.bf16.mxu0 %v1759
  %1802 = vmatpush1.bf16.msra.mxu0 %v1758
  %1803 = vmatprep.subr.bf16.mxu0 0
  %1804 = vmatpush2.bf16.msra.mxu0 0
  %1805 = vmatprep.subr.bf16.mxu0 0
  %1806 = vmatpush2.bf16.msra.mxu0 0
  %1807 = vmatprep.subr.bf16.mxu0 0
  %1808 = vmatpush2.bf16.msra.mxu0 0
  %1809 = vmatprep.subr.bf16.mxu0 0
  %1810 = vmatpush2.bf16.msra.mxu0 0
  %1811 = vmatprep.subr.bf16.mxu0 0
  %1812 = vmatpush2.bf16.msra.mxu0 0
  %1813 = vmatprep.subr.bf16.mxu0 0
  %1814 = vmatpush2.bf16.msra.mxu0 0
  %1815 = vmatprep.subr.bf16.mxu0 0
  %1816 = vmatpush2.bf16.msra.mxu0 0
  %1817 = vmatprep.subr.bf16.mxu0 0
  %1818 = vmatpush2.bf16.msra.mxu0 0
  %1819 = vmatprep.mubr.bf16.mxu0 0
  %1820 = vmatmul.mubr.bf16.gmra.mxu0 %v1776
  %v1821 = vpop.f32.mrf.mxu0
  %v1822 = vadd.f32 %v1727, %v1821
  %v1823 = vpop.f32.mrf.mxu0
  %v1824 = vadd.f32 %v1731, %v1823
  %v1825 = vpop.f32.mrf.mxu0
  %v1826 = vadd.f32 %v1727, %v1825
  %v1827 = vpop.f32.mrf.mxu0
  %v1828 = vadd.f32 %v1731, %v1827
  %1829 = vmatprep.mubr.bf16.mxu0 0
  %1830 = vmatmul.mubr.bf16.gmra.mxu0 %v1779
  %v1831 = vpop.f32.mrf.mxu0
  %v1832 = vadd.f32 %v1727, %v1831
  %v1833 = vpop.f32.mrf.mxu0
  %v1834 = vadd.f32 %v1731, %v1833
  %v1835 = vpop.f32.mrf.mxu0
  %v1836 = vadd.f32 %v1727, %v1835
  %v1837 = vpop.f32.mrf.mxu0
  %v1838 = vadd.f32 %v1731, %v1837
  %1839 = vmatprep.mubr.bf16.mxu0 0
  %1840 = vmatmul.mubr.bf16.gmra.mxu0 %v1782
  %v1841 = vpop.f32.mrf.mxu0
  %v1842 = vadd.f32 %v1727, %v1841
  %v1843 = vpop.f32.mrf.mxu0
  %v1844 = vadd.f32 %v1731, %v1843
  %v1845 = vpop.f32.mrf.mxu0
  %v1846 = vadd.f32 %v1727, %v1845
  %v1847 = vpop.f32.mrf.mxu0
  %v1848 = vadd.f32 %v1731, %v1847
  %1849 = vmatprep.mubr.bf16.mxu0 0
  %1850 = vmatmul.mubr.bf16.gmra.mxu0 %v1785
  %v1851 = vpop.f32.mrf.mxu0
  %v1852 = vadd.f32 %v1727, %v1851
  %v1853 = vpop.f32.mrf.mxu0
  %v1854 = vadd.f32 %v1731, %v1853
  %v1855 = vpop.f32.mrf.mxu0
  %v1856 = vadd.f32 %v1727, %v1855
  %v1857 = vpop.f32.mrf.mxu0
  %v1858 = vadd.f32 %v1731, %v1857
  %1859 = vdwg.mxu0
  %v1860 = vld [vmem:[%s9] sm:$0xf]
  %v1861 = vld [vmem:[%s9 + $0x4] sm:$0xf]
  %v1862 = vld [vmem:[%s9 + $0x8] sm:$0xf]
  %v1863 = vld [vmem:[%s9 + $0xc] sm:$0xf]
  %v1864 = vld [vmem:[%s10] sm:$0xf]
  %v1865 = vld [vmem:[%s10 + $0x4] sm:$0xf]
  %v1866 = vld [vmem:[%s10 + $0x8] sm:$0xf]
  %v1867 = vld [vmem:[%s10 + $0xc] sm:$0xf]
  %v1868 = vld [vmem:[%s12] sm:$0x1]
  %v1869 = vld [vmem:[%s13] sm:$0x1]
  %v1871 = vlaneseq
  %v1872 = vshrl.u32 %v1871, 7
  %v1873 = vsub.s32 0, %v1872
  %v1874 = vrot.slane %v1868, %v1873
  %v1880 = vunpack.c.l.b16 %v1860
  %v1881 = vunpack.c.l.b16 %v1861
  %v1882 = vunpack.c.l.b16 %v1862
  %v1883 = vunpack.c.l.b16 %v1863
  %v1884 = vpack.c.b16 %v1881, %v1880
  %v1885 = vpack.c.b16 %v1883, %v1882
  %1888 = vmatprep.subr.bf16.mxu0 0
  %1889 = vmatpush1.bf16.msra.mxu0 0
  %1890 = vmatprep.subr.bf16.mxu0 0
  %1891 = vmatpush1.bf16.msra.mxu0 0
  %1892 = vmatprep.subr.bf16.mxu0 0
  %1893 = vmatpush1.bf16.msra.mxu0 0
  %1894 = vmatprep.subr.bf16.mxu0 0
  %1895 = vmatpush1.bf16.msra.mxu0 0
  %1896 = vmatprep.subr.bf16.mxu0 0
  %1897 = vmatpush1.bf16.msra.mxu0 0
  %1898 = vmatprep.subr.bf16.mxu0 0
  %1899 = vmatpush1.bf16.msra.mxu0 0
  %1900 = vmatprep.subr.bf16.mxu0 0
  %1901 = vmatpush1.bf16.msra.mxu0 %v1885
  %1902 = vmatprep.subr.bf16.mxu0 0
  %1903 = vmatpush1.bf16.msra.mxu0 %v1884
  %1904 = vmatprep.subr.bf16.mxu0 0
  %1905 = vmatpush2.bf16.msra.mxu0 0
  %1906 = vmatprep.subr.bf16.mxu0 0
  %1907 = vmatpush2.bf16.msra.mxu0 0
  %1908 = vmatprep.subr.bf16.mxu0 0
  %1909 = vmatpush2.bf16.msra.mxu0 0
  %1910 = vmatprep.subr.bf16.mxu0 0
  %1911 = vmatpush2.bf16.msra.mxu0 0
  %1912 = vmatprep.subr.bf16.mxu0 0
  %1913 = vmatpush2.bf16.msra.mxu0 0
  %1914 = vmatprep.subr.bf16.mxu0 0
  %1915 = vmatpush2.bf16.msra.mxu0 0
  %1916 = vmatprep.subr.bf16.mxu0 0
  %1917 = vmatpush2.bf16.msra.mxu0 0
  %1918 = vmatprep.subr.bf16.mxu0 0
  %1919 = vmatpush2.bf16.msra.mxu0 0
  %1920 = vmatprep.mubr.bf16.mxu0 0
  %1921 = vmatmul.mubr.bf16.gmra.mxu0 %v388
  %v1922 = vpop.f32.mrf.mxu0
  %v1923 = vadd.f32 %v1874, %v1922
  %v1924 = vpop.f32.mrf.mxu0
  %v1925 = vpop.f32.mrf.mxu0
  %v1926 = vpop.f32.mrf.mxu0
  %1927 = vdwg.mxu0
  %v1929 = vlaneseq
  %v1930 = vshrl.u32 %v1929, 7
  %v1931 = vsub.s32 0, %v1930
  %v1932 = vrot.slane %v1869, %v1931
  %v1938 = vunpack.c.l.b16 %v1864
  %v1939 = vunpack.c.l.b16 %v1865
  %v1940 = vunpack.c.l.b16 %v1866
  %v1941 = vunpack.c.l.b16 %v1867
  %v1942 = vpack.c.b16 %v1939, %v1938
  %v1943 = vpack.c.b16 %v1941, %v1940
  %1946 = vmatprep.subr.bf16.mxu0 0
  %1947 = vmatpush1.bf16.msra.mxu0 0
  %1948 = vmatprep.subr.bf16.mxu0 0
  %1949 = vmatpush1.bf16.msra.mxu0 0
  %1950 = vmatprep.subr.bf16.mxu0 0
  %1951 = vmatpush1.bf16.msra.mxu0 0
  %1952 = vmatprep.subr.bf16.mxu0 0
  %1953 = vmatpush1.bf16.msra.mxu0 0
  %1954 = vmatprep.subr.bf16.mxu0 0
  %1955 = vmatpush1.bf16.msra.mxu0 0
  %1956 = vmatprep.subr.bf16.mxu0 0
  %1957 = vmatpush1.bf16.msra.mxu0 0
  %1958 = vmatprep.subr.bf16.mxu0 0
  %1959 = vmatpush1.bf16.msra.mxu0 %v1943
  %1960 = vmatprep.subr.bf16.mxu0 0
  %1961 = vmatpush1.bf16.msra.mxu0 %v1942
  %1962 = vmatprep.subr.bf16.mxu0 0
  %1963 = vmatpush2.bf16.msra.mxu0 0
  %1964 = vmatprep.subr.bf16.mxu0 0
  %1965 = vmatpush2.bf16.msra.mxu0 0
  %1966 = vmatprep.subr.bf16.mxu0 0
  %1967 = vmatpush2.bf16.msra.mxu0 0
  %1968 = vmatprep.subr.bf16.mxu0 0
  %1969 = vmatpush2.bf16.msra.mxu0 0
  %1970 = vmatprep.subr.bf16.mxu0 0
  %1971 = vmatpush2.bf16.msra.mxu0 0
  %1972 = vmatprep.subr.bf16.mxu0 0
  %1973 = vmatpush2.bf16.msra.mxu0 0
  %1974 = vmatprep.subr.bf16.mxu0 0
  %1975 = vmatpush2.bf16.msra.mxu0 0
  %1976 = vmatprep.subr.bf16.mxu0 0
  %1977 = vmatpush2.bf16.msra.mxu0 0
  %1978 = vmatprep.mubr.bf16.mxu0 0
  %1979 = vmatmul.mubr.bf16.gmra.mxu0 %v388
  %v1980 = vpop.f32.mrf.mxu0
  %v1981 = vadd.f32 %v1932, %v1980
  %v1982 = vpop.f32.mrf.mxu0
  %v1983 = vpop.f32.mrf.mxu0
  %v1984 = vpop.f32.mrf.mxu0
  %1985 = vdwg.mxu0
  %v1986 = vadd.f32 %v1822, %v1923
  %v1987 = vxor.u32 %v1986, 2147483648
  %v1988 = vmul.f32 %v1987, 1.442695
  %v1989 = vpow.pop %v1988
  %v1990 = vadd.f32 %v1989, 1.0
  %v1991 = vrcp.pop %v1990
  %v1992 = vmul.f32 1.0, %v1991
  %1994 = vrot.lane.b32.xlu0 %v1923, 64
  %v1995 = vpop.permute.xlu0 %1994
  %v1997 = vmul.f32 %v1992, %v1995
  %1999 = vrot.lane.b32.xlu0 %v1997, 64
  %v2000 = vpop.permute.xlu0 %1999
  %v2002 = vadd.f32 %v1822, %v2000
  %v2003 = vtanh.pop %v2002
  %v2004 = vsub.f32 1.0, %v1992
  %2006 = vrot.lane.b32.xlu0 %v2003, 96
  %v2007 = vpop.permute.xlu0 %2006
  %v2009 = vmul.f32 %v2004, %v2007
  %v2010 = vmul.f32 %v1992, 0.0
  %v2011 = vadd.f32 %v2009, %v2010
  %2013 = vrot.lane.b32.xlu0 %v1981, 96
  %v2014 = vpop.permute.xlu0 %2013
  %v2016 = vadd.f32 %v1856, %v2014
  %v2017 = vxor.u32 %v2016, 2147483648
  %v2018 = vmul.f32 %v2017, 1.442695
  %v2019 = vpow.pop %v2018
  %v2020 = vadd.f32 %v2019, 1.0
  %v2021 = vrcp.pop %v2020
  %v2022 = vmul.f32 1.0, %v2021
  %v2023 = vadd.f32 %v1858, %v2014
  %v2024 = vxor.u32 %v2023, 2147483648
  %v2025 = vmul.f32 %v2024, 1.442695
  %v2026 = vpow.pop %v2025
  %v2027 = vadd.f32 %v2026, 1.0
  %v2028 = vrcp.pop %v2027
  %v2029 = vmul.f32 1.0, %v2028
  %2030 = vrot.lane.b32.xlu0 %v1981, 32
  %v2031 = vpop.permute.xlu0 %2030
  %v2033 = vmul.f32 %v2022, %v2031
  %2035 = vrot.lane.b32.xlu0 %v2033, 64
  %v2036 = vpop.permute.xlu0 %2035
  %v2038 = vadd.f32 %v1858, %v2036
  %v2039 = vtanh.pop %v2038
  %v2040 = vsub.f32 1.0, %v2029
  %2042 = vrot.lane.b32.xlu0 %v2039, 96
  %v2043 = vpop.permute.xlu0 %2042
  %v2045 = vmul.f32 %v2040, %v2043
  %v2046 = vmul.f32 %v2029, 0.0
  %v2047 = vadd.f32 %v2045, %v2046
  %2049 = vrot.lane.b32.xlu0 %v2011, 96
  %v2050 = vpop.permute.xlu0 %2049
  %2052 = vst.msk [vmem:[#allocation2] sm:$0xff] %vm273, %v2050
  %2054 = vrot.lane.b32.xlu0 %v2047, 32
  %v2055 = vpop.permute.xlu0 %2054
  %2057 = vst.msk [vmem:[#allocation2 + $0x38] sm:$0xff] %vm559, %v2055
  %v2058 = vpack.c.bf16 %v2011, %v2011
  %2060 = vrot.lane.b32.xlu0 %v2058, 96
  %v2061 = vpop.permute.xlu0 %2060
  %v2063 = vsel %vm273, %v2061, 0
  %2065 = vmatprep.subr.bf16.mxu0 0
  %2066 = vmatpush1.bf16.msra.mxu0 0
  %2067 = vmatprep.subr.bf16.mxu0 0
  %2068 = vmatpush1.bf16.msra.mxu0 0
  %2069 = vmatprep.subr.bf16.mxu0 0
  %2070 = vmatpush1.bf16.msra.mxu0 0
  %2071 = vmatprep.subr.bf16.mxu0 0
  %2072 = vmatpush1.bf16.msra.mxu0 0
  %2073 = vmatprep.subr.bf16.mxu0 0
  %2074 = vmatpush1.bf16.msra.mxu0 0
  %2075 = vmatprep.subr.bf16.mxu0 0
  %2076 = vmatpush1.bf16.msra.mxu0 0
  %2077 = vmatprep.subr.bf16.mxu0 0
  %2078 = vmatpush1.bf16.msra.mxu0 %v1885
  %2079 = vmatprep.subr.bf16.mxu0 0
  %2080 = vmatpush1.bf16.msra.mxu0 %v1884
  %2081 = vmatprep.subr.bf16.mxu0 0
  %2082 = vmatpush2.bf16.msra.mxu0 0
  %2083 = vmatprep.subr.bf16.mxu0 0
  %2084 = vmatpush2.bf16.msra.mxu0 0
  %2085 = vmatprep.subr.bf16.mxu0 0
  %2086 = vmatpush2.bf16.msra.mxu0 0
  %2087 = vmatprep.subr.bf16.mxu0 0
  %2088 = vmatpush2.bf16.msra.mxu0 0
  %2089 = vmatprep.subr.bf16.mxu0 0
  %2090 = vmatpush2.bf16.msra.mxu0 0
  %2091 = vmatprep.subr.bf16.mxu0 0
  %2092 = vmatpush2.bf16.msra.mxu0 0
  %2093 = vmatprep.subr.bf16.mxu0 0
  %2094 = vmatpush2.bf16.msra.mxu0 0
  %2095 = vmatprep.subr.bf16.mxu0 0
  %2096 = vmatpush2.bf16.msra.mxu0 0
  %2097 = vmatprep.mubr.bf16.mxu0 0
  %2098 = vmatmul.mubr.bf16.gmra.mxu0 %v2063
  %v2099 = vpop.f32.mrf.mxu0
  %v2100 = vadd.f32 %v1874, %v2099
  %v2101 = vpop.f32.mrf.mxu0
  %v2102 = vpop.f32.mrf.mxu0
  %v2103 = vpop.f32.mrf.mxu0
  %2104 = vdwg.mxu0
  %v2105 = vpack.c.bf16 %v2047, %v2047
  %v2107 = vsel %vm273, %v2105, 0
  %2109 = vmatprep.subr.bf16.mxu0 0
  %2110 = vmatpush1.bf16.msra.mxu0 0
  %2111 = vmatprep.subr.bf16.mxu0 0
  %2112 = vmatpush1.bf16.msra.mxu0 0
  %2113 = vmatprep.subr.bf16.mxu0 0
  %2114 = vmatpush1.bf16.msra.mxu0 0
  %2115 = vmatprep.subr.bf16.mxu0 0
  %2116 = vmatpush1.bf16.msra.mxu0 0
  %2117 = vmatprep.subr.bf16.mxu0 0
  %2118 = vmatpush1.bf16.msra.mxu0 0
  %2119 = vmatprep.subr.bf16.mxu0 0
  %2120 = vmatpush1.bf16.msra.mxu0 0
  %2121 = vmatprep.subr.bf16.mxu0 0
  %2122 = vmatpush1.bf16.msra.mxu0 %v1943
  %2123 = vmatprep.subr.bf16.mxu0 0
  %2124 = vmatpush1.bf16.msra.mxu0 %v1942
  %2125 = vmatprep.subr.bf16.mxu0 0
  %2126 = vmatpush2.bf16.msra.mxu0 0
  %2127 = vmatprep.subr.bf16.mxu0 0
  %2128 = vmatpush2.bf16.msra.mxu0 0
  %2129 = vmatprep.subr.bf16.mxu0 0
  %2130 = vmatpush2.bf16.msra.mxu0 0
  %2131 = vmatprep.subr.bf16.mxu0 0
  %2132 = vmatpush2.bf16.msra.mxu0 0
  %2133 = vmatprep.subr.bf16.mxu0 0
  %2134 = vmatpush2.bf16.msra.mxu0 0
  %2135 = vmatprep.subr.bf16.mxu0 0
  %2136 = vmatpush2.bf16.msra.mxu0 0
  %2137 = vmatprep.subr.bf16.mxu0 0
  %2138 = vmatpush2.bf16.msra.mxu0 0
  %2139 = vmatprep.subr.bf16.mxu0 0
  %2140 = vmatpush2.bf16.msra.mxu0 0
  %2141 = vmatprep.mubr.bf16.mxu0 0
  %2142 = vmatmul.mubr.bf16.gmra.mxu0 %v2107
  %v2143 = vpop.f32.mrf.mxu0
  %v2144 = vadd.f32 %v1932, %v2143
  %v2145 = vpop.f32.mrf.mxu0
  %v2146 = vpop.f32.mrf.mxu0
  %v2147 = vpop.f32.mrf.mxu0
  %2148 = vdwg.mxu0
  %v2149 = vadd.f32 %v1826, %v2100
  %v2150 = vxor.u32 %v2149, 2147483648
  %v2151 = vmul.f32 %v2150, 1.442695
  %v2152 = vpow.pop %v2151
  %v2153 = vadd.f32 %v2152, 1.0
  %v2154 = vrcp.pop %v2153
  %v2155 = vmul.f32 1.0, %v2154
  %2157 = vrot.lane.b32.xlu0 %v2100, 64
  %v2158 = vpop.permute.xlu0 %2157
  %v2160 = vmul.f32 %v2155, %v2158
  %2162 = vrot.lane.b32.xlu0 %v2160, 64
  %v2163 = vpop.permute.xlu0 %2162
  %v2165 = vadd.f32 %v1826, %v2163
  %v2166 = vtanh.pop %v2165
  %v2167 = vsub.f32 1.0, %v2155
  %2169 = vrot.lane.b32.xlu0 %v2166, 96
  %v2170 = vpop.permute.xlu0 %2169
  %v2172 = vmul.f32 %v2167, %v2170
  %v2173 = vmul.f32 %v2155, %v2011
  %v2174 = vadd.f32 %v2172, %v2173
  %2176 = vrot.lane.b32.xlu0 %v2144, 96
  %v2177 = vpop.permute.xlu0 %2176
  %v2179 = vadd.f32 %v1852, %v2177
  %v2180 = vxor.u32 %v2179, 2147483648
  %v2181 = vmul.f32 %v2180, 1.442695
  %v2182 = vpow.pop %v2181
  %v2183 = vadd.f32 %v2182, 1.0
  %v2184 = vrcp.pop %v2183
  %v2185 = vmul.f32 1.0, %v2184
  %v2186 = vadd.f32 %v1854, %v2177
  %v2187 = vxor.u32 %v2186, 2147483648
  %v2188 = vmul.f32 %v2187, 1.442695
  %v2189 = vpow.pop %v2188
  %v2190 = vadd.f32 %v2189, 1.0
  %v2191 = vrcp.pop %v2190
  %v2192 = vmul.f32 1.0, %v2191
  %2193 = vrot.lane.b32.xlu0 %v2144, 32
  %v2194 = vpop.permute.xlu0 %2193
  %v2196 = vmul.f32 %v2185, %v2194
  %2198 = vrot.lane.b32.xlu0 %v2196, 64
  %v2199 = vpop.permute.xlu0 %2198
  %v2201 = vadd.f32 %v1854, %v2199
  %v2202 = vtanh.pop %v2201
  %v2203 = vsub.f32 1.0, %v2192
  %2205 = vrot.lane.b32.xlu0 %v2202, 96
  %v2206 = vpop.permute.xlu0 %2205
  %v2208 = vmul.f32 %v2203, %v2206
  %v2209 = vmul.f32 %v2192, %v2047
  %v2210 = vadd.f32 %v2208, %v2209
  %2212 = vrot.lane.b32.xlu0 %v2174, 96
  %v2213 = vpop.permute.xlu0 %2212
  %2215 = vst.msk [vmem:[#allocation2 + $0x8] sm:$0xff] %vm273, %v2213
  %2217 = vrot.lane.b32.xlu0 %v2210, 32
  %v2218 = vpop.permute.xlu0 %2217
  %2220 = vst.msk [vmem:[#allocation2 + $0x30] sm:$0xff] %vm559, %v2218
  %v2221 = vpack.c.bf16 %v2174, %v2174
  %2223 = vrot.lane.b32.xlu0 %v2221, 96
  %v2224 = vpop.permute.xlu0 %2223
  %v2226 = vsel %vm273, %v2224, 0
  %2228 = vmatprep.subr.bf16.mxu0 0
  %2229 = vmatpush1.bf16.msra.mxu0 0
  %2230 = vmatprep.subr.bf16.mxu0 0
  %2231 = vmatpush1.bf16.msra.mxu0 0
  %2232 = vmatprep.subr.bf16.mxu0 0
  %2233 = vmatpush1.bf16.msra.mxu0 0
  %2234 = vmatprep.subr.bf16.mxu0 0
  %2235 = vmatpush1.bf16.msra.mxu0 0
  %2236 = vmatprep.subr.bf16.mxu0 0
  %2237 = vmatpush1.bf16.msra.mxu0 0
  %2238 = vmatprep.subr.bf16.mxu0 0
  %2239 = vmatpush1.bf16.msra.mxu0 0
  %2240 = vmatprep.subr.bf16.mxu0 0
  %2241 = vmatpush1.bf16.msra.mxu0 %v1885
  %2242 = vmatprep.subr.bf16.mxu0 0
  %2243 = vmatpush1.bf16.msra.mxu0 %v1884
  %2244 = vmatprep.subr.bf16.mxu0 0
  %2245 = vmatpush2.bf16.msra.mxu0 0
  %2246 = vmatprep.subr.bf16.mxu0 0
  %2247 = vmatpush2.bf16.msra.mxu0 0
  %2248 = vmatprep.subr.bf16.mxu0 0
  %2249 = vmatpush2.bf16.msra.mxu0 0
  %2250 = vmatprep.subr.bf16.mxu0 0
  %2251 = vmatpush2.bf16.msra.mxu0 0
  %2252 = vmatprep.subr.bf16.mxu0 0
  %2253 = vmatpush2.bf16.msra.mxu0 0
  %2254 = vmatprep.subr.bf16.mxu0 0
  %2255 = vmatpush2.bf16.msra.mxu0 0
  %2256 = vmatprep.subr.bf16.mxu0 0
  %2257 = vmatpush2.bf16.msra.mxu0 0
  %2258 = vmatprep.subr.bf16.mxu0 0
  %2259 = vmatpush2.bf16.msra.mxu0 0
  %2260 = vmatprep.mubr.bf16.mxu0 0
  %2261 = vmatmul.mubr.bf16.gmra.mxu0 %v2226
  %v2262 = vpop.f32.mrf.mxu0
  %v2263 = vadd.f32 %v1874, %v2262
  %v2264 = vpop.f32.mrf.mxu0
  %v2265 = vpop.f32.mrf.mxu0
  %v2266 = vpop.f32.mrf.mxu0
  %2267 = vdwg.mxu0
  %v2268 = vpack.c.bf16 %v2210, %v2210
  %v2270 = vsel %vm273, %v2268, 0
  %2272 = vmatprep.subr.bf16.mxu0 0
  %2273 = vmatpush1.bf16.msra.mxu0 0
  %2274 = vmatprep.subr.bf16.mxu0 0
  %2275 = vmatpush1.bf16.msra.mxu0 0
  %2276 = vmatprep.subr.bf16.mxu0 0
  %2277 = vmatpush1.bf16.msra.mxu0 0
  %2278 = vmatprep.subr.bf16.mxu0 0
  %2279 = vmatpush1.bf16.msra.mxu0 0
  %2280 = vmatprep.subr.bf16.mxu0 0
  %2281 = vmatpush1.bf16.msra.mxu0 0
  %2282 = vmatprep.subr.bf16.mxu0 0
  %2283 = vmatpush1.bf16.msra.mxu0 0
  %2284 = vmatprep.subr.bf16.mxu0 0
  %2285 = vmatpush1.bf16.msra.mxu0 %v1943
  %2286 = vmatprep.subr.bf16.mxu0 0
  %2287 = vmatpush1.bf16.msra.mxu0 %v1942
  %2288 = vmatprep.subr.bf16.mxu0 0
  %2289 = vmatpush2.bf16.msra.mxu0 0
  %2290 = vmatprep.subr.bf16.mxu0 0
  %2291 = vmatpush2.bf16.msra.mxu0 0
  %2292 = vmatprep.subr.bf16.mxu0 0
  %2293 = vmatpush2.bf16.msra.mxu0 0
  %2294 = vmatprep.subr.bf16.mxu0 0
  %2295 = vmatpush2.bf16.msra.mxu0 0
  %2296 = vmatprep.subr.bf16.mxu0 0
  %2297 = vmatpush2.bf16.msra.mxu0 0
  %2298 = vmatprep.subr.bf16.mxu0 0
  %2299 = vmatpush2.bf16.msra.mxu0 0
  %2300 = vmatprep.subr.bf16.mxu0 0
  %2301 = vmatpush2.bf16.msra.mxu0 0
  %2302 = vmatprep.subr.bf16.mxu0 0
  %2303 = vmatpush2.bf16.msra.mxu0 0
  %2304 = vmatprep.mubr.bf16.mxu0 0
  %2305 = vmatmul.mubr.bf16.gmra.mxu0 %v2270
  %v2306 = vpop.f32.mrf.mxu0
  %v2307 = vadd.f32 %v1932, %v2306
  %v2308 = vpop.f32.mrf.mxu0
  %v2309 = vpop.f32.mrf.mxu0
  %v2310 = vpop.f32.mrf.mxu0
  %2311 = vdwg.mxu0
  %v2312 = vadd.f32 %v1832, %v2263
  %v2313 = vxor.u32 %v2312, 2147483648
  %v2314 = vmul.f32 %v2313, 1.442695
  %v2315 = vpow.pop %v2314
  %v2316 = vadd.f32 %v2315, 1.0
  %v2317 = vrcp.pop %v2316
  %v2318 = vmul.f32 1.0, %v2317
  %2320 = vrot.lane.b32.xlu0 %v2263, 64
  %v2321 = vpop.permute.xlu0 %2320
  %v2323 = vmul.f32 %v2318, %v2321
  %2325 = vrot.lane.b32.xlu0 %v2323, 64
  %v2326 = vpop.permute.xlu0 %2325
  %v2328 = vadd.f32 %v1832, %v2326
  %v2329 = vtanh.pop %v2328
  %v2330 = vsub.f32 1.0, %v2318
  %2332 = vrot.lane.b32.xlu0 %v2329, 96
  %v2333 = vpop.permute.xlu0 %2332
  %v2335 = vmul.f32 %v2330, %v2333
  %v2336 = vmul.f32 %v2318, %v2174
  %v2337 = vadd.f32 %v2335, %v2336
  %2339 = vrot.lane.b32.xlu0 %v2307, 96
  %v2340 = vpop.permute.xlu0 %2339
  %v2342 = vadd.f32 %v1846, %v2340
  %v2343 = vxor.u32 %v2342, 2147483648
  %v2344 = vmul.f32 %v2343, 1.442695
  %v2345 = vpow.pop %v2344
  %v2346 = vadd.f32 %v2345, 1.0
  %v2347 = vrcp.pop %v2346
  %v2348 = vmul.f32 1.0, %v2347
  %v2349 = vadd.f32 %v1848, %v2340
  %v2350 = vxor.u32 %v2349, 2147483648
  %v2351 = vmul.f32 %v2350, 1.442695
  %v2352 = vpow.pop %v2351
  %v2353 = vadd.f32 %v2352, 1.0
  %v2354 = vrcp.pop %v2353
  %v2355 = vmul.f32 1.0, %v2354
  %2356 = vrot.lane.b32.xlu0 %v2307, 32
  %v2357 = vpop.permute.xlu0 %2356
  %v2359 = vmul.f32 %v2348, %v2357
  %2361 = vrot.lane.b32.xlu0 %v2359, 64
  %v2362 = vpop.permute.xlu0 %2361
  %v2364 = vadd.f32 %v1848, %v2362
  %v2365 = vtanh.pop %v2364
  %v2366 = vsub.f32 1.0, %v2355
  %2368 = vrot.lane.b32.xlu0 %v2365, 96
  %v2369 = vpop.permute.xlu0 %2368
  %v2371 = vmul.f32 %v2366, %v2369
  %v2372 = vmul.f32 %v2355, %v2210
  %v2373 = vadd.f32 %v2371, %v2372
  %2375 = vrot.lane.b32.xlu0 %v2337, 96
  %v2376 = vpop.permute.xlu0 %2375
  %2378 = vst.msk [vmem:[#allocation2 + $0x10] sm:$0xff] %vm273, %v2376
  %2380 = vrot.lane.b32.xlu0 %v2373, 32
  %v2381 = vpop.permute.xlu0 %2380
  %2383 = vst.msk [vmem:[#allocation2 + $0x28] sm:$0xff] %vm559, %v2381
  %v2384 = vpack.c.bf16 %v2337, %v2337
  %2386 = vrot.lane.b32.xlu0 %v2384, 96
  %v2387 = vpop.permute.xlu0 %2386
  %v2389 = vsel %vm273, %v2387, 0
  %2391 = vmatprep.subr.bf16.mxu0 0
  %2392 = vmatpush1.bf16.msra.mxu0 0
  %2393 = vmatprep.subr.bf16.mxu0 0
  %2394 = vmatpush1.bf16.msra.mxu0 0
  %2395 = vmatprep.subr.bf16.mxu0 0
  %2396 = vmatpush1.bf16.msra.mxu0 0
  %2397 = vmatprep.subr.bf16.mxu0 0
  %2398 = vmatpush1.bf16.msra.mxu0 0
  %2399 = vmatprep.subr.bf16.mxu0 0
  %2400 = vmatpush1.bf16.msra.mxu0 0
  %2401 = vmatprep.subr.bf16.mxu0 0
  %2402 = vmatpush1.bf16.msra.mxu0 0
  %2403 = vmatprep.subr.bf16.mxu0 0
  %2404 = vmatpush1.bf16.msra.mxu0 %v1885
  %2405 = vmatprep.subr.bf16.mxu0 0
  %2406 = vmatpush1.bf16.msra.mxu0 %v1884
  %2407 = vmatprep.subr.bf16.mxu0 0
  %2408 = vmatpush2.bf16.msra.mxu0 0
  %2409 = vmatprep.subr.bf16.mxu0 0
  %2410 = vmatpush2.bf16.msra.mxu0 0
  %2411 = vmatprep.subr.bf16.mxu0 0
  %2412 = vmatpush2.bf16.msra.mxu0 0
  %2413 = vmatprep.subr.bf16.mxu0 0
  %2414 = vmatpush2.bf16.msra.mxu0 0
  %2415 = vmatprep.subr.bf16.mxu0 0
  %2416 = vmatpush2.bf16.msra.mxu0 0
  %2417 = vmatprep.subr.bf16.mxu0 0
  %2418 = vmatpush2.bf16.msra.mxu0 0
  %2419 = vmatprep.subr.bf16.mxu0 0
  %2420 = vmatpush2.bf16.msra.mxu0 0
  %2421 = vmatprep.subr.bf16.mxu0 0
  %2422 = vmatpush2.bf16.msra.mxu0 0
  %2423 = vmatprep.mubr.bf16.mxu0 0
  %2424 = vmatmul.mubr.bf16.gmra.mxu0 %v2389
  %v2425 = vpop.f32.mrf.mxu0
  %v2426 = vadd.f32 %v1874, %v2425
  %v2427 = vpop.f32.mrf.mxu0
  %v2428 = vpop.f32.mrf.mxu0
  %v2429 = vpop.f32.mrf.mxu0
  %2430 = vdwg.mxu0
  %v2431 = vpack.c.bf16 %v2373, %v2373
  %v2433 = vsel %vm273, %v2431, 0
  %2435 = vmatprep.subr.bf16.mxu0 0
  %2436 = vmatpush1.bf16.msra.mxu0 0
  %2437 = vmatprep.subr.bf16.mxu0 0
  %2438 = vmatpush1.bf16.msra.mxu0 0
  %2439 = vmatprep.subr.bf16.mxu0 0
  %2440 = vmatpush1.bf16.msra.mxu0 0
  %2441 = vmatprep.subr.bf16.mxu0 0
  %2442 = vmatpush1.bf16.msra.mxu0 0
  %2443 = vmatprep.subr.bf16.mxu0 0
  %2444 = vmatpush1.bf16.msra.mxu0 0
  %2445 = vmatprep.subr.bf16.mxu0 0
  %2446 = vmatpush1.bf16.msra.mxu0 0
  %2447 = vmatprep.subr.bf16.mxu0 0
  %2448 = vmatpush1.bf16.msra.mxu0 %v1943
  %2449 = vmatprep.subr.bf16.mxu0 0
  %2450 = vmatpush1.bf16.msra.mxu0 %v1942
  %2451 = vmatprep.subr.bf16.mxu0 0
  %2452 = vmatpush2.bf16.msra.mxu0 0
  %2453 = vmatprep.subr.bf16.mxu0 0
  %2454 = vmatpush2.bf16.msra.mxu0 0
  %2455 = vmatprep.subr.bf16.mxu0 0
  %2456 = vmatpush2.bf16.msra.mxu0 0
  %2457 = vmatprep.subr.bf16.mxu0 0
  %2458 = vmatpush2.bf16.msra.mxu0 0
  %2459 = vmatprep.subr.bf16.mxu0 0
  %2460 = vmatpush2.bf16.msra.mxu0 0
  %2461 = vmatprep.subr.bf16.mxu0 0
  %2462 = vmatpush2.bf16.msra.mxu0 0
  %2463 = vmatprep.subr.bf16.mxu0 0
  %2464 = vmatpush2.bf16.msra.mxu0 0
  %2465 = vmatprep.subr.bf16.mxu0 0
  %2466 = vmatpush2.bf16.msra.mxu0 0
  %2467 = vmatprep.mubr.bf16.mxu0 0
  %2468 = vmatmul.mubr.bf16.gmra.mxu0 %v2433
  %v2469 = vpop.f32.mrf.mxu0
  %v2470 = vadd.f32 %v1932, %v2469
  %v2471 = vpop.f32.mrf.mxu0
  %v2472 = vpop.f32.mrf.mxu0
  %v2473 = vpop.f32.mrf.mxu0
  %2474 = vdwg.mxu0
  %v2475 = vadd.f32 %v1836, %v2426
  %v2476 = vxor.u32 %v2475, 2147483648
  %v2477 = vmul.f32 %v2476, 1.442695
  %v2478 = vpow.pop %v2477
  %v2479 = vadd.f32 %v2478, 1.0
  %v2480 = vrcp.pop %v2479
  %v2481 = vmul.f32 1.0, %v2480
  %2483 = vrot.lane.b32.xlu0 %v2426, 64
  %v2484 = vpop.permute.xlu0 %2483
  %v2486 = vmul.f32 %v2481, %v2484
  %2488 = vrot.lane.b32.xlu0 %v2486, 64
  %v2489 = vpop.permute.xlu0 %2488
  %v2491 = vadd.f32 %v1836, %v2489
  %v2492 = vtanh.pop %v2491
  %v2493 = vsub.f32 1.0, %v2481
  %2495 = vrot.lane.b32.xlu0 %v2492, 96
  %v2496 = vpop.permute.xlu0 %2495
  %v2498 = vmul.f32 %v2493, %v2496
  %v2499 = vmul.f32 %v2481, %v2337
  %v2500 = vadd.f32 %v2498, %v2499
  %2502 = vrot.lane.b32.xlu0 %v2470, 96
  %v2503 = vpop.permute.xlu0 %2502
  %v2505 = vadd.f32 %v1842, %v2503
  %v2506 = vxor.u32 %v2505, 2147483648
  %v2507 = vmul.f32 %v2506, 1.442695
  %v2508 = vpow.pop %v2507
  %v2509 = vadd.f32 %v2508, 1.0
  %v2510 = vrcp.pop %v2509
  %v2511 = vmul.f32 1.0, %v2510
  %v2512 = vadd.f32 %v1844, %v2503
  %v2513 = vxor.u32 %v2512, 2147483648
  %v2514 = vmul.f32 %v2513, 1.442695
  %v2515 = vpow.pop %v2514
  %v2516 = vadd.f32 %v2515, 1.0
  %v2517 = vrcp.pop %v2516
  %v2518 = vmul.f32 1.0, %v2517
  %2519 = vrot.lane.b32.xlu0 %v2470, 32
  %v2520 = vpop.permute.xlu0 %2519
  %v2522 = vmul.f32 %v2511, %v2520
  %2524 = vrot.lane.b32.xlu0 %v2522, 64
  %v2525 = vpop.permute.xlu0 %2524
  %v2527 = vadd.f32 %v1844, %v2525
  %v2528 = vtanh.pop %v2527
  %v2529 = vsub.f32 1.0, %v2518
  %2531 = vrot.lane.b32.xlu0 %v2528, 96
  %v2532 = vpop.permute.xlu0 %2531
  %v2534 = vmul.f32 %v2529, %v2532
  %v2535 = vmul.f32 %v2518, %v2373
  %v2536 = vadd.f32 %v2534, %v2535
  %2538 = vrot.lane.b32.xlu0 %v2500, 96
  %v2539 = vpop.permute.xlu0 %2538
  %2541 = vst.msk [vmem:[#allocation2 + $0x18] sm:$0xff] %vm273, %v2539
  %2543 = vrot.lane.b32.xlu0 %v2536, 32
  %v2544 = vpop.permute.xlu0 %2543
  %2546 = vst.msk [vmem:[#allocation2 + $0x20] sm:$0xff] %vm559, %v2544
  %v2547 = vpack.c.bf16 %v2500, %v2500
  %2549 = vrot.lane.b32.xlu0 %v2547, 96
  %v2550 = vpop.permute.xlu0 %2549
  %v2552 = vsel %vm273, %v2550, 0
  %2554 = vmatprep.subr.bf16.mxu0 0
  %2555 = vmatpush1.bf16.msra.mxu0 0
  %2556 = vmatprep.subr.bf16.mxu0 0
  %2557 = vmatpush1.bf16.msra.mxu0 0
  %2558 = vmatprep.subr.bf16.mxu0 0
  %2559 = vmatpush1.bf16.msra.mxu0 0
  %2560 = vmatprep.subr.bf16.mxu0 0
  %2561 = vmatpush1.bf16.msra.mxu0 0
  %2562 = vmatprep.subr.bf16.mxu0 0
  %2563 = vmatpush1.bf16.msra.mxu0 0
  %2564 = vmatprep.subr.bf16.mxu0 0
  %2565 = vmatpush1.bf16.msra.mxu0 0
  %2566 = vmatprep.subr.bf16.mxu0 0
  %2567 = vmatpush1.bf16.msra.mxu0 %v1885
  %2568 = vmatprep.subr.bf16.mxu0 0
  %2569 = vmatpush1.bf16.msra.mxu0 %v1884
  %2570 = vmatprep.subr.bf16.mxu0 0
  %2571 = vmatpush2.bf16.msra.mxu0 0
  %2572 = vmatprep.subr.bf16.mxu0 0
  %2573 = vmatpush2.bf16.msra.mxu0 0
  %2574 = vmatprep.subr.bf16.mxu0 0
  %2575 = vmatpush2.bf16.msra.mxu0 0
  %2576 = vmatprep.subr.bf16.mxu0 0
  %2577 = vmatpush2.bf16.msra.mxu0 0
  %2578 = vmatprep.subr.bf16.mxu0 0
  %2579 = vmatpush2.bf16.msra.mxu0 0
  %2580 = vmatprep.subr.bf16.mxu0 0
  %2581 = vmatpush2.bf16.msra.mxu0 0
  %2582 = vmatprep.subr.bf16.mxu0 0
  %2583 = vmatpush2.bf16.msra.mxu0 0
  %2584 = vmatprep.subr.bf16.mxu0 0
  %2585 = vmatpush2.bf16.msra.mxu0 0
  %2586 = vmatprep.mubr.bf16.mxu0 0
  %2587 = vmatmul.mubr.bf16.gmra.mxu0 %v2552
  %v2588 = vpop.f32.mrf.mxu0
  %v2589 = vadd.f32 %v1874, %v2588
  %v2590 = vpop.f32.mrf.mxu0
  %v2591 = vpop.f32.mrf.mxu0
  %v2592 = vpop.f32.mrf.mxu0
  %2593 = vdwg.mxu0
  %v2594 = vpack.c.bf16 %v2536, %v2536
  %v2596 = vsel %vm273, %v2594, 0
  %2598 = vmatprep.subr.bf16.mxu0 0
  %2599 = vmatpush1.bf16.msra.mxu0 0
  %2600 = vmatprep.subr.bf16.mxu0 0
  %2601 = vmatpush1.bf16.msra.mxu0 0
  %2602 = vmatprep.subr.bf16.mxu0 0
  %2603 = vmatpush1.bf16.msra.mxu0 0
  %2604 = vmatprep.subr.bf16.mxu0 0
  %2605 = vmatpush1.bf16.msra.mxu0 0
  %2606 = vmatprep.subr.bf16.mxu0 0
  %2607 = vmatpush1.bf16.msra.mxu0 0
  %2608 = vmatprep.subr.bf16.mxu0 0
  %2609 = vmatpush1.bf16.msra.mxu0 0
  %2610 = vmatprep.subr.bf16.mxu0 0
  %2611 = vmatpush1.bf16.msra.mxu0 %v1943
  %2612 = vmatprep.subr.bf16.mxu0 0
  %2613 = vmatpush1.bf16.msra.mxu0 %v1942
  %2614 = vmatprep.subr.bf16.mxu0 0
  %2615 = vmatpush2.bf16.msra.mxu0 0
  %2616 = vmatprep.subr.bf16.mxu0 0
  %2617 = vmatpush2.bf16.msra.mxu0 0
  %2618 = vmatprep.subr.bf16.mxu0 0
  %2619 = vmatpush2.bf16.msra.mxu0 0
  %2620 = vmatprep.subr.bf16.mxu0 0
  %2621 = vmatpush2.bf16.msra.mxu0 0
  %2622 = vmatprep.subr.bf16.mxu0 0
  %2623 = vmatpush2.bf16.msra.mxu0 0
  %2624 = vmatprep.subr.bf16.mxu0 0
  %2625 = vmatpush2.bf16.msra.mxu0 0
  %2626 = vmatprep.subr.bf16.mxu0 0
  %2627 = vmatpush2.bf16.msra.mxu0 0
  %2628 = vmatprep.subr.bf16.mxu0 0
  %2629 = vmatpush2.bf16.msra.mxu0 0
  %2630 = vmatprep.mubr.bf16.mxu0 0
  %2631 = vmatmul.mubr.bf16.gmra.mxu0 %v2596
  %v2632 = vpop.f32.mrf.mxu0
  %v2633 = vadd.f32 %v1932, %v2632
  %v2634 = vpop.f32.mrf.mxu0
  %v2635 = vpop.f32.mrf.mxu0
  %v2636 = vpop.f32.mrf.mxu0
  %2637 = vdwg.mxu0
  %v2638 = vadd.f32 %v1842, %v2589
  %v2639 = vxor.u32 %v2638, 2147483648
  %v2640 = vmul.f32 %v2639, 1.442695
  %v2641 = vpow.pop %v2640
  %v2642 = vadd.f32 %v2641, 1.0
  %v2643 = vrcp.pop %v2642
  %v2644 = vmul.f32 1.0, %v2643
  %2646 = vrot.lane.b32.xlu0 %v2589, 64
  %v2647 = vpop.permute.xlu0 %2646
  %v2649 = vmul.f32 %v2644, %v2647
  %2651 = vrot.lane.b32.xlu0 %v2649, 64
  %v2652 = vpop.permute.xlu0 %2651
  %v2654 = vadd.f32 %v1842, %v2652
  %v2655 = vtanh.pop %v2654
  %v2656 = vsub.f32 1.0, %v2644
  %2658 = vrot.lane.b32.xlu0 %v2655, 96
  %v2659 = vpop.permute.xlu0 %2658
  %v2661 = vmul.f32 %v2656, %v2659
  %v2662 = vmul.f32 %v2644, %v2500
  %v2663 = vadd.f32 %v2661, %v2662
  %2665 = vrot.lane.b32.xlu0 %v2633, 96
  %v2666 = vpop.permute.xlu0 %2665
  %v2668 = vadd.f32 %v1836, %v2666
  %v2669 = vxor.u32 %v2668, 2147483648
  %v2670 = vmul.f32 %v2669, 1.442695
  %v2671 = vpow.pop %v2670
  %v2672 = vadd.f32 %v2671, 1.0
  %v2673 = vrcp.pop %v2672
  %v2674 = vmul.f32 1.0, %v2673
  %v2675 = vadd.f32 %v1838, %v2666
  %v2676 = vxor.u32 %v2675, 2147483648
  %v2677 = vmul.f32 %v2676, 1.442695
  %v2678 = vpow.pop %v2677
  %v2679 = vadd.f32 %v2678, 1.0
  %v2680 = vrcp.pop %v2679
  %v2681 = vmul.f32 1.0, %v2680
  %2682 = vrot.lane.b32.xlu0 %v2633, 32
  %v2683 = vpop.permute.xlu0 %2682
  %v2685 = vmul.f32 %v2674, %v2683
  %2687 = vrot.lane.b32.xlu0 %v2685, 64
  %v2688 = vpop.permute.xlu0 %2687
  %v2690 = vadd.f32 %v1838, %v2688
  %v2691 = vtanh.pop %v2690
  %v2692 = vsub.f32 1.0, %v2681
  %2694 = vrot.lane.b32.xlu0 %v2691, 96
  %v2695 = vpop.permute.xlu0 %2694
  %v2697 = vmul.f32 %v2692, %v2695
  %v2698 = vmul.f32 %v2681, %v2536
  %v2699 = vadd.f32 %v2697, %v2698
  %2701 = vrot.lane.b32.xlu0 %v2663, 96
  %v2702 = vpop.permute.xlu0 %2701
  %2704 = vst.msk [vmem:[#allocation2 + $0x20] sm:$0xff] %vm273, %v2702
  %2706 = vrot.lane.b32.xlu0 %v2699, 32
  %v2707 = vpop.permute.xlu0 %2706
  %2709 = vst.msk [vmem:[#allocation2 + $0x18] sm:$0xff] %vm559, %v2707
  %v2710 = vpack.c.bf16 %v2663, %v2663
  %2712 = vrot.lane.b32.xlu0 %v2710, 96
  %v2713 = vpop.permute.xlu0 %2712
  %v2715 = vsel %vm273, %v2713, 0
  %2717 = vmatprep.subr.bf16.mxu0 0
  %2718 = vmatpush1.bf16.msra.mxu0 0
  %2719 = vmatprep.subr.bf16.mxu0 0
  %2720 = vmatpush1.bf16.msra.mxu0 0
  %2721 = vmatprep.subr.bf16.mxu0 0
  %2722 = vmatpush1.bf16.msra.mxu0 0
  %2723 = vmatprep.subr.bf16.mxu0 0
  %2724 = vmatpush1.bf16.msra.mxu0 0
  %2725 = vmatprep.subr.bf16.mxu0 0
  %2726 = vmatpush1.bf16.msra.mxu0 0
  %2727 = vmatprep.subr.bf16.mxu0 0
  %2728 = vmatpush1.bf16.msra.mxu0 0
  %2729 = vmatprep.subr.bf16.mxu0 0
  %2730 = vmatpush1.bf16.msra.mxu0 %v1885
  %2731 = vmatprep.subr.bf16.mxu0 0
  %2732 = vmatpush1.bf16.msra.mxu0 %v1884
  %2733 = vmatprep.subr.bf16.mxu0 0
  %2734 = vmatpush2.bf16.msra.mxu0 0
  %2735 = vmatprep.subr.bf16.mxu0 0
  %2736 = vmatpush2.bf16.msra.mxu0 0
  %2737 = vmatprep.subr.bf16.mxu0 0
  %2738 = vmatpush2.bf16.msra.mxu0 0
  %2739 = vmatprep.subr.bf16.mxu0 0
  %2740 = vmatpush2.bf16.msra.mxu0 0
  %2741 = vmatprep.subr.bf16.mxu0 0
  %2742 = vmatpush2.bf16.msra.mxu0 0
  %2743 = vmatprep.subr.bf16.mxu0 0
  %2744 = vmatpush2.bf16.msra.mxu0 0
  %2745 = vmatprep.subr.bf16.mxu0 0
  %2746 = vmatpush2.bf16.msra.mxu0 0
  %2747 = vmatprep.subr.bf16.mxu0 0
  %2748 = vmatpush2.bf16.msra.mxu0 0
  %2749 = vmatprep.mubr.bf16.mxu0 0
  %2750 = vmatmul.mubr.bf16.gmra.mxu0 %v2715
  %v2751 = vpop.f32.mrf.mxu0
  %v2752 = vadd.f32 %v1874, %v2751
  %v2753 = vpop.f32.mrf.mxu0
  %v2754 = vpop.f32.mrf.mxu0
  %v2755 = vpop.f32.mrf.mxu0
  %2756 = vdwg.mxu0
  %v2757 = vpack.c.bf16 %v2699, %v2699
  %v2759 = vsel %vm273, %v2757, 0
  %2761 = vmatprep.subr.bf16.mxu0 0
  %2762 = vmatpush1.bf16.msra.mxu0 0
  %2763 = vmatprep.subr.bf16.mxu0 0
  %2764 = vmatpush1.bf16.msra.mxu0 0
  %2765 = vmatprep.subr.bf16.mxu0 0
  %2766 = vmatpush1.bf16.msra.mxu0 0
  %2767 = vmatprep.subr.bf16.mxu0 0
  %2768 = vmatpush1.bf16.msra.mxu0 0
  %2769 = vmatprep.subr.bf16.mxu0 0
  %2770 = vmatpush1.bf16.msra.mxu0 0
  %2771 = vmatprep.subr.bf16.mxu0 0
  %2772 = vmatpush1.bf16.msra.mxu0 0
  %2773 = vmatprep.subr.bf16.mxu0 0
  %2774 = vmatpush1.bf16.msra.mxu0 %v1943
  %2775 = vmatprep.subr.bf16.mxu0 0
  %2776 = vmatpush1.bf16.msra.mxu0 %v1942
  %2777 = vmatprep.subr.bf16.mxu0 0
  %2778 = vmatpush2.bf16.msra.mxu0 0
  %2779 = vmatprep.subr.bf16.mxu0 0
  %2780 = vmatpush2.bf16.msra.mxu0 0
  %2781 = vmatprep.subr.bf16.mxu0 0
  %2782 = vmatpush2.bf16.msra.mxu0 0
  %2783 = vmatprep.subr.bf16.mxu0 0
  %2784 = vmatpush2.bf16.msra.mxu0 0
  %2785 = vmatprep.subr.bf16.mxu0 0
  %2786 = vmatpush2.bf16.msra.mxu0 0
  %2787 = vmatprep.subr.bf16.mxu0 0
  %2788 = vmatpush2.bf16.msra.mxu0 0
  %2789 = vmatprep.subr.bf16.mxu0 0
  %2790 = vmatpush2.bf16.msra.mxu0 0
  %2791 = vmatprep.subr.bf16.mxu0 0
  %2792 = vmatpush2.bf16.msra.mxu0 0
  %2793 = vmatprep.mubr.bf16.mxu0 0
  %2794 = vmatmul.mubr.bf16.gmra.mxu0 %v2759
  %v2795 = vpop.f32.mrf.mxu0
  %v2796 = vadd.f32 %v1932, %v2795
  %v2797 = vpop.f32.mrf.mxu0
  %v2798 = vpop.f32.mrf.mxu0
  %v2799 = vpop.f32.mrf.mxu0
  %2800 = vdwg.mxu0
  %v2801 = vadd.f32 %v1846, %v2752
  %v2802 = vxor.u32 %v2801, 2147483648
  %v2803 = vmul.f32 %v2802, 1.442695
  %v2804 = vpow.pop %v2803
  %v2805 = vadd.f32 %v2804, 1.0
  %v2806 = vrcp.pop %v2805
  %v2807 = vmul.f32 1.0, %v2806
  %2809 = vrot.lane.b32.xlu0 %v2752, 64
  %v2810 = vpop.permute.xlu0 %2809
  %v2812 = vmul.f32 %v2807, %v2810
  %2814 = vrot.lane.b32.xlu0 %v2812, 64
  %v2815 = vpop.permute.xlu0 %2814
  %v2817 = vadd.f32 %v1846, %v2815
  %v2818 = vtanh.pop %v2817
  %v2819 = vsub.f32 1.0, %v2807
  %2821 = vrot.lane.b32.xlu0 %v2818, 96
  %v2822 = vpop.permute.xlu0 %2821
  %v2824 = vmul.f32 %v2819, %v2822
  %v2825 = vmul.f32 %v2807, %v2663
  %v2826 = vadd.f32 %v2824, %v2825
  %2828 = vrot.lane.b32.xlu0 %v2796, 96
  %v2829 = vpop.permute.xlu0 %2828
  %v2831 = vadd.f32 %v1832, %v2829
  %v2832 = vxor.u32 %v2831, 2147483648
  %v2833 = vmul.f32 %v2832, 1.442695
  %v2834 = vpow.pop %v2833
  %v2835 = vadd.f32 %v2834, 1.0
  %v2836 = vrcp.pop %v2835
  %v2837 = vmul.f32 1.0, %v2836
  %v2838 = vadd.f32 %v1834, %v2829
  %v2839 = vxor.u32 %v2838, 2147483648
  %v2840 = vmul.f32 %v2839, 1.442695
  %v2841 = vpow.pop %v2840
  %v2842 = vadd.f32 %v2841, 1.0
  %v2843 = vrcp.pop %v2842
  %v2844 = vmul.f32 1.0, %v2843
  %2845 = vrot.lane.b32.xlu0 %v2796, 32
  %v2846 = vpop.permute.xlu0 %2845
  %v2848 = vmul.f32 %v2837, %v2846
  %2850 = vrot.lane.b32.xlu0 %v2848, 64
  %v2851 = vpop.permute.xlu0 %2850
  %v2853 = vadd.f32 %v1834, %v2851
  %v2854 = vtanh.pop %v2853
  %v2855 = vsub.f32 1.0, %v2844
  %2857 = vrot.lane.b32.xlu0 %v2854, 96
  %v2858 = vpop.permute.xlu0 %2857
  %v2860 = vmul.f32 %v2855, %v2858
  %v2861 = vmul.f32 %v2844, %v2699
  %v2862 = vadd.f32 %v2860, %v2861
  %2864 = vrot.lane.b32.xlu0 %v2826, 96
  %v2865 = vpop.permute.xlu0 %2864
  %2867 = vst.msk [vmem:[#allocation2 + $0x28] sm:$0xff] %vm273, %v2865
  %2869 = vrot.lane.b32.xlu0 %v2862, 32
  %v2870 = vpop.permute.xlu0 %2869
  %2872 = vst.msk [vmem:[#allocation2 + $0x10] sm:$0xff] %vm559, %v2870
  %v2873 = vpack.c.bf16 %v2826, %v2826
  %2875 = vrot.lane.b32.xlu0 %v2873, 96
  %v2876 = vpop.permute.xlu0 %2875
  %v2878 = vsel %vm273, %v2876, 0
  %2880 = vmatprep.subr.bf16.mxu0 0
  %2881 = vmatpush1.bf16.msra.mxu0 0
  %2882 = vmatprep.subr.bf16.mxu0 0
  %2883 = vmatpush1.bf16.msra.mxu0 0
  %2884 = vmatprep.subr.bf16.mxu0 0
  %2885 = vmatpush1.bf16.msra.mxu0 0
  %2886 = vmatprep.subr.bf16.mxu0 0
  %2887 = vmatpush1.bf16.msra.mxu0 0
  %2888 = vmatprep.subr.bf16.mxu0 0
  %2889 = vmatpush1.bf16.msra.mxu0 0
  %2890 = vmatprep.subr.bf16.mxu0 0
  %2891 = vmatpush1.bf16.msra.mxu0 0
  %2892 = vmatprep.subr.bf16.mxu0 0
  %2893 = vmatpush1.bf16.msra.mxu0 %v1885
  %2894 = vmatprep.subr.bf16.mxu0 0
  %2895 = vmatpush1.bf16.msra.mxu0 %v1884
  %2896 = vmatprep.subr.bf16.mxu0 0
  %2897 = vmatpush2.bf16.msra.mxu0 0
  %2898 = vmatprep.subr.bf16.mxu0 0
  %2899 = vmatpush2.bf16.msra.mxu0 0
  %2900 = vmatprep.subr.bf16.mxu0 0
  %2901 = vmatpush2.bf16.msra.mxu0 0
  %2902 = vmatprep.subr.bf16.mxu0 0
  %2903 = vmatpush2.bf16.msra.mxu0 0
  %2904 = vmatprep.subr.bf16.mxu0 0
  %2905 = vmatpush2.bf16.msra.mxu0 0
  %2906 = vmatprep.subr.bf16.mxu0 0
  %2907 = vmatpush2.bf16.msra.mxu0 0
  %2908 = vmatprep.subr.bf16.mxu0 0
  %2909 = vmatpush2.bf16.msra.mxu0 0
  %2910 = vmatprep.subr.bf16.mxu0 0
  %2911 = vmatpush2.bf16.msra.mxu0 0
  %2912 = vmatprep.mubr.bf16.mxu0 0
  %2913 = vmatmul.mubr.bf16.gmra.mxu0 %v2878
  %v2914 = vpop.f32.mrf.mxu0
  %v2915 = vadd.f32 %v1874, %v2914
  %v2916 = vpop.f32.mrf.mxu0
  %v2917 = vpop.f32.mrf.mxu0
  %v2918 = vpop.f32.mrf.mxu0
  %2919 = vdwg.mxu0
  %v2920 = vpack.c.bf16 %v2862, %v2862
  %v2922 = vsel %vm273, %v2920, 0
  %2924 = vmatprep.subr.bf16.mxu0 0
  %2925 = vmatpush1.bf16.msra.mxu0 0
  %2926 = vmatprep.subr.bf16.mxu0 0
  %2927 = vmatpush1.bf16.msra.mxu0 0
  %2928 = vmatprep.subr.bf16.mxu0 0
  %2929 = vmatpush1.bf16.msra.mxu0 0
  %2930 = vmatprep.subr.bf16.mxu0 0
  %2931 = vmatpush1.bf16.msra.mxu0 0
  %2932 = vmatprep.subr.bf16.mxu0 0
  %2933 = vmatpush1.bf16.msra.mxu0 0
  %2934 = vmatprep.subr.bf16.mxu0 0
  %2935 = vmatpush1.bf16.msra.mxu0 0
  %2936 = vmatprep.subr.bf16.mxu0 0
  %2937 = vmatpush1.bf16.msra.mxu0 %v1943
  %2938 = vmatprep.subr.bf16.mxu0 0
  %2939 = vmatpush1.bf16.msra.mxu0 %v1942
  %2940 = vmatprep.subr.bf16.mxu0 0
  %2941 = vmatpush2.bf16.msra.mxu0 0
  %2942 = vmatprep.subr.bf16.mxu0 0
  %2943 = vmatpush2.bf16.msra.mxu0 0
  %2944 = vmatprep.subr.bf16.mxu0 0
  %2945 = vmatpush2.bf16.msra.mxu0 0
  %2946 = vmatprep.subr.bf16.mxu0 0
  %2947 = vmatpush2.bf16.msra.mxu0 0
  %2948 = vmatprep.subr.bf16.mxu0 0
  %2949 = vmatpush2.bf16.msra.mxu0 0
  %2950 = vmatprep.subr.bf16.mxu0 0
  %2951 = vmatpush2.bf16.msra.mxu0 0
  %2952 = vmatprep.subr.bf16.mxu0 0
  %2953 = vmatpush2.bf16.msra.mxu0 0
  %2954 = vmatprep.subr.bf16.mxu0 0
  %2955 = vmatpush2.bf16.msra.mxu0 0
  %2956 = vmatprep.mubr.bf16.mxu0 0
  %2957 = vmatmul.mubr.bf16.gmra.mxu0 %v2922
  %v2958 = vpop.f32.mrf.mxu0
  %v2959 = vadd.f32 %v1932, %v2958
  %v2960 = vpop.f32.mrf.mxu0
  %v2961 = vpop.f32.mrf.mxu0
  %v2962 = vpop.f32.mrf.mxu0
  %2963 = vdwg.mxu0
  %v2964 = vadd.f32 %v1852, %v2915
  %v2965 = vxor.u32 %v2964, 2147483648
  %v2966 = vmul.f32 %v2965, 1.442695
  %v2967 = vpow.pop %v2966
  %v2968 = vadd.f32 %v2967, 1.0
  %v2969 = vrcp.pop %v2968
  %v2970 = vmul.f32 1.0, %v2969
  %2972 = vrot.lane.b32.xlu0 %v2915, 64
  %v2973 = vpop.permute.xlu0 %2972
  %v2975 = vmul.f32 %v2970, %v2973
  %2977 = vrot.lane.b32.xlu0 %v2975, 64
  %v2978 = vpop.permute.xlu0 %2977
  %v2980 = vadd.f32 %v1852, %v2978
  %v2981 = vtanh.pop %v2980
  %v2982 = vsub.f32 1.0, %v2970
  %2984 = vrot.lane.b32.xlu0 %v2981, 96
  %v2985 = vpop.permute.xlu0 %2984
  %v2987 = vmul.f32 %v2982, %v2985
  %v2988 = vmul.f32 %v2970, %v2826
  %v2989 = vadd.f32 %v2987, %v2988
  %2991 = vrot.lane.b32.xlu0 %v2959, 96
  %v2992 = vpop.permute.xlu0 %2991
  %v2994 = vadd.f32 %v1826, %v2992
  %v2995 = vxor.u32 %v2994, 2147483648
  %v2996 = vmul.f32 %v2995, 1.442695
  %v2997 = vpow.pop %v2996
  %v2998 = vadd.f32 %v2997, 1.0
  %v2999 = vrcp.pop %v2998
  %v3000 = vmul.f32 1.0, %v2999
  %v3001 = vadd.f32 %v1828, %v2992
  %v3002 = vxor.u32 %v3001, 2147483648
  %v3003 = vmul.f32 %v3002, 1.442695
  %v3004 = vpow.pop %v3003
  %v3005 = vadd.f32 %v3004, 1.0
  %v3006 = vrcp.pop %v3005
  %v3007 = vmul.f32 1.0, %v3006
  %3008 = vrot.lane.b32.xlu0 %v2959, 32
  %v3009 = vpop.permute.xlu0 %3008
  %v3011 = vmul.f32 %v3000, %v3009
  %3013 = vrot.lane.b32.xlu0 %v3011, 64
  %v3014 = vpop.permute.xlu0 %3013
  %v3016 = vadd.f32 %v1828, %v3014
  %v3017 = vtanh.pop %v3016
  %v3018 = vsub.f32 1.0, %v3007
  %3020 = vrot.lane.b32.xlu0 %v3017, 96
  %v3021 = vpop.permute.xlu0 %3020
  %v3023 = vmul.f32 %v3018, %v3021
  %v3024 = vmul.f32 %v3007, %v2862
  %v3025 = vadd.f32 %v3023, %v3024
  %3027 = vrot.lane.b32.xlu0 %v2989, 96
  %v3028 = vpop.permute.xlu0 %3027
  %3030 = vst.msk [vmem:[#allocation2 + $0x30] sm:$0xff] %vm273, %v3028
  %3032 = vrot.lane.b32.xlu0 %v3025, 32
  %v3033 = vpop.permute.xlu0 %3032
  %3035 = vst.msk [vmem:[#allocation2 + $0x8] sm:$0xff] %vm559, %v3033
  %v3036 = vpack.c.bf16 %v2989, %v2989
  %3038 = vrot.lane.b32.xlu0 %v3036, 96
  %v3039 = vpop.permute.xlu0 %3038
  %v3041 = vsel %vm273, %v3039, 0
  %3043 = vmatprep.subr.bf16.mxu0 0
  %3044 = vmatpush1.bf16.msra.mxu0 0
  %3045 = vmatprep.subr.bf16.mxu0 0
  %3046 = vmatpush1.bf16.msra.mxu0 0
  %3047 = vmatprep.subr.bf16.mxu0 0
  %3048 = vmatpush1.bf16.msra.mxu0 0
  %3049 = vmatprep.subr.bf16.mxu0 0
  %3050 = vmatpush1.bf16.msra.mxu0 0
  %3051 = vmatprep.subr.bf16.mxu0 0
  %3052 = vmatpush1.bf16.msra.mxu0 0
  %3053 = vmatprep.subr.bf16.mxu0 0
  %3054 = vmatpush1.bf16.msra.mxu0 0
  %3055 = vmatprep.subr.bf16.mxu0 0
  %3056 = vmatpush1.bf16.msra.mxu0 %v1885
  %3057 = vmatprep.subr.bf16.mxu0 0
  %3058 = vmatpush1.bf16.msra.mxu0 %v1884
  %3059 = vmatprep.subr.bf16.mxu0 0
  %3060 = vmatpush2.bf16.msra.mxu0 0
  %3061 = vmatprep.subr.bf16.mxu0 0
  %3062 = vmatpush2.bf16.msra.mxu0 0
  %3063 = vmatprep.subr.bf16.mxu0 0
  %3064 = vmatpush2.bf16.msra.mxu0 0
  %3065 = vmatprep.subr.bf16.mxu0 0
  %3066 = vmatpush2.bf16.msra.mxu0 0
  %3067 = vmatprep.subr.bf16.mxu0 0
  %3068 = vmatpush2.bf16.msra.mxu0 0
  %3069 = vmatprep.subr.bf16.mxu0 0
  %3070 = vmatpush2.bf16.msra.mxu0 0
  %3071 = vmatprep.subr.bf16.mxu0 0
  %3072 = vmatpush2.bf16.msra.mxu0 0
  %3073 = vmatprep.subr.bf16.mxu0 0
  %3074 = vmatpush2.bf16.msra.mxu0 0
  %3075 = vmatprep.mubr.bf16.mxu0 0
  %3076 = vmatmul.mubr.bf16.gmra.mxu0 %v3041
  %v3077 = vpop.f32.mrf.mxu0
  %v3078 = vadd.f32 %v1874, %v3077
  %v3079 = vpop.f32.mrf.mxu0
  %v3080 = vpop.f32.mrf.mxu0
  %v3081 = vpop.f32.mrf.mxu0
  %3082 = vdwg.mxu0
  %v3083 = vpack.c.bf16 %v3025, %v3025
  %v3085 = vsel %vm273, %v3083, 0
  %3087 = vmatprep.subr.bf16.mxu0 0
  %3088 = vmatpush1.bf16.msra.mxu0 0
  %3089 = vmatprep.subr.bf16.mxu0 0
  %3090 = vmatpush1.bf16.msra.mxu0 0
  %3091 = vmatprep.subr.bf16.mxu0 0
  %3092 = vmatpush1.bf16.msra.mxu0 0
  %3093 = vmatprep.subr.bf16.mxu0 0
  %3094 = vmatpush1.bf16.msra.mxu0 0
  %3095 = vmatprep.subr.bf16.mxu0 0
  %3096 = vmatpush1.bf16.msra.mxu0 0
  %3097 = vmatprep.subr.bf16.mxu0 0
  %3098 = vmatpush1.bf16.msra.mxu0 0
  %3099 = vmatprep.subr.bf16.mxu0 0
  %3100 = vmatpush1.bf16.msra.mxu0 %v1943
  %3101 = vmatprep.subr.bf16.mxu0 0
  %3102 = vmatpush1.bf16.msra.mxu0 %v1942
  %3103 = vmatprep.subr.bf16.mxu0 0
  %3104 = vmatpush2.bf16.msra.mxu0 0
  %3105 = vmatprep.subr.bf16.mxu0 0
  %3106 = vmatpush2.bf16.msra.mxu0 0
  %3107 = vmatprep.subr.bf16.mxu0 0
  %3108 = vmatpush2.bf16.msra.mxu0 0
  %3109 = vmatprep.subr.bf16.mxu0 0
  %3110 = vmatpush2.bf16.msra.mxu0 0
  %3111 = vmatprep.subr.bf16.mxu0 0
  %3112 = vmatpush2.bf16.msra.mxu0 0
  %3113 = vmatprep.subr.bf16.mxu0 0
  %3114 = vmatpush2.bf16.msra.mxu0 0
  %3115 = vmatprep.subr.bf16.mxu0 0
  %3116 = vmatpush2.bf16.msra.mxu0 0
  %3117 = vmatprep.subr.bf16.mxu0 0
  %3118 = vmatpush2.bf16.msra.mxu0 0
  %3119 = vmatprep.mubr.bf16.mxu0 0
  %3120 = vmatmul.mubr.bf16.gmra.mxu0 %v3085
  %v3121 = vpop.f32.mrf.mxu0
  %v3122 = vadd.f32 %v1932, %v3121
  %v3123 = vpop.f32.mrf.mxu0
  %v3124 = vpop.f32.mrf.mxu0
  %v3125 = vpop.f32.mrf.mxu0
  %3126 = vdwg.mxu0
  %v3127 = vadd.f32 %v1856, %v3078
  %v3128 = vxor.u32 %v3127, 2147483648
  %v3129 = vmul.f32 %v3128, 1.442695
  %v3130 = vpow.pop %v3129
  %v3131 = vadd.f32 %v3130, 1.0
  %v3132 = vrcp.pop %v3131
  %v3133 = vmul.f32 1.0, %v3132
  %3135 = vrot.lane.b32.xlu0 %v3078, 64
  %v3136 = vpop.permute.xlu0 %3135
  %v3138 = vmul.f32 %v3133, %v3136
  %3140 = vrot.lane.b32.xlu0 %v3138, 64
  %v3141 = vpop.permute.xlu0 %3140
  %v3143 = vadd.f32 %v1856, %v3141
  %v3144 = vtanh.pop %v3143
  %v3145 = vsub.f32 1.0, %v3133
  %3147 = vrot.lane.b32.xlu0 %v3144, 96
  %v3148 = vpop.permute.xlu0 %3147
  %v3150 = vmul.f32 %v3145, %v3148
  %v3151 = vmul.f32 %v3133, %v2989
  %v3152 = vadd.f32 %v3150, %v3151
  %3154 = vrot.lane.b32.xlu0 %v3122, 96
  %v3155 = vpop.permute.xlu0 %3154
  %v3157 = vadd.f32 %v1822, %v3155
  %v3158 = vxor.u32 %v3157, 2147483648
  %v3159 = vmul.f32 %v3158, 1.442695
  %v3160 = vpow.pop %v3159
  %v3161 = vadd.f32 %v3160, 1.0
  %v3162 = vrcp.pop %v3161
  %v3163 = vmul.f32 1.0, %v3162
  %v3164 = vadd.f32 %v1824, %v3155
  %v3165 = vxor.u32 %v3164, 2147483648
  %v3166 = vmul.f32 %v3165, 1.442695
  %v3167 = vpow.pop %v3166
  %v3168 = vadd.f32 %v3167, 1.0
  %v3169 = vrcp.pop %v3168
  %v3170 = vmul.f32 1.0, %v3169
  %3171 = vrot.lane.b32.xlu0 %v3122, 32
  %v3172 = vpop.permute.xlu0 %3171
  %v3174 = vmul.f32 %v3163, %v3172
  %3176 = vrot.lane.b32.xlu0 %v3174, 64
  %v3177 = vpop.permute.xlu0 %3176
  %v3179 = vadd.f32 %v1824, %v3177
  %v3180 = vtanh.pop %v3179
  %v3181 = vsub.f32 1.0, %v3170
  %3183 = vrot.lane.b32.xlu0 %v3180, 96
  %v3184 = vpop.permute.xlu0 %3183
  %v3186 = vmul.f32 %v3181, %v3184
  %v3187 = vmul.f32 %v3170, %v3025
  %v3188 = vadd.f32 %v3186, %v3187
  %3190 = vrot.lane.b32.xlu0 %v3152, 96
  %v3191 = vpop.permute.xlu0 %3190
  %3193 = vst.msk [vmem:[#allocation2 + $0x38] sm:$0xff] %vm273, %v3191
  %3195 = vrot.lane.b32.xlu0 %v3188, 32
  %v3196 = vpop.permute.xlu0 %3195
  %3198 = vst.msk [vmem:[#allocation2] sm:$0xff] %vm559, %v3196
  %v3199 = vld [vmem:[#allocation2] sm:$0xff]
  %v3200 = vld [vmem:[#allocation2 + $0x8] sm:$0xff]
  %v3201 = vld [vmem:[#allocation2 + $0x10] sm:$0xff]
  %v3202 = vld [vmem:[#allocation2 + $0x18] sm:$0xff]
  %v3203 = vld [vmem:[#allocation2 + $0x20] sm:$0xff]
  %v3204 = vld [vmem:[#allocation2 + $0x28] sm:$0xff]
  %v3205 = vld [vmem:[#allocation2 + $0x30] sm:$0xff]
  %v3206 = vld [vmem:[#allocation2 + $0x38] sm:$0xff]
  %v3207 = vpack.c.bf16 %v3200, %v3199
  %v3208 = vpack.c.bf16 %v3202, %v3201
  %v3209 = vpack.c.bf16 %v3204, %v3203
  %v3210 = vpack.c.bf16 %v3206, %v3205
  %v3211 = vld [vmem:[%s14] sm:$0xf]
  %v3212 = vld [vmem:[%s14 + $0x4] sm:$0xf]
  %v3213 = vld [vmem:[%s14 + $0x8] sm:$0xf]
  %v3214 = vld [vmem:[%s14 + $0xc] sm:$0xf]
  %v3215 = vld [vmem:[%s14 + $0x10] sm:$0xf]
  %v3216 = vld [vmem:[%s14 + $0x14] sm:$0xf]
  %v3217 = vld [vmem:[%s14 + $0x18] sm:$0xf]
  %v3218 = vld [vmem:[%s14 + $0x1c] sm:$0xf]
  %v3219 = vld [vmem:[%s15] sm:$0x1]
  %v3221 = vlaneseq
  %v3222 = vshrl.u32 %v3221, 7
  %v3223 = vsub.s32 0, %v3222
  %v3224 = vrot.slane %v3219, %v3223
  %v3234 = vunpack.c.l.b16 %v3211
  %v3235 = vunpack.c.l.b16 %v3212
  %v3236 = vunpack.c.l.b16 %v3213
  %v3237 = vunpack.c.l.b16 %v3214
  %v3238 = vunpack.c.l.b16 %v3215
  %v3239 = vunpack.c.l.b16 %v3216
  %v3240 = vunpack.c.l.b16 %v3217
  %v3241 = vunpack.c.l.b16 %v3218
  %v3242 = vpack.c.b16 %v3235, %v3234
  %v3243 = vpack.c.b16 %v3237, %v3236
  %v3244 = vpack.c.b16 %v3239, %v3238
  %v3245 = vpack.c.b16 %v3241, %v3240
  %v3251 = vsel %vm1774, %v3207, 0
  %v3254 = vsel %vm1774, %v3208, 0
  %v3257 = vsel %vm1774, %v3209, 0
  %v3260 = vsel %vm1774, %v3210, 0
  %3262 = vmatprep.subr.bf16.mxu0 0
  %3263 = vmatpush1.bf16.msra.mxu0 0
  %3264 = vmatprep.subr.bf16.mxu0 0
  %3265 = vmatpush1.bf16.msra.mxu0 0
  %3266 = vmatprep.subr.bf16.mxu0 0
  %3267 = vmatpush1.bf16.msra.mxu0 0
  %3268 = vmatprep.subr.bf16.mxu0 0
  %3269 = vmatpush1.bf16.msra.mxu0 0
  %3270 = vmatprep.subr.bf16.mxu0 0
  %3271 = vmatpush1.bf16.msra.mxu0 %v3245
  %3272 = vmatprep.subr.bf16.mxu0 0
  %3273 = vmatpush1.bf16.msra.mxu0 %v3244
  %3274 = vmatprep.subr.bf16.mxu0 0
  %3275 = vmatpush1.bf16.msra.mxu0 %v3243
  %3276 = vmatprep.subr.bf16.mxu0 0
  %3277 = vmatpush1.bf16.msra.mxu0 %v3242
  %3278 = vmatprep.subr.bf16.mxu0 0
  %3279 = vmatpush2.bf16.msra.mxu0 0
  %3280 = vmatprep.subr.bf16.mxu0 0
  %3281 = vmatpush2.bf16.msra.mxu0 0
  %3282 = vmatprep.subr.bf16.mxu0 0
  %3283 = vmatpush2.bf16.msra.mxu0 0
  %3284 = vmatprep.subr.bf16.mxu0 0
  %3285 = vmatpush2.bf16.msra.mxu0 0
  %3286 = vmatprep.subr.bf16.mxu0 0
  %3287 = vmatpush2.bf16.msra.mxu0 0
  %3288 = vmatprep.subr.bf16.mxu0 0
  %3289 = vmatpush2.bf16.msra.mxu0 0
  %3290 = vmatprep.subr.bf16.mxu0 0
  %3291 = vmatpush2.bf16.msra.mxu0 0
  %3292 = vmatprep.subr.bf16.mxu0 0
  %3293 = vmatpush2.bf16.msra.mxu0 0
  %3294 = vmatprep.mubr.bf16.mxu0 0
  %3295 = vmatmul.mubr.bf16.gmra.mxu0 %v3251
  %v3296 = vpop.f32.mrf.mxu0
  %v3297 = vadd.f32 %v3224, %v3296
  %v3298 = vpop.f32.mrf.mxu0
  %v3299 = vpop.f32.mrf.mxu0
  %v3300 = vadd.f32 %v3224, %v3299
  %v3301 = vpop.f32.mrf.mxu0
  %3302 = vmatprep.mubr.bf16.mxu0 0
  %3303 = vmatmul.mubr.bf16.gmra.mxu0 %v3254
  %v3304 = vpop.f32.mrf.mxu0
  %v3305 = vadd.f32 %v3224, %v3304
  %v3306 = vpop.f32.mrf.mxu0
  %v3307 = vpop.f32.mrf.mxu0
  %v3308 = vadd.f32 %v3224, %v3307
  %v3309 = vpop.f32.mrf.mxu0
  %3310 = vmatprep.mubr.bf16.mxu0 0
  %3311 = vmatmul.mubr.bf16.gmra.mxu0 %v3257
  %v3312 = vpop.f32.mrf.mxu0
  %v3313 = vadd.f32 %v3224, %v3312
  %v3314 = vpop.f32.mrf.mxu0
  %v3315 = vpop.f32.mrf.mxu0
  %v3316 = vadd.f32 %v3224, %v3315
  %v3317 = vpop.f32.mrf.mxu0
  %3318 = vmatprep.mubr.bf16.mxu0 0
  %3319 = vmatmul.mubr.bf16.gmra.mxu0 %v3260
  %v3320 = vpop.f32.mrf.mxu0
  %v3321 = vadd.f32 %v3224, %v3320
  %v3322 = vpop.f32.mrf.mxu0
  %v3323 = vpop.f32.mrf.mxu0
  %v3324 = vadd.f32 %v3224, %v3323
  %v3325 = vpop.f32.mrf.mxu0
  %3326 = vdwg.mxu0
  %3327 = vst [vmem:[%s16] sm:$0xff] %v3297
  %3328 = vst [vmem:[%s16 + $0x8] sm:$0xff] %v3300
  %3329 = vst [vmem:[%s16 + $0x10] sm:$0xff] %v3305
  %3330 = vst [vmem:[%s16 + $0x18] sm:$0xff] %v3308
  %3331 = vst [vmem:[%s16 + $0x20] sm:$0xff] %v3313
  %3332 = vst [vmem:[%s16 + $0x28] sm:$0xff] %v3316
  %3333 = vst [vmem:[%s16 + $0x30] sm:$0xff] %v3321
  %3334 = vst [vmem:[%s16 + $0x38] sm:$0xff] %v3324
  // Predicated region
  $region66: #{bigru_forward.1} parent=0 // pred_check
    _
  $region67: #{bigru_forward.1} parent=0 // pred_check_branch
    %3336 = sbr.rel (0) target = $region69
  $region68: #{bigru_forward.1} parent=0 // pred_region
    _
  $region69: #{bigru_forward.1} parent=0 // pred_fallthru
    _
  // Predicated region
  $region70: #{bigru_forward.1} parent=0 // pred_check
    _
  $region71: #{bigru_forward.1} parent=0 // pred_check_branch
    %3338 = sbr.rel (0) target = $region73
  $region72: #{bigru_forward.1} parent=0 // pred_region
    _
  $region73: #{bigru_forward.1} parent=0 // pred_fallthru
    _

</llo_original>
